<compile_context>
chip_gen: v7x
topology: tpu7x:2x2x1
jax: 0.10.0
libtpu: 0.0.40
codegen_flags: <defaults>
</compile_context>

<pallas_src>
import jax
import jax.numpy as jnp
from jax import lax
from jax.experimental import pallas as pl
from jax.experimental.pallas import tpu as pltpu

IN_DIM = 1700
K_PAD = 1792          # 14 * 128 — lane-aligned contraction dim
TK = 896              # K tile; K_PAD // TK = 2 grid steps (double-buffered DMA)
H1 = 64
H2 = 32
OUT_DIM = 2
NUM_STEPS = 20
BETA = 0.9
THRESHOLD = 1.0


def deep_snn_kernel(x_ref, w1_ref, b1_ref, w2_ref, b2_ref, w3_ref, b3_ref,
                    out_ref, cur1_acc):
    k = pl.program_id(0)

    @pl.when(k == 0)
    def _():
        cur1_acc[...] = jnp.zeros_like(cur1_acc)

    # Partial fc1 over this K tile: bf16 x bf16 -> f32 accumulation (MXU native).
    cur1_acc[...] += jnp.dot(x_ref[...], w1_ref[...],
                             preferred_element_type=jnp.float32)

    @pl.when(k == pl.num_programs(0) - 1)
    def _():
        cur1 = cur1_acc[...] + b1_ref[...]

        # Peel step 0: mem1 = mem2 = 0 => resets are identically zero.
        mem1 = cur1
        mem2 = jnp.dot(mem1, w2_ref[...],
                       preferred_element_type=jnp.float32) + b2_ref[...]

        def step(_, carry):
            m1, m2 = carry
            # Leaky #1: subtract-reset based on *previous* membrane potential.
            reset1 = (m1 - THRESHOLD > 0.0).astype(jnp.float32)
            m1 = BETA * m1 + cur1 - reset1 * THRESHOLD
            # fc2 on membrane potential (spikes unused by this forward).
            cur2 = jnp.dot(m1, w2_ref[...],
                           preferred_element_type=jnp.float32) + b2_ref[...]
            # Leaky #2.
            reset2 = (m2 - THRESHOLD > 0.0).astype(jnp.float32)
            m2 = BETA * m2 + cur2 - reset2 * THRESHOLD
            return m1, m2

        # Tiny [8,64]@[64,32] dots on a serial dependency chain: unroll so the
        # LLO scheduler can overlap step t+1's matmul push with step t's VPU chain.
        _, mem2 = lax.fori_loop(1, NUM_STEPS, step, (mem1, mem2), unroll=True)

        out_ref[...] = (jnp.dot(mem2, w3_ref[...],
                                preferred_element_type=jnp.float32)
                        + b3_ref[...]).astype(out_ref.dtype)


@jax.jit
def deep_snn_forward(x, w1, b1, w2, b2, w3, b3):
    batch = x.shape[0]
    pad = K_PAD - IN_DIM

    # Zero-pad the contraction dim to a 128 multiple and cast the HBM-heavy
    # fc1 operands to bf16 (f32 accumulation happens inside the kernel).
    x_p = jnp.pad(x, ((0, 0), (0, pad))).astype(jnp.bfloat16)
    w1_p = jnp.pad(w1, ((0, pad), (0, 0))).astype(jnp.bfloat16)

    k_tiles = K_PAD // TK

    # NOTE: at larger batch (> ~128) add a parallel batch grid axis so both
    # v7x TensorCores are used; unnecessary at B=8.
    return pl.pallas_call(
        deep_snn_kernel,
        out_shape=jax.ShapeDtypeStruct((batch, OUT_DIM), jnp.float32),
        grid=(k_tiles,),
        in_specs=[
            pl.BlockSpec((batch, TK), lambda k: (0, k)),   # x tile
            pl.BlockSpec((TK, H1), lambda k: (k, 0)),      # w1 tile
            pl.BlockSpec((1, H1), lambda k: (0, 0)),       # b1 (resident)
            pl.BlockSpec((H1, H2), lambda k: (0, 0)),      # w2
            pl.BlockSpec((1, H2), lambda k: (0, 0)),       # b2
            pl.BlockSpec((H2, OUT_DIM), lambda k: (0, 0)), # w3
            pl.BlockSpec((1, OUT_DIM), lambda k: (0, 0)),  # b3
        ],
        out_specs=pl.BlockSpec((batch, OUT_DIM), lambda k: (0, 0)),
        scratch_shapes=[pltpu.VMEM((batch, H1), jnp.float32)],
        compiler_params=pltpu.CompilerParams(
            dimension_semantics=("arbitrary",),   # K is a reduction axis
            vmem_limit_bytes=4 << 20,             # footprint < 0.5 MiB; keep small for v7x
        ),
    )(x_p, w1_p, b1, w2, b2, w3, b3)


def _torch_linear_init(key, fan_in, fan_out):
    """Deterministic U(-1/sqrt(fan_in), 1/sqrt(fan_in)) like nn.Linear default."""
    kw, kb = jax.random.split(key)
    bound = 1.0 / jnp.sqrt(float(fan_in))
    w = jax.random.uniform(kw, (fan_in, fan_out), jnp.float32, -bound, bound)
    b = jax.random.uniform(kb, (1, fan_out), jnp.float32, -bound, bound)
    return w, b


def _reference(x, w1, b1, w2, b2, w3, b3):
    # Same data path as the kernel: bf16 fc1 operands, f32 accumulation.
    cur1 = jnp.dot(x.astype(jnp.bfloat16), w1.astype(jnp.bfloat16),
                   preferred_element_type=jnp.float32) + b1
    mem1 = jnp.zeros((x.shape[0], H1), jnp.float32)
    mem2 = jnp.zeros((x.shape[0], H2), jnp.float32)
    for _ in range(NUM_STEPS):
        r1 = (mem1 - THRESHOLD > 0.0).astype(jnp.float32)
        mem1 = BETA * mem1 + cur1 - r1 * THRESHOLD
        cur2 = mem1 @ w2 + b2
        r2 = (mem2 - THRESHOLD > 0.0).astype(jnp.float32)
        mem2 = BETA * mem2 + cur2 - r2 * THRESHOLD
    return mem2 @ w3 + b3


if __name__ == "__main__":
    key = jax.random.PRNGKey(0)
    kx, k1, k2, k3 = jax.random.split(key, 4)

    batch = 8
    x = jax.random.normal(kx, (batch, IN_DIM), jnp.float32)

    w1, b1 = _torch_linear_init(k1, IN_DIM, H1)
    w2, b2 = _torch_linear_init(k2, H1, H2)   # see TODO(synk) above re: in=6
    w3, b3 = _torch_linear_init(k3, H2, OUT_DIM)

    out = deep_snn_forward(x, w1, b1, w2, b2, w3, b3)
    out = jax.block_until_ready(out)

    ref = _reference(x, w1, b1, w2, b2, w3, b3)
    assert out.shape == (batch, OUT_DIM)
    assert jnp.allclose(out, ref, atol=5e-3, rtol=5e-3), "mismatch vs JAX reference"

    print("KERNEL_OK")
</pallas_src>

<mosaic_0001>
module attributes {stable_mosaic.version = 11 : i64} {
  func.func @deep_snn_kernel(%arg0: i32, %arg1: memref<8x896xbf16, #tpu.memory_space<vmem>>, %arg2: memref<896x64xbf16, #tpu.memory_space<vmem>>, %arg3: memref<1x64xf32, #tpu.memory_space<vmem>>, %arg4: memref<64x32xf32, #tpu.memory_space<vmem>>, %arg5: memref<1x32xf32, #tpu.memory_space<vmem>>, %arg6: memref<32x2xf32, #tpu.memory_space<vmem>>, %arg7: memref<1x2xf32, #tpu.memory_space<vmem>>, %arg8: memref<8x2xf32, #tpu.memory_space<vmem>>, %arg9: memref<8x64xf32, #tpu.memory_space<vmem>>) attributes {dimension_semantics = [#tpu.dimension_semantics<arbitrary>], iteration_bounds = array<i64: 2>, scalar_prefetch = 0 : i64, scratch_operands = 1 : i64, tpu.core_type = #tpu.core_type<tc>, window_params = [{transform_indices = @transform_0, window_bounds = array<i64: 8, 896>}, {transform_indices = @transform_1, window_bounds = array<i64: 896, 64>}, {pipeline_mode = #tpu.pipeline_mode<synchronous>, transform_indices = @transform_2, window_bounds = array<i64: 1, 64>}, {pipeline_mode = #tpu.pipeline_mode<synchronous>, transform_indices = @transform_3, window_bounds = array<i64: 64, 32>}, {pipeline_mode = #tpu.pipeline_mode<synchronous>, transform_indices = @transform_4, window_bounds = array<i64: 1, 32>}, {pipeline_mode = #tpu.pipeline_mode<synchronous>, transform_indices = @transform_5, window_bounds = array<i64: 32, 2>}, {pipeline_mode = #tpu.pipeline_mode<synchronous>, transform_indices = @transform_6, window_bounds = array<i64: 1, 2>}, {pipeline_mode = #tpu.pipeline_mode<synchronous>, transform_indices = @transform_7, window_bounds = array<i64: 8, 2>}]} {
    %c0_i32 = arith.constant 0 : i32
    %0 = arith.cmpi eq, %arg0, %c0_i32 : i32
    %1 = arith.extui %0 : i1 to i32
    %c0_i32_0 = arith.constant 0 : i32
    %2 = arith.cmpi ne, %1, %c0_i32_0 : i32
    scf.if %2 {
      %cst_9 = arith.constant 0.000000e+00 : f32
      %12 = vector.broadcast %cst_9 : f32 to vector<8x64xf32>
      %c0_10 = arith.constant 0 : index
      %c0_11 = arith.constant 0 : index
      %13 = vector.load %arg9[%c0_10, %c0_11] : memref<8x64xf32, #tpu.memory_space<vmem>>, vector<8x64xf32>
      tpu.vector_store %arg9[%c0_10, %c0_11], %12 {strides = array<i32>} : memref<8x64xf32, #tpu.memory_space<vmem>>, vector<8x64xf32>,
    } else {
    }
    %c0 = arith.constant 0 : index
    %c0_1 = arith.constant 0 : index
    %3 = vector.load %arg9[%c0, %c0_1] : memref<8x64xf32, #tpu.memory_space<vmem>>, vector<8x64xf32>
    %c0_2 = arith.constant 0 : index
    %c0_3 = arith.constant 0 : index
    %4 = vector.load %arg1[%c0_2, %c0_3] : memref<8x896xbf16, #tpu.memory_space<vmem>>, vector<8x896xbf16>
    %c0_4 = arith.constant 0 : index
    %c0_5 = arith.constant 0 : index
    %5 = vector.load %arg2[%c0_4, %c0_5] : memref<896x64xbf16, #tpu.memory_space<vmem>>, vector<896x64xbf16>
    %cst = arith.constant dense<0.000000e+00> : vector<8x64xf32>
    %6 = tpu.matmul %4, %5, %cst {dimension_numbers = #tpu.dot_dimension_numbers<[1], [0], [0], [1], [0, 0, 1, 1], [], []>} : vector<8x896xbf16>, vector<896x64xbf16>, vector<8x64xf32> -> vector<8x64xf32>
    %7 = arith.addf %3, %6 : vector<8x64xf32>
    %c0_6 = arith.constant 0 : index
    %c0_7 = arith.constant 0 : index
    %8 = vector.load %arg9[%c0_6, %c0_7] : memref<8x64xf32, #tpu.memory_space<vmem>>, vector<8x64xf32>
    tpu.vector_store %arg9[%c0_6, %c0_7], %7 {strides = array<i32>} : memref<8x64xf32, #tpu.memory_space<vmem>>, vector<8x64xf32>,
    %c1_i32 = arith.constant 1 : i32
    %9 = arith.cmpi eq, %arg0, %c1_i32 : i32
    %10 = arith.extui %9 : i1 to i32
    %c0_i32_8 = arith.constant 0 : i32
    %11 = arith.cmpi ne, %10, %c0_i32_8 : i32
    scf.if %11 {
      %c0_9 = arith.constant 0 : index
      %c0_10 = arith.constant 0 : index
      %12 = vector.load %arg9[%c0_9, %c0_10] : memref<8x64xf32, #tpu.memory_space<vmem>>, vector<8x64xf32>
      %c0_11 = arith.constant 0 : index
      %c0_12 = arith.constant 0 : index
      %13 = vector.load %arg3[%c0_11, %c0_12] : memref<1x64xf32, #tpu.memory_space<vmem>>, vector<1x64xf32>
      %14 = vector.broadcast %13 : vector<1x64xf32> to vector<8x64xf32>
      %15 = arith.addf %12, %14 : vector<8x64xf32>
      %c0_13 = arith.constant 0 : index
      %c0_14 = arith.constant 0 : index
      %16 = vector.load %arg4[%c0_13, %c0_14] : memref<64x32xf32, #tpu.memory_space<vmem>>, vector<64x32xf32>
      %cst_15 = arith.constant dense<0.000000e+00> : vector<8x32xf32>
      %17 = tpu.matmul %15, %16, %cst_15 {dimension_numbers = #tpu.dot_dimension_numbers<[1], [0], [0], [1], [0, 0, 1, 1], [], []>} : vector<8x64xf32>, vector<64x32xf32>, vector<8x32xf32> -> vector<8x32xf32>
      %c0_16 = arith.constant 0 : index
      %c0_17 = arith.constant 0 : index
      %18 = vector.load %arg5[%c0_16, %c0_17] : memref<1x32xf32, #tpu.memory_space<vmem>>, vector<1x32xf32>
      %19 = vector.broadcast %18 : vector<1x32xf32> to vector<8x32xf32>
      %20 = arith.addf %17, %19 : vector<8x32xf32>
      %c0_i32_18 = arith.constant 0 : i32
      %cst_19 = arith.constant 1.000000e+00 : f32
      %21 = vector.broadcast %cst_19 : f32 to vector<8x64xf32>
      %22 = arith.subf %15, %21 : vector<8x64xf32>
      %cst_20 = arith.constant 0.000000e+00 : f32
      %23 = vector.broadcast %cst_20 : f32 to vector<8x64xf32>
      %24 = arith.cmpf ogt, %22, %23 : vector<8x64xf32>
      %25 = arith.extui %24 : vector<8x64xi1> to vector<8x64xi32>
      %26 = arith.sitofp %25 : vector<8x64xi32> to vector<8x64xf32>
      %cst_21 = arith.constant 0.899999976 : f32
      %27 = vector.broadcast %cst_21 : f32 to vector<8x64xf32>
      %28 = arith.mulf %27, %15 : vector<8x64xf32>
      %29 = arith.addf %28, %15 : vector<8x64xf32>
      %cst_22 = arith.constant 1.000000e+00 : f32
      %30 = vector.broadcast %cst_22 : f32 to vector<8x64xf32>
      %31 = arith.mulf %26, %30 : vector<8x64xf32>
      %32 = arith.subf %29, %31 : vector<8x64xf32>
      %c0_23 = arith.constant 0 : index
      %c0_24 = arith.constant 0 : index
      %33 = vector.load %arg4[%c0_23, %c0_24] : memref<64x32xf32, #tpu.memory_space<vmem>>, vector<64x32xf32>
      %cst_25 = arith.constant dense<0.000000e+00> : vector<8x32xf32>
      %34 = tpu.matmul %32, %33, %cst_25 {dimension_numbers = #tpu.dot_dimension_numbers<[1], [0], [0], [1], [0, 0, 1, 1], [], []>} : vector<8x64xf32>, vector<64x32xf32>, vector<8x32xf32> -> vector<8x32xf32>
      %c0_26 = arith.constant 0 : index
      %c0_27 = arith.constant 0 : index
      %35 = vector.load %arg5[%c0_26, %c0_27] : memref<1x32xf32, #tpu.memory_space<vmem>>, vector<1x32xf32>
      %36 = vector.broadcast %35 : vector<1x32xf32> to vector<8x32xf32>
      %37 = arith.addf %34, %36 : vector<8x32xf32>
      %cst_28 = arith.constant 1.000000e+00 : f32
      %38 = vector.broadcast %cst_28 : f32 to vector<8x32xf32>
      %39 = arith.subf %20, %38 : vector<8x32xf32>
      %cst_29 = arith.constant 0.000000e+00 : f32
      %40 = vector.broadcast %cst_29 : f32 to vector<8x32xf32>
      %41 = arith.cmpf ogt, %39, %40 : vector<8x32xf32>
      %42 = arith.extui %41 : vector<8x32xi1> to vector<8x32xi32>
      %43 = arith.sitofp %42 : vector<8x32xi32> to vector<8x32xf32>
      %cst_30 = arith.constant 0.899999976 : f32
      %44 = vector.broadcast %cst_30 : f32 to vector<8x32xf32>
      %45 = arith.mulf %44, %20 : vector<8x32xf32>
      %46 = arith.addf %45, %37 : vector<8x32xf32>
      %cst_31 = arith.constant 1.000000e+00 : f32
      %47 = vector.broadcast %cst_31 : f32 to vector<8x32xf32>
      %48 = arith.mulf %43, %47 : vector<8x32xf32>
      %49 = arith.subf %46, %48 : vector<8x32xf32>
      %c1_i32_32 = arith.constant 1 : i32
      %cst_33 = arith.constant 1.000000e+00 : f32
      %50 = vector.broadcast %cst_33 : f32 to vector<8x64xf32>
      %51 = arith.subf %32, %50 : vector<8x64xf32>
      %cst_34 = arith.constant 0.000000e+00 : f32
      %52 = vector.broadcast %cst_34 : f32 to vector<8x64xf32>
      %53 = arith.cmpf ogt, %51, %52 : vector<8x64xf32>
      %54 = arith.extui %53 : vector<8x64xi1> to vector<8x64xi32>
      %55 = arith.sitofp %54 : vector<8x64xi32> to vector<8x64xf32>
      %cst_35 = arith.constant 0.899999976 : f32
      %56 = vector.broadcast %cst_35 : f32 to vector<8x64xf32>
      %57 = arith.mulf %56, %32 : vector<8x64xf32>
      %58 = arith.addf %57, %15 : vector<8x64xf32>
      %cst_36 = arith.constant 1.000000e+00 : f32
      %59 = vector.broadcast %cst_36 : f32 to vector<8x64xf32>
      %60 = arith.mulf %55, %59 : vector<8x64xf32>
      %61 = arith.subf %58, %60 : vector<8x64xf32>
      %c0_37 = arith.constant 0 : index
      %c0_38 = arith.constant 0 : index
      %62 = vector.load %arg4[%c0_37, %c0_38] : memref<64x32xf32, #tpu.memory_space<vmem>>, vector<64x32xf32>
      %cst_39 = arith.constant dense<0.000000e+00> : vector<8x32xf32>
      %63 = tpu.matmul %61, %62, %cst_39 {dimension_numbers = #tpu.dot_dimension_numbers<[1], [0], [0], [1], [0, 0, 1, 1], [], []>} : vector<8x64xf32>, vector<64x32xf32>, vector<8x32xf32> -> vector<8x32xf32>
      %c0_40 = arith.constant 0 : index
      %c0_41 = arith.constant 0 : index
      %64 = vector.load %arg5[%c0_40, %c0_41] : memref<1x32xf32, #tpu.memory_space<vmem>>, vector<1x32xf32>
      %65 = vector.broadcast %64 : vector<1x32xf32> to vector<8x32xf32>
      %66 = arith.addf %63, %65 : vector<8x32xf32>
      %cst_42 = arith.constant 1.000000e+00 : f32
      %67 = vector.broadcast %cst_42 : f32 to vector<8x32xf32>
      %68 = arith.subf %49, %67 : vector<8x32xf32>
      %cst_43 = arith.constant 0.000000e+00 : f32
      %69 = vector.broadcast %cst_43 : f32 to vector<8x32xf32>
      %70 = arith.cmpf ogt, %68, %69 : vector<8x32xf32>
      %71 = arith.extui %70 : vector<8x32xi1> to vector<8x32xi32>
      %72 = arith.sitofp %71 : vector<8x32xi32> to vector<8x32xf32>
      %cst_44 = arith.constant 0.899999976 : f32
      %73 = vector.broadcast %cst_44 : f32 to vector<8x32xf32>
      %74 = arith.mulf %73, %49 : vector<8x32xf32>
      %75 = arith.addf %74, %66 : vector<8x32xf32>
      %cst_45 = arith.constant 1.000000e+00 : f32
      %76 = vector.broadcast %cst_45 : f32 to vector<8x32xf32>
      %77 = arith.mulf %72, %76 : vector<8x32xf32>
      %78 = arith.subf %75, %77 : vector<8x32xf32>
      %c2_i32 = arith.constant 2 : i32
      %cst_46 = arith.constant 1.000000e+00 : f32
      %79 = vector.broadcast %cst_46 : f32 to vector<8x64xf32>
      %80 = arith.subf %61, %79 : vector<8x64xf32>
      %cst_47 = arith.constant 0.000000e+00 : f32
      %81 = vector.broadcast %cst_47 : f32 to vector<8x64xf32>
      %82 = arith.cmpf ogt, %80, %81 : vector<8x64xf32>
      %83 = arith.extui %82 : vector<8x64xi1> to vector<8x64xi32>
      %84 = arith.sitofp %83 : vector<8x64xi32> to vector<8x64xf32>
      %cst_48 = arith.constant 0.899999976 : f32
      %85 = vector.broadcast %cst_48 : f32 to vector<8x64xf32>
      %86 = arith.mulf %85, %61 : vector<8x64xf32>
      %87 = arith.addf %86, %15 : vector<8x64xf32>
      %cst_49 = arith.constant 1.000000e+00 : f32
      %88 = vector.broadcast %cst_49 : f32 to vector<8x64xf32>
      %89 = arith.mulf %84, %88 : vector<8x64xf32>
      %90 = arith.subf %87, %89 : vector<8x64xf32>
      %c0_50 = arith.constant 0 : index
      %c0_51 = arith.constant 0 : index
      %91 = vector.load %arg4[%c0_50, %c0_51] : memref<64x32xf32, #tpu.memory_space<vmem>>, vector<64x32xf32>
      %cst_52 = arith.constant dense<0.000000e+00> : vector<8x32xf32>
      %92 = tpu.matmul %90, %91, %cst_52 {dimension_numbers = #tpu.dot_dimension_numbers<[1], [0], [0], [1], [0, 0, 1, 1], [], []>} : vector<8x64xf32>, vector<64x32xf32>, vector<8x32xf32> -> vector<8x32xf32>
      %c0_53 = arith.constant 0 : index
      %c0_54 = arith.constant 0 : index
      %93 = vector.load %arg5[%c0_53, %c0_54] : memref<1x32xf32, #tpu.memory_space<vmem>>, vector<1x32xf32>
      %94 = vector.broadcast %93 : vector<1x32xf32> to vector<8x32xf32>
      %95 = arith.addf %92, %94 : vector<8x32xf32>
      %cst_55 = arith.constant 1.000000e+00 : f32
      %96 = vector.broadcast %cst_55 : f32 to vector<8x32xf32>
      %97 = arith.subf %78, %96 : vector<8x32xf32>
      %cst_56 = arith.constant 0.000000e+00 : f32
      %98 = vector.broadcast %cst_56 : f32 to vector<8x32xf32>
      %99 = arith.cmpf ogt, %97, %98 : vector<8x32xf32>
      %100 = arith.extui %99 : vector<8x32xi1> to vector<8x32xi32>
      %101 = arith.sitofp %100 : vector<8x32xi32> to vector<8x32xf32>
      %cst_57 = arith.constant 0.899999976 : f32
      %102 = vector.broadcast %cst_57 : f32 to vector<8x32xf32>
      %103 = arith.mulf %102, %78 : vector<8x32xf32>
      %104 = arith.addf %103, %95 : vector<8x32xf32>
      %cst_58 = arith.constant 1.000000e+00 : f32
      %105 = vector.broadcast %cst_58 : f32 to vector<8x32xf32>
      %106 = arith.mulf %101, %105 : vector<8x32xf32>
      %107 = arith.subf %104, %106 : vector<8x32xf32>
      %c3_i32 = arith.constant 3 : i32
      %cst_59 = arith.constant 1.000000e+00 : f32
      %108 = vector.broadcast %cst_59 : f32 to vector<8x64xf32>
      %109 = arith.subf %90, %108 : vector<8x64xf32>
      %cst_60 = arith.constant 0.000000e+00 : f32
      %110 = vector.broadcast %cst_60 : f32 to vector<8x64xf32>
      %111 = arith.cmpf ogt, %109, %110 : vector<8x64xf32>
      %112 = arith.extui %111 : vector<8x64xi1> to vector<8x64xi32>
      %113 = arith.sitofp %112 : vector<8x64xi32> to vector<8x64xf32>
      %cst_61 = arith.constant 0.899999976 : f32
      %114 = vector.broadcast %cst_61 : f32 to vector<8x64xf32>
      %115 = arith.mulf %114, %90 : vector<8x64xf32>
      %116 = arith.addf %115, %15 : vector<8x64xf32>
      %cst_62 = arith.constant 1.000000e+00 : f32
      %117 = vector.broadcast %cst_62 : f32 to vector<8x64xf32>
      %118 = arith.mulf %113, %117 : vector<8x64xf32>
      %119 = arith.subf %116, %118 : vector<8x64xf32>
      %c0_63 = arith.constant 0 : index
      %c0_64 = arith.constant 0 : index
      %120 = vector.load %arg4[%c0_63, %c0_64] : memref<64x32xf32, #tpu.memory_space<vmem>>, vector<64x32xf32>
      %cst_65 = arith.constant dense<0.000000e+00> : vector<8x32xf32>
      %121 = tpu.matmul %119, %120, %cst_65 {dimension_numbers = #tpu.dot_dimension_numbers<[1], [0], [0], [1], [0, 0, 1, 1], [], []>} : vector<8x64xf32>, vector<64x32xf32>, vector<8x32xf32> -> vector<8x32xf32>
      %c0_66 = arith.constant 0 : index
      %c0_67 = arith.constant 0 : index
      %122 = vector.load %arg5[%c0_66, %c0_67] : memref<1x32xf32, #tpu.memory_space<vmem>>, vector<1x32xf32>
      %123 = vector.broadcast %122 : vector<1x32xf32> to vector<8x32xf32>
      %124 = arith.addf %121, %123 : vector<8x32xf32>
      %cst_68 = arith.constant 1.000000e+00 : f32
      %125 = vector.broadcast %cst_68 : f32 to vector<8x32xf32>
      %126 = arith.subf %107, %125 : vector<8x32xf32>
      %cst_69 = arith.constant 0.000000e+00 : f32
      %127 = vector.broadcast %cst_69 : f32 to vector<8x32xf32>
      %128 = arith.cmpf ogt, %126, %127 : vector<8x32xf32>
      %129 = arith.extui %128 : vector<8x32xi1> to vector<8x32xi32>
      %130 = arith.sitofp %129 : vector<8x32xi32> to vector<8x32xf32>
      %cst_70 = arith.constant 0.899999976 : f32
      %131 = vector.broadcast %cst_70 : f32 to vector<8x32xf32>
      %132 = arith.mulf %131, %107 : vector<8x32xf32>
      %133 = arith.addf %132, %124 : vector<8x32xf32>
      %cst_71 = arith.constant 1.000000e+00 : f32
      %134 = vector.broadcast %cst_71 : f32 to vector<8x32xf32>
      %135 = arith.mulf %130, %134 : vector<8x32xf32>
      %136 = arith.subf %133, %135 : vector<8x32xf32>
      %c4_i32 = arith.constant 4 : i32
      %cst_72 = arith.constant 1.000000e+00 : f32
      %137 = vector.broadcast %cst_72 : f32 to vector<8x64xf32>
      %138 = arith.subf %119, %137 : vector<8x64xf32>
      %cst_73 = arith.constant 0.000000e+00 : f32
      %139 = vector.broadcast %cst_73 : f32 to vector<8x64xf32>
      %140 = arith.cmpf ogt, %138, %139 : vector<8x64xf32>
      %141 = arith.extui %140 : vector<8x64xi1> to vector<8x64xi32>
      %142 = arith.sitofp %141 : vector<8x64xi32> to vector<8x64xf32>
      %cst_74 = arith.constant 0.899999976 : f32
      %143 = vector.broadcast %cst_74 : f32 to vector<8x64xf32>
      %144 = arith.mulf %143, %119 : vector<8x64xf32>
      %145 = arith.addf %144, %15 : vector<8x64xf32>
      %cst_75 = arith.constant 1.000000e+00 : f32
      %146 = vector.broadcast %cst_75 : f32 to vector<8x64xf32>
      %147 = arith.mulf %142, %146 : vector<8x64xf32>
      %148 = arith.subf %145, %147 : vector<8x64xf32>
      %c0_76 = arith.constant 0 : index
      %c0_77 = arith.constant 0 : index
      %149 = vector.load %arg4[%c0_76, %c0_77] : memref<64x32xf32, #tpu.memory_space<vmem>>, vector<64x32xf32>
      %cst_78 = arith.constant dense<0.000000e+00> : vector<8x32xf32>
      %150 = tpu.matmul %148, %149, %cst_78 {dimension_numbers = #tpu.dot_dimension_numbers<[1], [0], [0], [1], [0, 0, 1, 1], [], []>} : vector<8x64xf32>, vector<64x32xf32>, vector<8x32xf32> -> vector<8x32xf32>
      %c0_79 = arith.constant 0 : index
      %c0_80 = arith.constant 0 : index
      %151 = vector.load %arg5[%c0_79, %c0_80] : memref<1x32xf32, #tpu.memory_space<vmem>>, vector<1x32xf32>
      %152 = vector.broadcast %151 : vector<1x32xf32> to vector<8x32xf32>
      %153 = arith.addf %150, %152 : vector<8x32xf32>
      %cst_81 = arith.constant 1.000000e+00 : f32
      %154 = vector.broadcast %cst_81 : f32 to vector<8x32xf32>
      %155 = arith.subf %136, %154 : vector<8x32xf32>
      %cst_82 = arith.constant 0.000000e+00 : f32
      %156 = vector.broadcast %cst_82 : f32 to vector<8x32xf32>
      %157 = arith.cmpf ogt, %155, %156 : vector<8x32xf32>
      %158 = arith.extui %157 : vector<8x32xi1> to vector<8x32xi32>
      %159 = arith.sitofp %158 : vector<8x32xi32> to vector<8x32xf32>
      %cst_83 = arith.constant 0.899999976 : f32
      %160 = vector.broadcast %cst_83 : f32 to vector<8x32xf32>
      %161 = arith.mulf %160, %136 : vector<8x32xf32>
      %162 = arith.addf %161, %153 : vector<8x32xf32>
      %cst_84 = arith.constant 1.000000e+00 : f32
      %163 = vector.broadcast %cst_84 : f32 to vector<8x32xf32>
      %164 = arith.mulf %159, %163 : vector<8x32xf32>
      %165 = arith.subf %162, %164 : vector<8x32xf32>
      %c5_i32 = arith.constant 5 : i32
      %cst_85 = arith.constant 1.000000e+00 : f32
      %166 = vector.broadcast %cst_85 : f32 to vector<8x64xf32>
      %167 = arith.subf %148, %166 : vector<8x64xf32>
      %cst_86 = arith.constant 0.000000e+00 : f32
      %168 = vector.broadcast %cst_86 : f32 to vector<8x64xf32>
      %169 = arith.cmpf ogt, %167, %168 : vector<8x64xf32>
      %170 = arith.extui %169 : vector<8x64xi1> to vector<8x64xi32>
      %171 = arith.sitofp %170 : vector<8x64xi32> to vector<8x64xf32>
      %cst_87 = arith.constant 0.899999976 : f32
      %172 = vector.broadcast %cst_87 : f32 to vector<8x64xf32>
      %173 = arith.mulf %172, %148 : vector<8x64xf32>
      %174 = arith.addf %173, %15 : vector<8x64xf32>
      %cst_88 = arith.constant 1.000000e+00 : f32
      %175 = vector.broadcast %cst_88 : f32 to vector<8x64xf32>
      %176 = arith.mulf %171, %175 : vector<8x64xf32>
      %177 = arith.subf %174, %176 : vector<8x64xf32>
      %c0_89 = arith.constant 0 : index
      %c0_90 = arith.constant 0 : index
      %178 = vector.load %arg4[%c0_89, %c0_90] : memref<64x32xf32, #tpu.memory_space<vmem>>, vector<64x32xf32>
      %cst_91 = arith.constant dense<0.000000e+00> : vector<8x32xf32>
      %179 = tpu.matmul %177, %178, %cst_91 {dimension_numbers = #tpu.dot_dimension_numbers<[1], [0], [0], [1], [0, 0, 1, 1], [], []>} : vector<8x64xf32>, vector<64x32xf32>, vector<8x32xf32> -> vector<8x32xf32>
      %c0_92 = arith.constant 0 : index
      %c0_93 = arith.constant 0 : index
      %180 = vector.load %arg5[%c0_92, %c0_93] : memref<1x32xf32, #tpu.memory_space<vmem>>, vector<1x32xf32>
      %181 = vector.broadcast %180 : vector<1x32xf32> to vector<8x32xf32>
      %182 = arith.addf %179, %181 : vector<8x32xf32>
      %cst_94 = arith.constant 1.000000e+00 : f32
      %183 = vector.broadcast %cst_94 : f32 to vector<8x32xf32>
      %184 = arith.subf %165, %183 : vector<8x32xf32>
      %cst_95 = arith.constant 0.000000e+00 : f32
      %185 = vector.broadcast %cst_95 : f32 to vector<8x32xf32>
      %186 = arith.cmpf ogt, %184, %185 : vector<8x32xf32>
      %187 = arith.extui %186 : vector<8x32xi1> to vector<8x32xi32>
      %188 = arith.sitofp %187 : vector<8x32xi32> to vector<8x32xf32>
      %cst_96 = arith.constant 0.899999976 : f32
      %189 = vector.broadcast %cst_96 : f32 to vector<8x32xf32>
      %190 = arith.mulf %189, %165 : vector<8x32xf32>
      %191 = arith.addf %190, %182 : vector<8x32xf32>
      %cst_97 = arith.constant 1.000000e+00 : f32
      %192 = vector.broadcast %cst_97 : f32 to vector<8x32xf32>
      %193 = arith.mulf %188, %192 : vector<8x32xf32>
      %194 = arith.subf %191, %193 : vector<8x32xf32>
      %c6_i32 = arith.constant 6 : i32
      %cst_98 = arith.constant 1.000000e+00 : f32
      %195 = vector.broadcast %cst_98 : f32 to vector<8x64xf32>
      %196 = arith.subf %177, %195 : vector<8x64xf32>
      %cst_99 = arith.constant 0.000000e+00 : f32
      %197 = vector.broadcast %cst_99 : f32 to vector<8x64xf32>
      %198 = arith.cmpf ogt, %196, %197 : vector<8x64xf32>
      %199 = arith.extui %198 : vector<8x64xi1> to vector<8x64xi32>
      %200 = arith.sitofp %199 : vector<8x64xi32> to vector<8x64xf32>
      %cst_100 = arith.constant 0.899999976 : f32
      %201 = vector.broadcast %cst_100 : f32 to vector<8x64xf32>
      %202 = arith.mulf %201, %177 : vector<8x64xf32>
      %203 = arith.addf %202, %15 : vector<8x64xf32>
      %cst_101 = arith.constant 1.000000e+00 : f32
      %204 = vector.broadcast %cst_101 : f32 to vector<8x64xf32>
      %205 = arith.mulf %200, %204 : vector<8x64xf32>
      %206 = arith.subf %203, %205 : vector<8x64xf32>
      %c0_102 = arith.constant 0 : index
      %c0_103 = arith.constant 0 : index
      %207 = vector.load %arg4[%c0_102, %c0_103] : memref<64x32xf32, #tpu.memory_space<vmem>>, vector<64x32xf32>
      %cst_104 = arith.constant dense<0.000000e+00> : vector<8x32xf32>
      %208 = tpu.matmul %206, %207, %cst_104 {dimension_numbers = #tpu.dot_dimension_numbers<[1], [0], [0], [1], [0, 0, 1, 1], [], []>} : vector<8x64xf32>, vector<64x32xf32>, vector<8x32xf32> -> vector<8x32xf32>
      %c0_105 = arith.constant 0 : index
      %c0_106 = arith.constant 0 : index
      %209 = vector.load %arg5[%c0_105, %c0_106] : memref<1x32xf32, #tpu.memory_space<vmem>>, vector<1x32xf32>
      %210 = vector.broadcast %209 : vector<1x32xf32> to vector<8x32xf32>
      %211 = arith.addf %208, %210 : vector<8x32xf32>
      %cst_107 = arith.constant 1.000000e+00 : f32
      %212 = vector.broadcast %cst_107 : f32 to vector<8x32xf32>
      %213 = arith.subf %194, %212 : vector<8x32xf32>
      %cst_108 = arith.constant 0.000000e+00 : f32
      %214 = vector.broadcast %cst_108 : f32 to vector<8x32xf32>
      %215 = arith.cmpf ogt, %213, %214 : vector<8x32xf32>
      %216 = arith.extui %215 : vector<8x32xi1> to vector<8x32xi32>
      %217 = arith.sitofp %216 : vector<8x32xi32> to vector<8x32xf32>
      %cst_109 = arith.constant 0.899999976 : f32
      %218 = vector.broadcast %cst_109 : f32 to vector<8x32xf32>
      %219 = arith.mulf %218, %194 : vector<8x32xf32>
      %220 = arith.addf %219, %211 : vector<8x32xf32>
      %cst_110 = arith.constant 1.000000e+00 : f32
      %221 = vector.broadcast %cst_110 : f32 to vector<8x32xf32>
      %222 = arith.mulf %217, %221 : vector<8x32xf32>
      %223 = arith.subf %220, %222 : vector<8x32xf32>
      %c7_i32 = arith.constant 7 : i32
      %cst_111 = arith.constant 1.000000e+00 : f32
      %224 = vector.broadcast %cst_111 : f32 to vector<8x64xf32>
      %225 = arith.subf %206, %224 : vector<8x64xf32>
      %cst_112 = arith.constant 0.000000e+00 : f32
      %226 = vector.broadcast %cst_112 : f32 to vector<8x64xf32>
      %227 = arith.cmpf ogt, %225, %226 : vector<8x64xf32>
      %228 = arith.extui %227 : vector<8x64xi1> to vector<8x64xi32>
      %229 = arith.sitofp %228 : vector<8x64xi32> to vector<8x64xf32>
      %cst_113 = arith.constant 0.899999976 : f32
      %230 = vector.broadcast %cst_113 : f32 to vector<8x64xf32>
      %231 = arith.mulf %230, %206 : vector<8x64xf32>
      %232 = arith.addf %231, %15 : vector<8x64xf32>
      %cst_114 = arith.constant 1.000000e+00 : f32
      %233 = vector.broadcast %cst_114 : f32 to vector<8x64xf32>
      %234 = arith.mulf %229, %233 : vector<8x64xf32>
      %235 = arith.subf %232, %234 : vector<8x64xf32>
      %c0_115 = arith.constant 0 : index
      %c0_116 = arith.constant 0 : index
      %236 = vector.load %arg4[%c0_115, %c0_116] : memref<64x32xf32, #tpu.memory_space<vmem>>, vector<64x32xf32>
      %cst_117 = arith.constant dense<0.000000e+00> : vector<8x32xf32>
      %237 = tpu.matmul %235, %236, %cst_117 {dimension_numbers = #tpu.dot_dimension_numbers<[1], [0], [0], [1], [0, 0, 1, 1], [], []>} : vector<8x64xf32>, vector<64x32xf32>, vector<8x32xf32> -> vector<8x32xf32>
      %c0_118 = arith.constant 0 : index
      %c0_119 = arith.constant 0 : index
      %238 = vector.load %arg5[%c0_118, %c0_119] : memref<1x32xf32, #tpu.memory_space<vmem>>, vector<1x32xf32>
      %239 = vector.broadcast %238 : vector<1x32xf32> to vector<8x32xf32>
      %240 = arith.addf %237, %239 : vector<8x32xf32>
      %cst_120 = arith.constant 1.000000e+00 : f32
      %241 = vector.broadcast %cst_120 : f32 to vector<8x32xf32>
      %242 = arith.subf %223, %241 : vector<8x32xf32>
      %cst_121 = arith.constant 0.000000e+00 : f32
      %243 = vector.broadcast %cst_121 : f32 to vector<8x32xf32>
      %244 = arith.cmpf ogt, %242, %243 : vector<8x32xf32>
      %245 = arith.extui %244 : vector<8x32xi1> to vector<8x32xi32>
      %246 = arith.sitofp %245 : vector<8x32xi32> to vector<8x32xf32>
      %cst_122 = arith.constant 0.899999976 : f32
      %247 = vector.broadcast %cst_122 : f32 to vector<8x32xf32>
      %248 = arith.mulf %247, %223 : vector<8x32xf32>
      %249 = arith.addf %248, %240 : vector<8x32xf32>
      %cst_123 = arith.constant 1.000000e+00 : f32
      %250 = vector.broadcast %cst_123 : f32 to vector<8x32xf32>
      %251 = arith.mulf %246, %250 : vector<8x32xf32>
      %252 = arith.subf %249, %251 : vector<8x32xf32>
      %c8_i32 = arith.constant 8 : i32
      %cst_124 = arith.constant 1.000000e+00 : f32
      %253 = vector.broadcast %cst_124 : f32 to vector<8x64xf32>
      %254 = arith.subf %235, %253 : vector<8x64xf32>
      %cst_125 = arith.constant 0.000000e+00 : f32
      %255 = vector.broadcast %cst_125 : f32 to vector<8x64xf32>
      %256 = arith.cmpf ogt, %254, %255 : vector<8x64xf32>
      %257 = arith.extui %256 : vector<8x64xi1> to vector<8x64xi32>
      %258 = arith.sitofp %257 : vector<8x64xi32> to vector<8x64xf32>
      %cst_126 = arith.constant 0.899999976 : f32
      %259 = vector.broadcast %cst_126 : f32 to vector<8x64xf32>
      %260 = arith.mulf %259, %235 : vector<8x64xf32>
      %261 = arith.addf %260, %15 : vector<8x64xf32>
      %cst_127 = arith.constant 1.000000e+00 : f32
      %262 = vector.broadcast %cst_127 : f32 to vector<8x64xf32>
      %263 = arith.mulf %258, %262 : vector<8x64xf32>
      %264 = arith.subf %261, %263 : vector<8x64xf32>
      %c0_128 = arith.constant 0 : index
      %c0_129 = arith.constant 0 : index
      %265 = vector.load %arg4[%c0_128, %c0_129] : memref<64x32xf32, #tpu.memory_space<vmem>>, vector<64x32xf32>
      %cst_130 = arith.constant dense<0.000000e+00> : vector<8x32xf32>
      %266 = tpu.matmul %264, %265, %cst_130 {dimension_numbers = #tpu.dot_dimension_numbers<[1], [0], [0], [1], [0, 0, 1, 1], [], []>} : vector<8x64xf32>, vector<64x32xf32>, vector<8x32xf32> -> vector<8x32xf32>
      %c0_131 = arith.constant 0 : index
      %c0_132 = arith.constant 0 : index
      %267 = vector.load %arg5[%c0_131, %c0_132] : memref<1x32xf32, #tpu.memory_space<vmem>>, vector<1x32xf32>
      %268 = vector.broadcast %267 : vector<1x32xf32> to vector<8x32xf32>
      %269 = arith.addf %266, %268 : vector<8x32xf32>
      %cst_133 = arith.constant 1.000000e+00 : f32
      %270 = vector.broadcast %cst_133 : f32 to vector<8x32xf32>
      %271 = arith.subf %252, %270 : vector<8x32xf32>
      %cst_134 = arith.constant 0.000000e+00 : f32
      %272 = vector.broadcast %cst_134 : f32 to vector<8x32xf32>
      %273 = arith.cmpf ogt, %271, %272 : vector<8x32xf32>
      %274 = arith.extui %273 : vector<8x32xi1> to vector<8x32xi32>
      %275 = arith.sitofp %274 : vector<8x32xi32> to vector<8x32xf32>
      %cst_135 = arith.constant 0.899999976 : f32
      %276 = vector.broadcast %cst_135 : f32 to vector<8x32xf32>
      %277 = arith.mulf %276, %252 : vector<8x32xf32>
      %278 = arith.addf %277, %269 : vector<8x32xf32>
      %cst_136 = arith.constant 1.000000e+00 : f32
      %279 = vector.broadcast %cst_136 : f32 to vector<8x32xf32>
      %280 = arith.mulf %275, %279 : vector<8x32xf32>
      %281 = arith.subf %278, %280 : vector<8x32xf32>
      %c9_i32 = arith.constant 9 : i32
      %cst_137 = arith.constant 1.000000e+00 : f32
      %282 = vector.broadcast %cst_137 : f32 to vector<8x64xf32>
      %283 = arith.subf %264, %282 : vector<8x64xf32>
      %cst_138 = arith.constant 0.000000e+00 : f32
      %284 = vector.broadcast %cst_138 : f32 to vector<8x64xf32>
      %285 = arith.cmpf ogt, %283, %284 : vector<8x64xf32>
      %286 = arith.extui %285 : vector<8x64xi1> to vector<8x64xi32>
      %287 = arith.sitofp %286 : vector<8x64xi32> to vector<8x64xf32>
      %cst_139 = arith.constant 0.899999976 : f32
      %288 = vector.broadcast %cst_139 : f32 to vector<8x64xf32>
      %289 = arith.mulf %288, %264 : vector<8x64xf32>
      %290 = arith.addf %289, %15 : vector<8x64xf32>
      %cst_140 = arith.constant 1.000000e+00 : f32
      %291 = vector.broadcast %cst_140 : f32 to vector<8x64xf32>
      %292 = arith.mulf %287, %291 : vector<8x64xf32>
      %293 = arith.subf %290, %292 : vector<8x64xf32>
      %c0_141 = arith.constant 0 : index
      %c0_142 = arith.constant 0 : index
      %294 = vector.load %arg4[%c0_141, %c0_142] : memref<64x32xf32, #tpu.memory_space<vmem>>, vector<64x32xf32>
      %cst_143 = arith.constant dense<0.000000e+00> : vector<8x32xf32>
      %295 = tpu.matmul %293, %294, %cst_143 {dimension_numbers = #tpu.dot_dimension_numbers<[1], [0], [0], [1], [0, 0, 1, 1], [], []>} : vector<8x64xf32>, vector<64x32xf32>, vector<8x32xf32> -> vector<8x32xf32>
      %c0_144 = arith.constant 0 : index
      %c0_145 = arith.constant 0 : index
      %296 = vector.load %arg5[%c0_144, %c0_145] : memref<1x32xf32, #tpu.memory_space<vmem>>, vector<1x32xf32>
      %297 = vector.broadcast %296 : vector<1x32xf32> to vector<8x32xf32>
      %298 = arith.addf %295, %297 : vector<8x32xf32>
      %cst_146 = arith.constant 1.000000e+00 : f32
      %299 = vector.broadcast %cst_146 : f32 to vector<8x32xf32>
      %300 = arith.subf %281, %299 : vector<8x32xf32>
      %cst_147 = arith.constant 0.000000e+00 : f32
      %301 = vector.broadcast %cst_147 : f32 to vector<8x32xf32>
      %302 = arith.cmpf ogt, %300, %301 : vector<8x32xf32>
      %303 = arith.extui %302 : vector<8x32xi1> to vector<8x32xi32>
      %304 = arith.sitofp %303 : vector<8x32xi32> to vector<8x32xf32>
      %cst_148 = arith.constant 0.899999976 : f32
      %305 = vector.broadcast %cst_148 : f32 to vector<8x32xf32>
      %306 = arith.mulf %305, %281 : vector<8x32xf32>
      %307 = arith.addf %306, %298 : vector<8x32xf32>
      %cst_149 = arith.constant 1.000000e+00 : f32
      %308 = vector.broadcast %cst_149 : f32 to vector<8x32xf32>
      %309 = arith.mulf %304, %308 : vector<8x32xf32>
      %310 = arith.subf %307, %309 : vector<8x32xf32>
      %c10_i32 = arith.constant 10 : i32
      %cst_150 = arith.constant 1.000000e+00 : f32
      %311 = vector.broadcast %cst_150 : f32 to vector<8x64xf32>
      %312 = arith.subf %293, %311 : vector<8x64xf32>
      %cst_151 = arith.constant 0.000000e+00 : f32
      %313 = vector.broadcast %cst_151 : f32 to vector<8x64xf32>
      %314 = arith.cmpf ogt, %312, %313 : vector<8x64xf32>
      %315 = arith.extui %314 : vector<8x64xi1> to vector<8x64xi32>
      %316 = arith.sitofp %315 : vector<8x64xi32> to vector<8x64xf32>
      %cst_152 = arith.constant 0.899999976 : f32
      %317 = vector.broadcast %cst_152 : f32 to vector<8x64xf32>
      %318 = arith.mulf %317, %293 : vector<8x64xf32>
      %319 = arith.addf %318, %15 : vector<8x64xf32>
      %cst_153 = arith.constant 1.000000e+00 : f32
      %320 = vector.broadcast %cst_153 : f32 to vector<8x64xf32>
      %321 = arith.mulf %316, %320 : vector<8x64xf32>
      %322 = arith.subf %319, %321 : vector<8x64xf32>
      %c0_154 = arith.constant 0 : index
      %c0_155 = arith.constant 0 : index
      %323 = vector.load %arg4[%c0_154, %c0_155] : memref<64x32xf32, #tpu.memory_space<vmem>>, vector<64x32xf32>
      %cst_156 = arith.constant dense<0.000000e+00> : vector<8x32xf32>
      %324 = tpu.matmul %322, %323, %cst_156 {dimension_numbers = #tpu.dot_dimension_numbers<[1], [0], [0], [1], [0, 0, 1, 1], [], []>} : vector<8x64xf32>, vector<64x32xf32>, vector<8x32xf32> -> vector<8x32xf32>
      %c0_157 = arith.constant 0 : index
      %c0_158 = arith.constant 0 : index
      %325 = vector.load %arg5[%c0_157, %c0_158] : memref<1x32xf32, #tpu.memory_space<vmem>>, vector<1x32xf32>
      %326 = vector.broadcast %325 : vector<1x32xf32> to vector<8x32xf32>
      %327 = arith.addf %324, %326 : vector<8x32xf32>
      %cst_159 = arith.constant 1.000000e+00 : f32
      %328 = vector.broadcast %cst_159 : f32 to vector<8x32xf32>
      %329 = arith.subf %310, %328 : vector<8x32xf32>
      %cst_160 = arith.constant 0.000000e+00 : f32
      %330 = vector.broadcast %cst_160 : f32 to vector<8x32xf32>
      %331 = arith.cmpf ogt, %329, %330 : vector<8x32xf32>
      %332 = arith.extui %331 : vector<8x32xi1> to vector<8x32xi32>
      %333 = arith.sitofp %332 : vector<8x32xi32> to vector<8x32xf32>
      %cst_161 = arith.constant 0.899999976 : f32
      %334 = vector.broadcast %cst_161 : f32 to vector<8x32xf32>
      %335 = arith.mulf %334, %310 : vector<8x32xf32>
      %336 = arith.addf %335, %327 : vector<8x32xf32>
      %cst_162 = arith.constant 1.000000e+00 : f32
      %337 = vector.broadcast %cst_162 : f32 to vector<8x32xf32>
      %338 = arith.mulf %333, %337 : vector<8x32xf32>
      %339 = arith.subf %336, %338 : vector<8x32xf32>
      %c11_i32 = arith.constant 11 : i32
      %cst_163 = arith.constant 1.000000e+00 : f32
      %340 = vector.broadcast %cst_163 : f32 to vector<8x64xf32>
      %341 = arith.subf %322, %340 : vector<8x64xf32>
      %cst_164 = arith.constant 0.000000e+00 : f32
      %342 = vector.broadcast %cst_164 : f32 to vector<8x64xf32>
      %343 = arith.cmpf ogt, %341, %342 : vector<8x64xf32>
      %344 = arith.extui %343 : vector<8x64xi1> to vector<8x64xi32>
      %345 = arith.sitofp %344 : vector<8x64xi32> to vector<8x64xf32>
      %cst_165 = arith.constant 0.899999976 : f32
      %346 = vector.broadcast %cst_165 : f32 to vector<8x64xf32>
      %347 = arith.mulf %346, %322 : vector<8x64xf32>
      %348 = arith.addf %347, %15 : vector<8x64xf32>
      %cst_166 = arith.constant 1.000000e+00 : f32
      %349 = vector.broadcast %cst_166 : f32 to vector<8x64xf32>
      %350 = arith.mulf %345, %349 : vector<8x64xf32>
      %351 = arith.subf %348, %350 : vector<8x64xf32>
      %c0_167 = arith.constant 0 : index
      %c0_168 = arith.constant 0 : index
      %352 = vector.load %arg4[%c0_167, %c0_168] : memref<64x32xf32, #tpu.memory_space<vmem>>, vector<64x32xf32>
      %cst_169 = arith.constant dense<0.000000e+00> : vector<8x32xf32>
      %353 = tpu.matmul %351, %352, %cst_169 {dimension_numbers = #tpu.dot_dimension_numbers<[1], [0], [0], [1], [0, 0, 1, 1], [], []>} : vector<8x64xf32>, vector<64x32xf32>, vector<8x32xf32> -> vector<8x32xf32>
      %c0_170 = arith.constant 0 : index
      %c0_171 = arith.constant 0 : index
      %354 = vector.load %arg5[%c0_170, %c0_171] : memref<1x32xf32, #tpu.memory_space<vmem>>, vector<1x32xf32>
      %355 = vector.broadcast %354 : vector<1x32xf32> to vector<8x32xf32>
      %356 = arith.addf %353, %355 : vector<8x32xf32>
      %cst_172 = arith.constant 1.000000e+00 : f32
      %357 = vector.broadcast %cst_172 : f32 to vector<8x32xf32>
      %358 = arith.subf %339, %357 : vector<8x32xf32>
      %cst_173 = arith.constant 0.000000e+00 : f32
      %359 = vector.broadcast %cst_173 : f32 to vector<8x32xf32>
      %360 = arith.cmpf ogt, %358, %359 : vector<8x32xf32>
      %361 = arith.extui %360 : vector<8x32xi1> to vector<8x32xi32>
      %362 = arith.sitofp %361 : vector<8x32xi32> to vector<8x32xf32>
      %cst_174 = arith.constant 0.899999976 : f32
      %363 = vector.broadcast %cst_174 : f32 to vector<8x32xf32>
      %364 = arith.mulf %363, %339 : vector<8x32xf32>
      %365 = arith.addf %364, %356 : vector<8x32xf32>
      %cst_175 = arith.constant 1.000000e+00 : f32
      %366 = vector.broadcast %cst_175 : f32 to vector<8x32xf32>
      %367 = arith.mulf %362, %366 : vector<8x32xf32>
      %368 = arith.subf %365, %367 : vector<8x32xf32>
      %c12_i32 = arith.constant 12 : i32
      %cst_176 = arith.constant 1.000000e+00 : f32
      %369 = vector.broadcast %cst_176 : f32 to vector<8x64xf32>
      %370 = arith.subf %351, %369 : vector<8x64xf32>
      %cst_177 = arith.constant 0.000000e+00 : f32
      %371 = vector.broadcast %cst_177 : f32 to vector<8x64xf32>
      %372 = arith.cmpf ogt, %370, %371 : vector<8x64xf32>
      %373 = arith.extui %372 : vector<8x64xi1> to vector<8x64xi32>
      %374 = arith.sitofp %373 : vector<8x64xi32> to vector<8x64xf32>
      %cst_178 = arith.constant 0.899999976 : f32
      %375 = vector.broadcast %cst_178 : f32 to vector<8x64xf32>
      %376 = arith.mulf %375, %351 : vector<8x64xf32>
      %377 = arith.addf %376, %15 : vector<8x64xf32>
      %cst_179 = arith.constant 1.000000e+00 : f32
      %378 = vector.broadcast %cst_179 : f32 to vector<8x64xf32>
      %379 = arith.mulf %374, %378 : vector<8x64xf32>
      %380 = arith.subf %377, %379 : vector<8x64xf32>
      %c0_180 = arith.constant 0 : index
      %c0_181 = arith.constant 0 : index
      %381 = vector.load %arg4[%c0_180, %c0_181] : memref<64x32xf32, #tpu.memory_space<vmem>>, vector<64x32xf32>
      %cst_182 = arith.constant dense<0.000000e+00> : vector<8x32xf32>
      %382 = tpu.matmul %380, %381, %cst_182 {dimension_numbers = #tpu.dot_dimension_numbers<[1], [0], [0], [1], [0, 0, 1, 1], [], []>} : vector<8x64xf32>, vector<64x32xf32>, vector<8x32xf32> -> vector<8x32xf32>
      %c0_183 = arith.constant 0 : index
      %c0_184 = arith.constant 0 : index
      %383 = vector.load %arg5[%c0_183, %c0_184] : memref<1x32xf32, #tpu.memory_space<vmem>>, vector<1x32xf32>
      %384 = vector.broadcast %383 : vector<1x32xf32> to vector<8x32xf32>
      %385 = arith.addf %382, %384 : vector<8x32xf32>
      %cst_185 = arith.constant 1.000000e+00 : f32
      %386 = vector.broadcast %cst_185 : f32 to vector<8x32xf32>
      %387 = arith.subf %368, %386 : vector<8x32xf32>
      %cst_186 = arith.constant 0.000000e+00 : f32
      %388 = vector.broadcast %cst_186 : f32 to vector<8x32xf32>
      %389 = arith.cmpf ogt, %387, %388 : vector<8x32xf32>
      %390 = arith.extui %389 : vector<8x32xi1> to vector<8x32xi32>
      %391 = arith.sitofp %390 : vector<8x32xi32> to vector<8x32xf32>
      %cst_187 = arith.constant 0.899999976 : f32
      %392 = vector.broadcast %cst_187 : f32 to vector<8x32xf32>
      %393 = arith.mulf %392, %368 : vector<8x32xf32>
      %394 = arith.addf %393, %385 : vector<8x32xf32>
      %cst_188 = arith.constant 1.000000e+00 : f32
      %395 = vector.broadcast %cst_188 : f32 to vector<8x32xf32>
      %396 = arith.mulf %391, %395 : vector<8x32xf32>
      %397 = arith.subf %394, %396 : vector<8x32xf32>
      %c13_i32 = arith.constant 13 : i32
      %cst_189 = arith.constant 1.000000e+00 : f32
      %398 = vector.broadcast %cst_189 : f32 to vector<8x64xf32>
      %399 = arith.subf %380, %398 : vector<8x64xf32>
      %cst_190 = arith.constant 0.000000e+00 : f32
      %400 = vector.broadcast %cst_190 : f32 to vector<8x64xf32>
      %401 = arith.cmpf ogt, %399, %400 : vector<8x64xf32>
      %402 = arith.extui %401 : vector<8x64xi1> to vector<8x64xi32>
      %403 = arith.sitofp %402 : vector<8x64xi32> to vector<8x64xf32>
      %cst_191 = arith.constant 0.899999976 : f32
      %404 = vector.broadcast %cst_191 : f32 to vector<8x64xf32>
      %405 = arith.mulf %404, %380 : vector<8x64xf32>
      %406 = arith.addf %405, %15 : vector<8x64xf32>
      %cst_192 = arith.constant 1.000000e+00 : f32
      %407 = vector.broadcast %cst_192 : f32 to vector<8x64xf32>
      %408 = arith.mulf %403, %407 : vector<8x64xf32>
      %409 = arith.subf %406, %408 : vector<8x64xf32>
      %c0_193 = arith.constant 0 : index
      %c0_194 = arith.constant 0 : index
      %410 = vector.load %arg4[%c0_193, %c0_194] : memref<64x32xf32, #tpu.memory_space<vmem>>, vector<64x32xf32>
      %cst_195 = arith.constant dense<0.000000e+00> : vector<8x32xf32>
      %411 = tpu.matmul %409, %410, %cst_195 {dimension_numbers = #tpu.dot_dimension_numbers<[1], [0], [0], [1], [0, 0, 1, 1], [], []>} : vector<8x64xf32>, vector<64x32xf32>, vector<8x32xf32> -> vector<8x32xf32>
      %c0_196 = arith.constant 0 : index
      %c0_197 = arith.constant 0 : index
      %412 = vector.load %arg5[%c0_196, %c0_197] : memref<1x32xf32, #tpu.memory_space<vmem>>, vector<1x32xf32>
      %413 = vector.broadcast %412 : vector<1x32xf32> to vector<8x32xf32>
      %414 = arith.addf %411, %413 : vector<8x32xf32>
      %cst_198 = arith.constant 1.000000e+00 : f32
      %415 = vector.broadcast %cst_198 : f32 to vector<8x32xf32>
      %416 = arith.subf %397, %415 : vector<8x32xf32>
      %cst_199 = arith.constant 0.000000e+00 : f32
      %417 = vector.broadcast %cst_199 : f32 to vector<8x32xf32>
      %418 = arith.cmpf ogt, %416, %417 : vector<8x32xf32>
      %419 = arith.extui %418 : vector<8x32xi1> to vector<8x32xi32>
      %420 = arith.sitofp %419 : vector<8x32xi32> to vector<8x32xf32>
      %cst_200 = arith.constant 0.899999976 : f32
      %421 = vector.broadcast %cst_200 : f32 to vector<8x32xf32>
      %422 = arith.mulf %421, %397 : vector<8x32xf32>
      %423 = arith.addf %422, %414 : vector<8x32xf32>
      %cst_201 = arith.constant 1.000000e+00 : f32
      %424 = vector.broadcast %cst_201 : f32 to vector<8x32xf32>
      %425 = arith.mulf %420, %424 : vector<8x32xf32>
      %426 = arith.subf %423, %425 : vector<8x32xf32>
      %c14_i32 = arith.constant 14 : i32
      %cst_202 = arith.constant 1.000000e+00 : f32
      %427 = vector.broadcast %cst_202 : f32 to vector<8x64xf32>
      %428 = arith.subf %409, %427 : vector<8x64xf32>
      %cst_203 = arith.constant 0.000000e+00 : f32
      %429 = vector.broadcast %cst_203 : f32 to vector<8x64xf32>
      %430 = arith.cmpf ogt, %428, %429 : vector<8x64xf32>
      %431 = arith.extui %430 : vector<8x64xi1> to vector<8x64xi32>
      %432 = arith.sitofp %431 : vector<8x64xi32> to vector<8x64xf32>
      %cst_204 = arith.constant 0.899999976 : f32
      %433 = vector.broadcast %cst_204 : f32 to vector<8x64xf32>
      %434 = arith.mulf %433, %409 : vector<8x64xf32>
      %435 = arith.addf %434, %15 : vector<8x64xf32>
      %cst_205 = arith.constant 1.000000e+00 : f32
      %436 = vector.broadcast %cst_205 : f32 to vector<8x64xf32>
      %437 = arith.mulf %432, %436 : vector<8x64xf32>
      %438 = arith.subf %435, %437 : vector<8x64xf32>
      %c0_206 = arith.constant 0 : index
      %c0_207 = arith.constant 0 : index
      %439 = vector.load %arg4[%c0_206, %c0_207] : memref<64x32xf32, #tpu.memory_space<vmem>>, vector<64x32xf32>
      %cst_208 = arith.constant dense<0.000000e+00> : vector<8x32xf32>
      %440 = tpu.matmul %438, %439, %cst_208 {dimension_numbers = #tpu.dot_dimension_numbers<[1], [0], [0], [1], [0, 0, 1, 1], [], []>} : vector<8x64xf32>, vector<64x32xf32>, vector<8x32xf32> -> vector<8x32xf32>
      %c0_209 = arith.constant 0 : index
      %c0_210 = arith.constant 0 : index
      %441 = vector.load %arg5[%c0_209, %c0_210] : memref<1x32xf32, #tpu.memory_space<vmem>>, vector<1x32xf32>
      %442 = vector.broadcast %441 : vector<1x32xf32> to vector<8x32xf32>
      %443 = arith.addf %440, %442 : vector<8x32xf32>
      %cst_211 = arith.constant 1.000000e+00 : f32
      %444 = vector.broadcast %cst_211 : f32 to vector<8x32xf32>
      %445 = arith.subf %426, %444 : vector<8x32xf32>
      %cst_212 = arith.constant 0.000000e+00 : f32
      %446 = vector.broadcast %cst_212 : f32 to vector<8x32xf32>
      %447 = arith.cmpf ogt, %445, %446 : vector<8x32xf32>
      %448 = arith.extui %447 : vector<8x32xi1> to vector<8x32xi32>
      %449 = arith.sitofp %448 : vector<8x32xi32> to vector<8x32xf32>
      %cst_213 = arith.constant 0.899999976 : f32
      %450 = vector.broadcast %cst_213 : f32 to vector<8x32xf32>
      %451 = arith.mulf %450, %426 : vector<8x32xf32>
      %452 = arith.addf %451, %443 : vector<8x32xf32>
      %cst_214 = arith.constant 1.000000e+00 : f32
      %453 = vector.broadcast %cst_214 : f32 to vector<8x32xf32>
      %454 = arith.mulf %449, %453 : vector<8x32xf32>
      %455 = arith.subf %452, %454 : vector<8x32xf32>
      %c15_i32 = arith.constant 15 : i32
      %cst_215 = arith.constant 1.000000e+00 : f32
      %456 = vector.broadcast %cst_215 : f32 to vector<8x64xf32>
      %457 = arith.subf %438, %456 : vector<8x64xf32>
      %cst_216 = arith.constant 0.000000e+00 : f32
      %458 = vector.broadcast %cst_216 : f32 to vector<8x64xf32>
      %459 = arith.cmpf ogt, %457, %458 : vector<8x64xf32>
      %460 = arith.extui %459 : vector<8x64xi1> to vector<8x64xi32>
      %461 = arith.sitofp %460 : vector<8x64xi32> to vector<8x64xf32>
      %cst_217 = arith.constant 0.899999976 : f32
      %462 = vector.broadcast %cst_217 : f32 to vector<8x64xf32>
      %463 = arith.mulf %462, %438 : vector<8x64xf32>
      %464 = arith.addf %463, %15 : vector<8x64xf32>
      %cst_218 = arith.constant 1.000000e+00 : f32
      %465 = vector.broadcast %cst_218 : f32 to vector<8x64xf32>
      %466 = arith.mulf %461, %465 : vector<8x64xf32>
      %467 = arith.subf %464, %466 : vector<8x64xf32>
      %c0_219 = arith.constant 0 : index
      %c0_220 = arith.constant 0 : index
      %468 = vector.load %arg4[%c0_219, %c0_220] : memref<64x32xf32, #tpu.memory_space<vmem>>, vector<64x32xf32>
      %cst_221 = arith.constant dense<0.000000e+00> : vector<8x32xf32>
      %469 = tpu.matmul %467, %468, %cst_221 {dimension_numbers = #tpu.dot_dimension_numbers<[1], [0], [0], [1], [0, 0, 1, 1], [], []>} : vector<8x64xf32>, vector<64x32xf32>, vector<8x32xf32> -> vector<8x32xf32>
      %c0_222 = arith.constant 0 : index
      %c0_223 = arith.constant 0 : index
      %470 = vector.load %arg5[%c0_222, %c0_223] : memref<1x32xf32, #tpu.memory_space<vmem>>, vector<1x32xf32>
      %471 = vector.broadcast %470 : vector<1x32xf32> to vector<8x32xf32>
      %472 = arith.addf %469, %471 : vector<8x32xf32>
      %cst_224 = arith.constant 1.000000e+00 : f32
      %473 = vector.broadcast %cst_224 : f32 to vector<8x32xf32>
      %474 = arith.subf %455, %473 : vector<8x32xf32>
      %cst_225 = arith.constant 0.000000e+00 : f32
      %475 = vector.broadcast %cst_225 : f32 to vector<8x32xf32>
      %476 = arith.cmpf ogt, %474, %475 : vector<8x32xf32>
      %477 = arith.extui %476 : vector<8x32xi1> to vector<8x32xi32>
      %478 = arith.sitofp %477 : vector<8x32xi32> to vector<8x32xf32>
      %cst_226 = arith.constant 0.899999976 : f32
      %479 = vector.broadcast %cst_226 : f32 to vector<8x32xf32>
      %480 = arith.mulf %479, %455 : vector<8x32xf32>
      %481 = arith.addf %480, %472 : vector<8x32xf32>
      %cst_227 = arith.constant 1.000000e+00 : f32
      %482 = vector.broadcast %cst_227 : f32 to vector<8x32xf32>
      %483 = arith.mulf %478, %482 : vector<8x32xf32>
      %484 = arith.subf %481, %483 : vector<8x32xf32>
      %c16_i32 = arith.constant 16 : i32
      %cst_228 = arith.constant 1.000000e+00 : f32
      %485 = vector.broadcast %cst_228 : f32 to vector<8x64xf32>
      %486 = arith.subf %467, %485 : vector<8x64xf32>
      %cst_229 = arith.constant 0.000000e+00 : f32
      %487 = vector.broadcast %cst_229 : f32 to vector<8x64xf32>
      %488 = arith.cmpf ogt, %486, %487 : vector<8x64xf32>
      %489 = arith.extui %488 : vector<8x64xi1> to vector<8x64xi32>
      %490 = arith.sitofp %489 : vector<8x64xi32> to vector<8x64xf32>
      %cst_230 = arith.constant 0.899999976 : f32
      %491 = vector.broadcast %cst_230 : f32 to vector<8x64xf32>
      %492 = arith.mulf %491, %467 : vector<8x64xf32>
      %493 = arith.addf %492, %15 : vector<8x64xf32>
      %cst_231 = arith.constant 1.000000e+00 : f32
      %494 = vector.broadcast %cst_231 : f32 to vector<8x64xf32>
      %495 = arith.mulf %490, %494 : vector<8x64xf32>
      %496 = arith.subf %493, %495 : vector<8x64xf32>
      %c0_232 = arith.constant 0 : index
      %c0_233 = arith.constant 0 : index
      %497 = vector.load %arg4[%c0_232, %c0_233] : memref<64x32xf32, #tpu.memory_space<vmem>>, vector<64x32xf32>
      %cst_234 = arith.constant dense<0.000000e+00> : vector<8x32xf32>
      %498 = tpu.matmul %496, %497, %cst_234 {dimension_numbers = #tpu.dot_dimension_numbers<[1], [0], [0], [1], [0, 0, 1, 1], [], []>} : vector<8x64xf32>, vector<64x32xf32>, vector<8x32xf32> -> vector<8x32xf32>
      %c0_235 = arith.constant 0 : index
      %c0_236 = arith.constant 0 : index
      %499 = vector.load %arg5[%c0_235, %c0_236] : memref<1x32xf32, #tpu.memory_space<vmem>>, vector<1x32xf32>
      %500 = vector.broadcast %499 : vector<1x32xf32> to vector<8x32xf32>
      %501 = arith.addf %498, %500 : vector<8x32xf32>
      %cst_237 = arith.constant 1.000000e+00 : f32
      %502 = vector.broadcast %cst_237 : f32 to vector<8x32xf32>
      %503 = arith.subf %484, %502 : vector<8x32xf32>
      %cst_238 = arith.constant 0.000000e+00 : f32
      %504 = vector.broadcast %cst_238 : f32 to vector<8x32xf32>
      %505 = arith.cmpf ogt, %503, %504 : vector<8x32xf32>
      %506 = arith.extui %505 : vector<8x32xi1> to vector<8x32xi32>
      %507 = arith.sitofp %506 : vector<8x32xi32> to vector<8x32xf32>
      %cst_239 = arith.constant 0.899999976 : f32
      %508 = vector.broadcast %cst_239 : f32 to vector<8x32xf32>
      %509 = arith.mulf %508, %484 : vector<8x32xf32>
      %510 = arith.addf %509, %501 : vector<8x32xf32>
      %cst_240 = arith.constant 1.000000e+00 : f32
      %511 = vector.broadcast %cst_240 : f32 to vector<8x32xf32>
      %512 = arith.mulf %507, %511 : vector<8x32xf32>
      %513 = arith.subf %510, %512 : vector<8x32xf32>
      %c17_i32 = arith.constant 17 : i32
      %cst_241 = arith.constant 1.000000e+00 : f32
      %514 = vector.broadcast %cst_241 : f32 to vector<8x64xf32>
      %515 = arith.subf %496, %514 : vector<8x64xf32>
      %cst_242 = arith.constant 0.000000e+00 : f32
      %516 = vector.broadcast %cst_242 : f32 to vector<8x64xf32>
      %517 = arith.cmpf ogt, %515, %516 : vector<8x64xf32>
      %518 = arith.extui %517 : vector<8x64xi1> to vector<8x64xi32>
      %519 = arith.sitofp %518 : vector<8x64xi32> to vector<8x64xf32>
      %cst_243 = arith.constant 0.899999976 : f32
      %520 = vector.broadcast %cst_243 : f32 to vector<8x64xf32>
      %521 = arith.mulf %520, %496 : vector<8x64xf32>
      %522 = arith.addf %521, %15 : vector<8x64xf32>
      %cst_244 = arith.constant 1.000000e+00 : f32
      %523 = vector.broadcast %cst_244 : f32 to vector<8x64xf32>
      %524 = arith.mulf %519, %523 : vector<8x64xf32>
      %525 = arith.subf %522, %524 : vector<8x64xf32>
      %c0_245 = arith.constant 0 : index
      %c0_246 = arith.constant 0 : index
      %526 = vector.load %arg4[%c0_245, %c0_246] : memref<64x32xf32, #tpu.memory_space<vmem>>, vector<64x32xf32>
      %cst_247 = arith.constant dense<0.000000e+00> : vector<8x32xf32>
      %527 = tpu.matmul %525, %526, %cst_247 {dimension_numbers = #tpu.dot_dimension_numbers<[1], [0], [0], [1], [0, 0, 1, 1], [], []>} : vector<8x64xf32>, vector<64x32xf32>, vector<8x32xf32> -> vector<8x32xf32>
      %c0_248 = arith.constant 0 : index
      %c0_249 = arith.constant 0 : index
      %528 = vector.load %arg5[%c0_248, %c0_249] : memref<1x32xf32, #tpu.memory_space<vmem>>, vector<1x32xf32>
      %529 = vector.broadcast %528 : vector<1x32xf32> to vector<8x32xf32>
      %530 = arith.addf %527, %529 : vector<8x32xf32>
      %cst_250 = arith.constant 1.000000e+00 : f32
      %531 = vector.broadcast %cst_250 : f32 to vector<8x32xf32>
      %532 = arith.subf %513, %531 : vector<8x32xf32>
      %cst_251 = arith.constant 0.000000e+00 : f32
      %533 = vector.broadcast %cst_251 : f32 to vector<8x32xf32>
      %534 = arith.cmpf ogt, %532, %533 : vector<8x32xf32>
      %535 = arith.extui %534 : vector<8x32xi1> to vector<8x32xi32>
      %536 = arith.sitofp %535 : vector<8x32xi32> to vector<8x32xf32>
      %cst_252 = arith.constant 0.899999976 : f32
      %537 = vector.broadcast %cst_252 : f32 to vector<8x32xf32>
      %538 = arith.mulf %537, %513 : vector<8x32xf32>
      %539 = arith.addf %538, %530 : vector<8x32xf32>
      %cst_253 = arith.constant 1.000000e+00 : f32
      %540 = vector.broadcast %cst_253 : f32 to vector<8x32xf32>
      %541 = arith.mulf %536, %540 : vector<8x32xf32>
      %542 = arith.subf %539, %541 : vector<8x32xf32>
      %c18_i32 = arith.constant 18 : i32
      %cst_254 = arith.constant 1.000000e+00 : f32
      %543 = vector.broadcast %cst_254 : f32 to vector<8x64xf32>
      %544 = arith.subf %525, %543 : vector<8x64xf32>
      %cst_255 = arith.constant 0.000000e+00 : f32
      %545 = vector.broadcast %cst_255 : f32 to vector<8x64xf32>
      %546 = arith.cmpf ogt, %544, %545 : vector<8x64xf32>
      %547 = arith.extui %546 : vector<8x64xi1> to vector<8x64xi32>
      %548 = arith.sitofp %547 : vector<8x64xi32> to vector<8x64xf32>
      %cst_256 = arith.constant 0.899999976 : f32
      %549 = vector.broadcast %cst_256 : f32 to vector<8x64xf32>
      %550 = arith.mulf %549, %525 : vector<8x64xf32>
      %551 = arith.addf %550, %15 : vector<8x64xf32>
      %cst_257 = arith.constant 1.000000e+00 : f32
      %552 = vector.broadcast %cst_257 : f32 to vector<8x64xf32>
      %553 = arith.mulf %548, %552 : vector<8x64xf32>
      %554 = arith.subf %551, %553 : vector<8x64xf32>
      %c0_258 = arith.constant 0 : index
      %c0_259 = arith.constant 0 : index
      %555 = vector.load %arg4[%c0_258, %c0_259] : memref<64x32xf32, #tpu.memory_space<vmem>>, vector<64x32xf32>
      %cst_260 = arith.constant dense<0.000000e+00> : vector<8x32xf32>
      %556 = tpu.matmul %554, %555, %cst_260 {dimension_numbers = #tpu.dot_dimension_numbers<[1], [0], [0], [1], [0, 0, 1, 1], [], []>} : vector<8x64xf32>, vector<64x32xf32>, vector<8x32xf32> -> vector<8x32xf32>
      %c0_261 = arith.constant 0 : index
      %c0_262 = arith.constant 0 : index
      %557 = vector.load %arg5[%c0_261, %c0_262] : memref<1x32xf32, #tpu.memory_space<vmem>>, vector<1x32xf32>
      %558 = vector.broadcast %557 : vector<1x32xf32> to vector<8x32xf32>
      %559 = arith.addf %556, %558 : vector<8x32xf32>
      %cst_263 = arith.constant 1.000000e+00 : f32
      %560 = vector.broadcast %cst_263 : f32 to vector<8x32xf32>
      %561 = arith.subf %542, %560 : vector<8x32xf32>
      %cst_264 = arith.constant 0.000000e+00 : f32
      %562 = vector.broadcast %cst_264 : f32 to vector<8x32xf32>
      %563 = arith.cmpf ogt, %561, %562 : vector<8x32xf32>
      %564 = arith.extui %563 : vector<8x32xi1> to vector<8x32xi32>
      %565 = arith.sitofp %564 : vector<8x32xi32> to vector<8x32xf32>
      %cst_265 = arith.constant 0.899999976 : f32
      %566 = vector.broadcast %cst_265 : f32 to vector<8x32xf32>
      %567 = arith.mulf %566, %542 : vector<8x32xf32>
      %568 = arith.addf %567, %559 : vector<8x32xf32>
      %cst_266 = arith.constant 1.000000e+00 : f32
      %569 = vector.broadcast %cst_266 : f32 to vector<8x32xf32>
      %570 = arith.mulf %565, %569 : vector<8x32xf32>
      %571 = arith.subf %568, %570 : vector<8x32xf32>
      %c0_267 = arith.constant 0 : index
      %c0_268 = arith.constant 0 : index
      %572 = vector.load %arg6[%c0_267, %c0_268] : memref<32x2xf32, #tpu.memory_space<vmem>>, vector<32x2xf32>
      %cst_269 = arith.constant dense<0.000000e+00> : vector<8x2xf32>
      %573 = tpu.matmul %571, %572, %cst_269 {dimension_numbers = #tpu.dot_dimension_numbers<[1], [0], [0], [1], [0, 0, 1, 1], [], []>} : vector<8x32xf32>, vector<32x2xf32>, vector<8x2xf32> -> vector<8x2xf32>
      %c0_270 = arith.constant 0 : index
      %c0_271 = arith.constant 0 : index
      %574 = vector.load %arg7[%c0_270, %c0_271] : memref<1x2xf32, #tpu.memory_space<vmem>>, vector<1x2xf32>
      %575 = vector.broadcast %574 : vector<1x2xf32> to vector<8x2xf32>
      %576 = arith.addf %573, %575 : vector<8x2xf32>
      %c0_272 = arith.constant 0 : index
      %c0_273 = arith.constant 0 : index
      %577 = vector.load %arg8[%c0_272, %c0_273] : memref<8x2xf32, #tpu.memory_space<vmem>>, vector<8x2xf32>
      tpu.vector_store %arg8[%c0_272, %c0_273], %576 {strides = array<i32>} : memref<8x2xf32, #tpu.memory_space<vmem>>, vector<8x2xf32>,
    } else {
    }
    return
  }
  func.func @transform_0(%arg0: i32) -> (i32, i32) {
    %c0_i32 = arith.constant 0 : i32
    %c0_i32_0 = arith.constant 0 : i32
    return %c0_i32, %arg0 : i32, i32
  }
  func.func @transform_1(%arg0: i32) -> (i32, i32) {
    %c0_i32 = arith.constant 0 : i32
    %c0_i32_0 = arith.constant 0 : i32
    return %arg0, %c0_i32 : i32, i32
  }
  func.func @transform_2(%arg0: i32) -> (i32, i32) {
    %c0_i32 = arith.constant 0 : i32
    %c0_i32_0 = arith.constant 0 : i32
    %c0_i32_1 = arith.constant 0 : i32
    return %c0_i32, %c0_i32_0 : i32, i32
  }
  func.func @transform_3(%arg0: i32) -> (i32, i32) {
    %c0_i32 = arith.constant 0 : i32
    %c0_i32_0 = arith.constant 0 : i32
    %c0_i32_1 = arith.constant 0 : i32
    return %c0_i32, %c0_i32_0 : i32, i32
  }
  func.func @transform_4(%arg0: i32) -> (i32, i32) {
    %c0_i32 = arith.constant 0 : i32
    %c0_i32_0 = arith.constant 0 : i32
    %c0_i32_1 = arith.constant 0 : i32
    return %c0_i32, %c0_i32_0 : i32, i32
  }
  func.func @transform_5(%arg0: i32) -> (i32, i32) {
    %c0_i32 = arith.constant 0 : i32
    %c0_i32_0 = arith.constant 0 : i32
    %c0_i32_1 = arith.constant 0 : i32
    return %c0_i32, %c0_i32_0 : i32, i32
  }
  func.func @transform_6(%arg0: i32) -> (i32, i32) {
    %c0_i32 = arith.constant 0 : i32
    %c0_i32_0 = arith.constant 0 : i32
    %c0_i32_1 = arith.constant 0 : i32
    return %c0_i32, %c0_i32_0 : i32, i32
  }
  func.func @transform_7(%arg0: i32) -> (i32, i32) {
    %c0_i32 = arith.constant 0 : i32
    %c0_i32_0 = arith.constant 0 : i32
    %c0_i32_1 = arith.constant 0 : i32
    return %c0_i32, %c0_i32_0 : i32, i32
  }
}

</mosaic_0001>

<llo_original>
// kernel: deep_snn_forward.1
$region0: #{deep_snn_forward.1}
  #allocation0 [shape = 'u32[]', space=smem, size = 0x4, offset = 0x4, fixed_abs, tag = 'smem constant byte address 0x4 - core index']
  #allocation1 [shape = 'u32[144,128]{1,0:T(1,128)}', space=vmem, size = 0x12000, scoped, tag = 'internal scratch']
  #allocation2 [shape = 'f32[8,64]{1,0:T(8,128)}', space=vmem, size = 0x1000, scoped, tag = 'scratch operand']
  %s0 = inlined_call_operand.vmem [shape: bf16[8,1792], index: 0, kind: input, shape index: {}]
  %s1 = inlined_call_operand.vmem [shape: bf16[1792,64], index: 1, kind: input, shape index: {}]
  %s2 = inlined_call_operand.vmem [shape: f32[1,64], index: 2, kind: input, shape index: {}]
  %s3 = inlined_call_operand.vmem [shape: f32[64,32], index: 3, kind: input, shape index: {}]
  %s4 = inlined_call_operand.vmem [shape: f32[1,32], index: 4, kind: input, shape index: {}]
  %s5 = inlined_call_operand.vmem [shape: f32[32,2], index: 5, kind: input, shape index: {}]
  %s6 = inlined_call_operand.vmem [shape: f32[1,2], index: 6, kind: input, shape index: {}]
  %s7 = inlined_call_operand.vmem [shape: f32[8,2], index: 7, kind: output, shape index: {}]
  %s8 = sld [smem:[#allocation0]]
  $region69: #{deep_snn_forward.1} parent=0
    _
  %s10 = ssub.s32 1, %s8
  %s11 = scalar_select 0, %s10, %s8
  loop: start=0, step=1, limit=4
  $region2: #{deep_snn_forward.1} parent=0 // loop_pre_header
    _
  $region3: #{deep_snn_forward.1} parent=0 // loop_header
    %s13 = sphi 0, %s17
    %p14 = scmp.ge.s32.totalorder %s13, 4
    %s23 = sphi 0, %s25
    %s26 = sphi 0, %s23
    %s27 = sphi 0, %s26
    %s43 = sphi 0, %s27
    %s49 = sphi 0, %s51
    %s52 = sphi 0, %s49
    %s53 = sphi 0, %s52
    %s69 = sphi 0, %s53
    %s73 = sphi 0, %s73
    %s75 = sphi 0, %s73
    %s76 = sphi 0, %s75
    %s90 = sphi 0, %s76
    %s94 = sphi 0, %s94
    %s96 = sphi 0, %s94
    %s97 = sphi 0, %s96
    %s111 = sphi 0, %s97
    %s115 = sphi 0, %s115
    %s117 = sphi 0, %s115
    %s118 = sphi 0, %s117
    %s132 = sphi 0, %s118
    %s136 = sphi 0, %s136
    %s138 = sphi 0, %s136
    %s139 = sphi 0, %s138
    %s153 = sphi 0, %s139
    %s157 = sphi 0, %s157
    %s159 = sphi 0, %s157
    %s160 = sphi 0, %s159
    %s174 = sphi 0, %s160
    %s178 = sphi 0, %s178
    %s180 = sphi 0, %s178
    %s181 = sphi 0, %s180
    %s195 = sphi 0, %s181
  $region4: #{deep_snn_forward.1} parent=0 // loop_header_branch
    %16 = sbr.rel (%p14) target = $region8
  $region5: #{deep_snn_forward.1} parent=0 // loop_body
    %s18 = ssub.s32 %s13, 1
    %s19 = ssub.s32 %s13, 2
    %s20 = sadd.s32 %s13, 1
    %s21 = ssub.s32 %s13, %s20
    %p22 = scmp.eq.s32.totalorder %s21, 0
    %s24 = sadd.s32 %s23, 1
    %s25 = scalar_select %p22, %s23, %s24
    %p28 = pneg %p22
    %p29 = scmp.eq.s32.totalorder %s13, 1
    %p30 = por %p28, %p29
    %p31 = scmp.ne.s32.totalorder %s23, %s26
    %p32 = scmp.eq.s32.totalorder %s13, 0
    %p33 = por %p31, %p32
    %p34 = scmp.ne.s32.totalorder %s23, %s26
    %p35 = scmp.eq.s32.totalorder %s18, 1
    %p36 = por %p34, %p35
    %p37 = scmp.ne.s32.totalorder %s26, %s27
    %p38 = scmp.eq.s32.totalorder %s18, 0
    %p39 = por %p37, %p38
    %p40 = scmp.ne.s32.totalorder %s26, %s27
    %p41 = scmp.eq.s32.totalorder %s19, 1
    %p42 = por %p40, %p41
    %p44 = scmp.ne.s32.totalorder %s27, %s43
    %p45 = scmp.eq.s32.totalorder %s19, 0
    %p46 = por %p44, %p45
    %s47 = ssub.s32 %s13, %s20
    %p48 = scmp.eq.s32.totalorder %s47, 0
    %s50 = sadd.s32 %s49, 1
    %s51 = scalar_select %p48, %s49, %s50
    %p54 = pneg %p48
    %p55 = scmp.eq.s32.totalorder %s13, 1
    %p56 = por %p54, %p55
    %p57 = scmp.ne.s32.totalorder %s49, %s52
    %p58 = scmp.eq.s32.totalorder %s13, 0
    %p59 = por %p57, %p58
    %p60 = scmp.ne.s32.totalorder %s49, %s52
    %p61 = scmp.eq.s32.totalorder %s18, 1
    %p62 = por %p60, %p61
    %p63 = scmp.ne.s32.totalorder %s52, %s53
    %p64 = scmp.eq.s32.totalorder %s18, 0
    %p65 = por %p63, %p64
    %p66 = scmp.ne.s32.totalorder %s52, %s53
    %p67 = scmp.eq.s32.totalorder %s19, 1
    %p68 = por %p66, %p67
    %p70 = scmp.ne.s32.totalorder %s53, %s69
    %p71 = scmp.eq.s32.totalorder %s19, 0
    %p72 = por %p70, %p71
    %s74 = sadd.s32 %s73, 1
    %p77 = scmp.eq.s32.totalorder %s13, 1
    %p78 = scmp.ne.s32.totalorder %s73, %s75
    %p79 = scmp.eq.s32.totalorder %s13, 0
    %p80 = por %p78, %p79
    %p81 = scmp.ne.s32.totalorder %s73, %s75
    %p82 = scmp.eq.s32.totalorder %s18, 1
    %p83 = por %p81, %p82
    %p84 = scmp.ne.s32.totalorder %s75, %s76
    %p85 = scmp.eq.s32.totalorder %s18, 0
    %p86 = por %p84, %p85
    %p87 = scmp.ne.s32.totalorder %s75, %s76
    %p88 = scmp.eq.s32.totalorder %s19, 1
    %p89 = por %p87, %p88
    %p91 = scmp.ne.s32.totalorder %s76, %s90
    %p92 = scmp.eq.s32.totalorder %s19, 0
    %p93 = por %p91, %p92
    %s95 = sadd.s32 %s94, 1
    %p98 = scmp.eq.s32.totalorder %s13, 1
    %p99 = scmp.ne.s32.totalorder %s94, %s96
    %p100 = scmp.eq.s32.totalorder %s13, 0
    %p101 = por %p99, %p100
    %p102 = scmp.ne.s32.totalorder %s94, %s96
    %p103 = scmp.eq.s32.totalorder %s18, 1
    %p104 = por %p102, %p103
    %p105 = scmp.ne.s32.totalorder %s96, %s97
    %p106 = scmp.eq.s32.totalorder %s18, 0
    %p107 = por %p105, %p106
    %p108 = scmp.ne.s32.totalorder %s96, %s97
    %p109 = scmp.eq.s32.totalorder %s19, 1
    %p110 = por %p108, %p109
    %p112 = scmp.ne.s32.totalorder %s97, %s111
    %p113 = scmp.eq.s32.totalorder %s19, 0
    %p114 = por %p112, %p113
    %s116 = sadd.s32 %s115, 1
    %p119 = scmp.eq.s32.totalorder %s13, 1
    %p120 = scmp.ne.s32.totalorder %s115, %s117
    %p121 = scmp.eq.s32.totalorder %s13, 0
    %p122 = por %p120, %p121
    %p123 = scmp.ne.s32.totalorder %s115, %s117
    %p124 = scmp.eq.s32.totalorder %s18, 1
    %p125 = por %p123, %p124
    %p126 = scmp.ne.s32.totalorder %s117, %s118
    %p127 = scmp.eq.s32.totalorder %s18, 0
    %p128 = por %p126, %p127
    %p129 = scmp.ne.s32.totalorder %s117, %s118
    %p130 = scmp.eq.s32.totalorder %s19, 1
    %p131 = por %p129, %p130
    %p133 = scmp.ne.s32.totalorder %s118, %s132
    %p134 = scmp.eq.s32.totalorder %s19, 0
    %p135 = por %p133, %p134
    %s137 = sadd.s32 %s136, 1
    %p140 = scmp.eq.s32.totalorder %s13, 1
    %p141 = scmp.ne.s32.totalorder %s136, %s138
    %p142 = scmp.eq.s32.totalorder %s13, 0
    %p143 = por %p141, %p142
    %p144 = scmp.ne.s32.totalorder %s136, %s138
    %p145 = scmp.eq.s32.totalorder %s18, 1
    %p146 = por %p144, %p145
    %p147 = scmp.ne.s32.totalorder %s138, %s139
    %p148 = scmp.eq.s32.totalorder %s18, 0
    %p149 = por %p147, %p148
    %p150 = scmp.ne.s32.totalorder %s138, %s139
    %p151 = scmp.eq.s32.totalorder %s19, 1
    %p152 = por %p150, %p151
    %p154 = scmp.ne.s32.totalorder %s139, %s153
    %p155 = scmp.eq.s32.totalorder %s19, 0
    %p156 = por %p154, %p155
    %s158 = sadd.s32 %s157, 1
    %p161 = scmp.eq.s32.totalorder %s13, 1
    %p162 = scmp.ne.s32.totalorder %s157, %s159
    %p163 = scmp.eq.s32.totalorder %s13, 0
    %p164 = por %p162, %p163
    %p165 = scmp.ne.s32.totalorder %s157, %s159
    %p166 = scmp.eq.s32.totalorder %s18, 1
    %p167 = por %p165, %p166
    %p168 = scmp.ne.s32.totalorder %s159, %s160
    %p169 = scmp.eq.s32.totalorder %s18, 0
    %p170 = por %p168, %p169
    %p171 = scmp.ne.s32.totalorder %s159, %s160
    %p172 = scmp.eq.s32.totalorder %s19, 1
    %p173 = por %p171, %p172
    %p175 = scmp.ne.s32.totalorder %s160, %s174
    %p176 = scmp.eq.s32.totalorder %s19, 0
    %p177 = por %p175, %p176
    %s179 = sadd.s32 %s178, 1
    %p182 = scmp.eq.s32.totalorder %s13, 1
    %p183 = scmp.ne.s32.totalorder %s178, %s180
    %p184 = scmp.eq.s32.totalorder %s13, 0
    %p185 = por %p183, %p184
    %p186 = scmp.ne.s32.totalorder %s178, %s180
    %p187 = scmp.eq.s32.totalorder %s18, 1
    %p188 = por %p186, %p187
    %p189 = scmp.ne.s32.totalorder %s180, %s181
    %p190 = scmp.eq.s32.totalorder %s18, 0
    %p191 = por %p189, %p190
    %p192 = scmp.ne.s32.totalorder %s180, %s181
    %p193 = scmp.eq.s32.totalorder %s19, 1
    %p194 = por %p192, %p193
    %p196 = scmp.ne.s32.totalorder %s181, %s195
    %p197 = scmp.eq.s32.totalorder %s19, 0
    %p198 = por %p196, %p197
    %p199 = scmp.le.s32.totalorder 1, %s13
    %p200 = scmp.lt.s32.totalorder %s13, 3
    %p201 = pnand %p199, %p200
    %p202 = pneg %p201
    // Predicated region
    $region9: #{deep_snn_forward.1} parent=5 // pred_check
      _
    $region10: #{deep_snn_forward.1} parent=5 // pred_check_branch
      %204 = sbr.rel (%p201) target = $region12
    $region11: #{deep_snn_forward.1} parent=5 // pred_region
      %s205 = ssub.s32 %s13, 1
      // Predicated region
      $region13: #{deep_snn_forward.1} parent=11 // pred_check
        %p206 = pneg %p86
      $region14: #{deep_snn_forward.1} parent=11 // pred_check_branch
        %208 = sbr.rel (%p206) target = $region16
      $region15: #{deep_snn_forward.1} parent=11 // pred_region
        _
      $region16: #{deep_snn_forward.1} parent=11 // pred_fallthru
        _
      // Predicated region
      $region17: #{deep_snn_forward.1} parent=11 // pred_check
        %p209 = pneg %p107
      $region18: #{deep_snn_forward.1} parent=11 // pred_check_branch
        %211 = sbr.rel (%p209) target = $region20
      $region19: #{deep_snn_forward.1} parent=11 // pred_region
        _
      $region20: #{deep_snn_forward.1} parent=11 // pred_fallthru
        _
      // Predicated region
      $region21: #{deep_snn_forward.1} parent=11 // pred_check
        %p212 = pneg %p128
      $region22: #{deep_snn_forward.1} parent=11 // pred_check_branch
        %214 = sbr.rel (%p212) target = $region24
      $region23: #{deep_snn_forward.1} parent=11 // pred_region
        _
      $region24: #{deep_snn_forward.1} parent=11 // pred_fallthru
        _
      // Predicated region
      $region25: #{deep_snn_forward.1} parent=11 // pred_check
        %p215 = pneg %p149
      $region26: #{deep_snn_forward.1} parent=11 // pred_check_branch
        %217 = sbr.rel (%p215) target = $region28
      $region27: #{deep_snn_forward.1} parent=11 // pred_region
        _
      $region28: #{deep_snn_forward.1} parent=11 // pred_fallthru
        _
      // Predicated region
      $region29: #{deep_snn_forward.1} parent=11 // pred_check
        %p218 = pneg %p170
      $region30: #{deep_snn_forward.1} parent=11 // pred_check_branch
        %220 = sbr.rel (%p218) target = $region32
      $region31: #{deep_snn_forward.1} parent=11 // pred_region
        _
      $region32: #{deep_snn_forward.1} parent=11 // pred_fallthru
        _
    $region12: #{deep_snn_forward.1} parent=5 // pred_fallthru
      _
    %p221 = scmp.lt.s32.totalorder %s13, 2
    // Predicated region
    $region33: #{deep_snn_forward.1} parent=5 // pred_check
      %p222 = pneg %p221
    $region34: #{deep_snn_forward.1} parent=5 // pred_check_branch
      %224 = sbr.rel (%p222) target = $region36
    $region35: #{deep_snn_forward.1} parent=5 // pred_region
      // Predicated region
      $region37: #{deep_snn_forward.1} parent=35 // pred_check
        %p225 = pneg %p33
      $region38: #{deep_snn_forward.1} parent=35 // pred_check_branch
        %227 = sbr.rel (%p225) target = $region40
      $region39: #{deep_snn_forward.1} parent=35 // pred_region
        %s228 = smul.u32 7, %s13
        %p229 = scmp.lt.s32.totalorder %s228, 13
        %s230 = scalar_select %p229, %s228, 13
        %s231 = smul.addr %s230, 4
        %s232 = scalar_lea.vmem %s0, %s231
        %s233 = smul.u32 7, %s13
      $region40: #{deep_snn_forward.1} parent=35 // pred_fallthru
        _
      // Predicated region
      $region41: #{deep_snn_forward.1} parent=35 // pred_check
        %p234 = pneg %p59
      $region42: #{deep_snn_forward.1} parent=35 // pred_check_branch
        %236 = sbr.rel (%p234) target = $region44
      $region43: #{deep_snn_forward.1} parent=35 // pred_region
        %s237 = smul.u32 112, %s13
        %p238 = scmp.lt.s32.totalorder %s237, 223
        %s239 = scalar_select %p238, %s237, 223
        %s240 = smul.addr %s239, 4
        %s241 = scalar_lea.vmem %s1, %s240
        %s242 = smul.u32 112, %s13
      $region44: #{deep_snn_forward.1} parent=35 // pred_fallthru
        _
    $region36: #{deep_snn_forward.1} parent=5 // pred_fallthru
      _
    %p243 = scmp.le.s32.totalorder 1, %s13
    %p244 = scmp.lt.s32.totalorder %s13, 3
    %p245 = pnand %p243, %p244
    %p246 = pneg %p245
    // Predicated region
    $region45: #{deep_snn_forward.1} parent=5 // pred_check
      _
    $region46: #{deep_snn_forward.1} parent=5 // pred_check_branch
      %248 = sbr.rel (%p245) target = $region48
    $region47: #{deep_snn_forward.1} parent=5 // pred_region
      %s249 = ssub.s32 %s13, 1
      %s250 = smul.u32 7, %s18
      %p251 = scmp.lt.s32.totalorder %s250, 13
      %s252 = scalar_select %p251, %s250, 13
      %s253 = smul.addr %s252, 4
      %s254 = scalar_lea.vmem %s0, %s253
      %p255 = pneg %p39
      %p256 = pneg %p36
      %s257 = smul.u32 112, %s18
      %p258 = scmp.lt.s32.totalorder %s257, 223
      %s259 = scalar_select %p258, %s257, 223
      %s260 = smul.addr %s259, 4
      %s261 = scalar_lea.vmem %s1, %s260
      %p262 = pneg %p65
      %p263 = pneg %p62
      %p264 = pneg %p86
      %p265 = pneg %p83
      %p266 = pneg %p107
      %p267 = pneg %p104
      %p268 = pneg %p128
      %p269 = pneg %p125
      %p270 = pneg %p149
      %p271 = pneg %p146
      %p272 = pneg %p170
      %p273 = pneg %p167
      %p274 = pneg %p191
      %p275 = pneg %p188
      %s276 = smul.u32 7, %s18
      %p277 = scmp.lt.s32.totalorder %s276, 13
      %s278 = scalar_select %p277, %s276, 13
      %s279 = smul.addr %s278, 4
      %s280 = scalar_lea.vmem %s0, %s279
      %s281 = smul.u32 7, %s18
      %s282 = smul.u32 112, %s18
      %p283 = scmp.lt.s32.totalorder %s282, 223
      %s284 = scalar_select %p283, %s282, 223
      %s285 = smul.addr %s284, 4
      %s286 = scalar_lea.vmem %s1, %s285
      %s287 = smul.u32 112, %s18
      %p289 = scmp.eq.s32.totalorder %s18, 0
      // Predicated region
      $region49: #{deep_snn_forward.1} parent=47 // pred_check
        %p290 = pneg %p289
      $region50: #{deep_snn_forward.1} parent=47 // pred_check_branch
        %292 = sbr.rel (%p290) target = $region52
      $region51: #{deep_snn_forward.1} parent=47 // pred_region
        %vm293 = vcmask 523264
        %294 = vst.msk [vmem:[#allocation2] sm:$0xff] %vm293, 0.0
      $region52: #{deep_snn_forward.1} parent=47 // pred_fallthru
        _
      %v295 = vld [vmem:[#allocation2] sm:$0xff]
      %v296 = vld [vmem:[%s280] sm:$0xff]
      %v297 = vld [vmem:[%s280 + $0x8] sm:$0xff]
      %v298 = vld [vmem:[%s280 + $0x10] sm:$0xff]
      %v299 = vld [vmem:[%s280 + $0x18] sm:$0xf]
      %v300 = vld [vmem:[%s286] sm:$0xf]
      %v301 = vld [vmem:[%s286 + $0x4] sm:$0xf]
      %v302 = vld [vmem:[%s286 + $0x8] sm:$0xf]
      %v303 = vld [vmem:[%s286 + $0xc] sm:$0xf]
      %v304 = vld [vmem:[%s286 + $0x10] sm:$0xf]
      %v305 = vld [vmem:[%s286 + $0x14] sm:$0xf]
      %v306 = vld [vmem:[%s286 + $0x18] sm:$0xf]
      %v307 = vld [vmem:[%s286 + $0x1c] sm:$0xf]
      %v308 = vld [vmem:[%s286 + $0x20] sm:$0xf]
      %v309 = vld [vmem:[%s286 + $0x24] sm:$0xf]
      %v310 = vld [vmem:[%s286 + $0x28] sm:$0xf]
      %v311 = vld [vmem:[%s286 + $0x2c] sm:$0xf]
      %v312 = vld [vmem:[%s286 + $0x30] sm:$0xf]
      %v313 = vld [vmem:[%s286 + $0x34] sm:$0xf]
      %v314 = vld [vmem:[%s286 + $0x38] sm:$0xf]
      %v315 = vld [vmem:[%s286 + $0x3c] sm:$0xf]
      %v316 = vld [vmem:[%s286 + $0x40] sm:$0xf]
      %v317 = vld [vmem:[%s286 + $0x44] sm:$0xf]
      %v318 = vld [vmem:[%s286 + $0x48] sm:$0xf]
      %v319 = vld [vmem:[%s286 + $0x4c] sm:$0xf]
      %v320 = vld [vmem:[%s286 + $0x50] sm:$0xf]
      %v321 = vld [vmem:[%s286 + $0x54] sm:$0xf]
      %v322 = vld [vmem:[%s286 + $0x58] sm:$0xf]
      %v323 = vld [vmem:[%s286 + $0x5c] sm:$0xf]
      %v324 = vld [vmem:[%s286 + $0x60] sm:$0xf]
      %v325 = vld [vmem:[%s286 + $0x64] sm:$0xf]
      %v326 = vld [vmem:[%s286 + $0x68] sm:$0xf]
      %v327 = vld [vmem:[%s286 + $0x6c] sm:$0xf]
      %v328 = vld [vmem:[%s286 + $0x70] sm:$0xf]
      %v329 = vld [vmem:[%s286 + $0x74] sm:$0xf]
      %v330 = vld [vmem:[%s286 + $0x78] sm:$0xf]
      %v331 = vld [vmem:[%s286 + $0x7c] sm:$0xf]
      %v332 = vld [vmem:[%s286 + $0x80] sm:$0xf]
      %v333 = vld [vmem:[%s286 + $0x84] sm:$0xf]
      %v334 = vld [vmem:[%s286 + $0x88] sm:$0xf]
      %v335 = vld [vmem:[%s286 + $0x8c] sm:$0xf]
      %v336 = vld [vmem:[%s286 + $0x90] sm:$0xf]
      %v337 = vld [vmem:[%s286 + $0x94] sm:$0xf]
      %v338 = vld [vmem:[%s286 + $0x98] sm:$0xf]
      %v339 = vld [vmem:[%s286 + $0x9c] sm:$0xf]
      %v340 = vld [vmem:[%s286 + $0xa0] sm:$0xf]
      %v341 = vld [vmem:[%s286 + $0xa4] sm:$0xf]
      %v342 = vld [vmem:[%s286 + $0xa8] sm:$0xf]
      %v343 = vld [vmem:[%s286 + $0xac] sm:$0xf]
      %v344 = vld [vmem:[%s286 + $0xb0] sm:$0xf]
      %v345 = vld [vmem:[%s286 + $0xb4] sm:$0xf]
      %v346 = vld [vmem:[%s286 + $0xb8] sm:$0xf]
      %v347 = vld [vmem:[%s286 + $0xbc] sm:$0xf]
      %v348 = vld [vmem:[%s286 + $0xc0] sm:$0xf]
      %v349 = vld [vmem:[%s286 + $0xc4] sm:$0xf]
      %v350 = vld [vmem:[%s286 + $0xc8] sm:$0xf]
      %v351 = vld [vmem:[%s286 + $0xcc] sm:$0xf]
      %v352 = vld [vmem:[%s286 + $0xd0] sm:$0xf]
      %v353 = vld [vmem:[%s286 + $0xd4] sm:$0xf]
      %v354 = vld [vmem:[%s286 + $0xd8] sm:$0xf]
      %v355 = vld [vmem:[%s286 + $0xdc] sm:$0xf]
      %v356 = vld [vmem:[%s286 + $0xe0] sm:$0xf]
      %v357 = vld [vmem:[%s286 + $0xe4] sm:$0xf]
      %v358 = vld [vmem:[%s286 + $0xe8] sm:$0xf]
      %v359 = vld [vmem:[%s286 + $0xec] sm:$0xf]
      %v360 = vld [vmem:[%s286 + $0xf0] sm:$0xf]
      %v361 = vld [vmem:[%s286 + $0xf4] sm:$0xf]
      %v362 = vld [vmem:[%s286 + $0xf8] sm:$0xf]
      %v363 = vld [vmem:[%s286 + $0xfc] sm:$0xf]
      %v364 = vld [vmem:[%s286 + $0x100] sm:$0xf]
      %v365 = vld [vmem:[%s286 + $0x104] sm:$0xf]
      %v366 = vld [vmem:[%s286 + $0x108] sm:$0xf]
      %v367 = vld [vmem:[%s286 + $0x10c] sm:$0xf]
      %v368 = vld [vmem:[%s286 + $0x110] sm:$0xf]
      %v369 = vld [vmem:[%s286 + $0x114] sm:$0xf]
      %v370 = vld [vmem:[%s286 + $0x118] sm:$0xf]
      %v371 = vld [vmem:[%s286 + $0x11c] sm:$0xf]
      %v372 = vld [vmem:[%s286 + $0x120] sm:$0xf]
      %v373 = vld [vmem:[%s286 + $0x124] sm:$0xf]
      %v374 = vld [vmem:[%s286 + $0x128] sm:$0xf]
      %v375 = vld [vmem:[%s286 + $0x12c] sm:$0xf]
      %v376 = vld [vmem:[%s286 + $0x130] sm:$0xf]
      %v377 = vld [vmem:[%s286 + $0x134] sm:$0xf]
      %v378 = vld [vmem:[%s286 + $0x138] sm:$0xf]
      %v379 = vld [vmem:[%s286 + $0x13c] sm:$0xf]
      %v380 = vld [vmem:[%s286 + $0x140] sm:$0xf]
      %v381 = vld [vmem:[%s286 + $0x144] sm:$0xf]
      %v382 = vld [vmem:[%s286 + $0x148] sm:$0xf]
      %v383 = vld [vmem:[%s286 + $0x14c] sm:$0xf]
      %v384 = vld [vmem:[%s286 + $0x150] sm:$0xf]
      %v385 = vld [vmem:[%s286 + $0x154] sm:$0xf]
      %v386 = vld [vmem:[%s286 + $0x158] sm:$0xf]
      %v387 = vld [vmem:[%s286 + $0x15c] sm:$0xf]
      %v388 = vld [vmem:[%s286 + $0x160] sm:$0xf]
      %v389 = vld [vmem:[%s286 + $0x164] sm:$0xf]
      %v390 = vld [vmem:[%s286 + $0x168] sm:$0xf]
      %v391 = vld [vmem:[%s286 + $0x16c] sm:$0xf]
      %v392 = vld [vmem:[%s286 + $0x170] sm:$0xf]
      %v393 = vld [vmem:[%s286 + $0x174] sm:$0xf]
      %v394 = vld [vmem:[%s286 + $0x178] sm:$0xf]
      %v395 = vld [vmem:[%s286 + $0x17c] sm:$0xf]
      %v396 = vld [vmem:[%s286 + $0x180] sm:$0xf]
      %v397 = vld [vmem:[%s286 + $0x184] sm:$0xf]
      %v398 = vld [vmem:[%s286 + $0x188] sm:$0xf]
      %v399 = vld [vmem:[%s286 + $0x18c] sm:$0xf]
      %v400 = vld [vmem:[%s286 + $0x190] sm:$0xf]
      %v401 = vld [vmem:[%s286 + $0x194] sm:$0xf]
      %v402 = vld [vmem:[%s286 + $0x198] sm:$0xf]
      %v403 = vld [vmem:[%s286 + $0x19c] sm:$0xf]
      %v404 = vld [vmem:[%s286 + $0x1a0] sm:$0xf]
      %v405 = vld [vmem:[%s286 + $0x1a4] sm:$0xf]
      %v406 = vld [vmem:[%s286 + $0x1a8] sm:$0xf]
      %v407 = vld [vmem:[%s286 + $0x1ac] sm:$0xf]
      %v408 = vld [vmem:[%s286 + $0x1b0] sm:$0xf]
      %v409 = vld [vmem:[%s286 + $0x1b4] sm:$0xf]
      %v410 = vld [vmem:[%s286 + $0x1b8] sm:$0xf]
      %v411 = vld [vmem:[%s286 + $0x1bc] sm:$0xf]
      %v416 = vunpack.c.l.b16 %v296
      %v417 = vunpack.c.h.b16 %v296
      %v418 = vunpack.c.l.b16 %v297
      %v419 = vunpack.c.h.b16 %v297
      %v420 = vunpack.c.l.b16 %v298
      %v421 = vunpack.c.h.b16 %v298
      %v422 = vunpack.c.l.b16 %v299
      %v423 = vpack.c.b16 %v416, %v416
      %v424 = vpack.c.b16 %v417, %v417
      %v425 = vpack.c.b16 %v418, %v418
      %v426 = vpack.c.b16 %v419, %v419
      %v427 = vpack.c.b16 %v420, %v420
      %v428 = vpack.c.b16 %v421, %v421
      %v429 = vpack.c.b16 %v422, %v422
      %v549 = vunpack.c.l.b16 %v300
      %v550 = vunpack.c.l.b16 %v301
      %v551 = vunpack.c.l.b16 %v302
      %v552 = vunpack.c.l.b16 %v303
      %v553 = vunpack.c.l.b16 %v304
      %v554 = vunpack.c.l.b16 %v305
      %v555 = vunpack.c.l.b16 %v306
      %v556 = vunpack.c.l.b16 %v307
      %v557 = vunpack.c.l.b16 %v308
      %v558 = vunpack.c.l.b16 %v309
      %v559 = vunpack.c.l.b16 %v310
      %v560 = vunpack.c.l.b16 %v311
      %v561 = vunpack.c.l.b16 %v312
      %v562 = vunpack.c.l.b16 %v313
      %v563 = vunpack.c.l.b16 %v314
      %v564 = vunpack.c.l.b16 %v315
      %v565 = vunpack.c.l.b16 %v316
      %v566 = vunpack.c.l.b16 %v317
      %v567 = vunpack.c.l.b16 %v318
      %v568 = vunpack.c.l.b16 %v319
      %v569 = vunpack.c.l.b16 %v320
      %v570 = vunpack.c.l.b16 %v321
      %v571 = vunpack.c.l.b16 %v322
      %v572 = vunpack.c.l.b16 %v323
      %v573 = vunpack.c.l.b16 %v324
      %v574 = vunpack.c.l.b16 %v325
      %v575 = vunpack.c.l.b16 %v326
      %v576 = vunpack.c.l.b16 %v327
      %v577 = vunpack.c.l.b16 %v328
      %v578 = vunpack.c.l.b16 %v329
      %v579 = vunpack.c.l.b16 %v330
      %v580 = vunpack.c.l.b16 %v331
      %v581 = vunpack.c.l.b16 %v332
      %v582 = vunpack.c.l.b16 %v333
      %v583 = vunpack.c.l.b16 %v334
      %v584 = vunpack.c.l.b16 %v335
      %v585 = vunpack.c.l.b16 %v336
      %v586 = vunpack.c.l.b16 %v337
      %v587 = vunpack.c.l.b16 %v338
      %v588 = vunpack.c.l.b16 %v339
      %v589 = vunpack.c.l.b16 %v340
      %v590 = vunpack.c.l.b16 %v341
      %v591 = vunpack.c.l.b16 %v342
      %v592 = vunpack.c.l.b16 %v343
      %v593 = vunpack.c.l.b16 %v344
      %v594 = vunpack.c.l.b16 %v345
      %v595 = vunpack.c.l.b16 %v346
      %v596 = vunpack.c.l.b16 %v347
      %v597 = vunpack.c.l.b16 %v348
      %v598 = vunpack.c.l.b16 %v349
      %v599 = vunpack.c.l.b16 %v350
      %v600 = vunpack.c.l.b16 %v351
      %v601 = vunpack.c.l.b16 %v352
      %v602 = vunpack.c.l.b16 %v353
      %v603 = vunpack.c.l.b16 %v354
      %v604 = vunpack.c.l.b16 %v355
      %v605 = vunpack.c.l.b16 %v356
      %v606 = vunpack.c.l.b16 %v357
      %v607 = vunpack.c.l.b16 %v358
      %v608 = vunpack.c.l.b16 %v359
      %v609 = vunpack.c.l.b16 %v360
      %v610 = vunpack.c.l.b16 %v361
      %v611 = vunpack.c.l.b16 %v362
      %v612 = vunpack.c.l.b16 %v363
      %v613 = vunpack.c.l.b16 %v364
      %v614 = vunpack.c.l.b16 %v365
      %v615 = vunpack.c.l.b16 %v366
      %v616 = vunpack.c.l.b16 %v367
      %v617 = vunpack.c.l.b16 %v368
      %v618 = vunpack.c.l.b16 %v369
      %v619 = vunpack.c.l.b16 %v370
      %v620 = vunpack.c.l.b16 %v371
      %v621 = vunpack.c.l.b16 %v372
      %v622 = vunpack.c.l.b16 %v373
      %v623 = vunpack.c.l.b16 %v374
      %v624 = vunpack.c.l.b16 %v375
      %v625 = vunpack.c.l.b16 %v376
      %v626 = vunpack.c.l.b16 %v377
      %v627 = vunpack.c.l.b16 %v378
      %v628 = vunpack.c.l.b16 %v379
      %v629 = vunpack.c.l.b16 %v380
      %v630 = vunpack.c.l.b16 %v381
      %v631 = vunpack.c.l.b16 %v382
      %v632 = vunpack.c.l.b16 %v383
      %v633 = vunpack.c.l.b16 %v384
      %v634 = vunpack.c.l.b16 %v385
      %v635 = vunpack.c.l.b16 %v386
      %v636 = vunpack.c.l.b16 %v387
      %v637 = vunpack.c.l.b16 %v388
      %v638 = vunpack.c.l.b16 %v389
      %v639 = vunpack.c.l.b16 %v390
      %v640 = vunpack.c.l.b16 %v391
      %v641 = vunpack.c.l.b16 %v392
      %v642 = vunpack.c.l.b16 %v393
      %v643 = vunpack.c.l.b16 %v394
      %v644 = vunpack.c.l.b16 %v395
      %v645 = vunpack.c.l.b16 %v396
      %v646 = vunpack.c.l.b16 %v397
      %v647 = vunpack.c.l.b16 %v398
      %v648 = vunpack.c.l.b16 %v399
      %v649 = vunpack.c.l.b16 %v400
      %v650 = vunpack.c.l.b16 %v401
      %v651 = vunpack.c.l.b16 %v402
      %v652 = vunpack.c.l.b16 %v403
      %v653 = vunpack.c.l.b16 %v404
      %v654 = vunpack.c.l.b16 %v405
      %v655 = vunpack.c.l.b16 %v406
      %v656 = vunpack.c.l.b16 %v407
      %v657 = vunpack.c.l.b16 %v408
      %v658 = vunpack.c.l.b16 %v409
      %v659 = vunpack.c.l.b16 %v410
      %v660 = vunpack.c.l.b16 %v411
      %v661 = vpack.c.b16 %v550, %v549
      %v662 = vpack.c.b16 %v552, %v551
      %v663 = vpack.c.b16 %v554, %v553
      %v664 = vpack.c.b16 %v556, %v555
      %v665 = vpack.c.b16 %v558, %v557
      %v666 = vpack.c.b16 %v560, %v559
      %v667 = vpack.c.b16 %v562, %v561
      %v668 = vpack.c.b16 %v564, %v563
      %v669 = vpack.c.b16 %v566, %v565
      %v670 = vpack.c.b16 %v568, %v567
      %v671 = vpack.c.b16 %v570, %v569
      %v672 = vpack.c.b16 %v572, %v571
      %v673 = vpack.c.b16 %v574, %v573
      %v674 = vpack.c.b16 %v576, %v575
      %v675 = vpack.c.b16 %v578, %v577
      %v676 = vpack.c.b16 %v580, %v579
      %v677 = vpack.c.b16 %v582, %v581
      %v678 = vpack.c.b16 %v584, %v583
      %v679 = vpack.c.b16 %v586, %v585
      %v680 = vpack.c.b16 %v588, %v587
      %v681 = vpack.c.b16 %v590, %v589
      %v682 = vpack.c.b16 %v592, %v591
      %v683 = vpack.c.b16 %v594, %v593
      %v684 = vpack.c.b16 %v596, %v595
      %v685 = vpack.c.b16 %v598, %v597
      %v686 = vpack.c.b16 %v600, %v599
      %v687 = vpack.c.b16 %v602, %v601
      %v688 = vpack.c.b16 %v604, %v603
      %v689 = vpack.c.b16 %v606, %v605
      %v690 = vpack.c.b16 %v608, %v607
      %v691 = vpack.c.b16 %v610, %v609
      %v692 = vpack.c.b16 %v612, %v611
      %v693 = vpack.c.b16 %v614, %v613
      %v694 = vpack.c.b16 %v616, %v615
      %v695 = vpack.c.b16 %v618, %v617
      %v696 = vpack.c.b16 %v620, %v619
      %v697 = vpack.c.b16 %v622, %v621
      %v698 = vpack.c.b16 %v624, %v623
      %v699 = vpack.c.b16 %v626, %v625
      %v700 = vpack.c.b16 %v628, %v627
      %v701 = vpack.c.b16 %v630, %v629
      %v702 = vpack.c.b16 %v632, %v631
      %v703 = vpack.c.b16 %v634, %v633
      %v704 = vpack.c.b16 %v636, %v635
      %v705 = vpack.c.b16 %v638, %v637
      %v706 = vpack.c.b16 %v640, %v639
      %v707 = vpack.c.b16 %v642, %v641
      %v708 = vpack.c.b16 %v644, %v643
      %v709 = vpack.c.b16 %v646, %v645
      %v710 = vpack.c.b16 %v648, %v647
      %v711 = vpack.c.b16 %v650, %v649
      %v712 = vpack.c.b16 %v652, %v651
      %v713 = vpack.c.b16 %v654, %v653
      %v714 = vpack.c.b16 %v656, %v655
      %v715 = vpack.c.b16 %v658, %v657
      %v716 = vpack.c.b16 %v660, %v659
      %773 = vmatprep.subr.bf16.mxu0 0
      %774 = vmatpush1.bf16.msra.mxu0 %v661
      %775 = vmatprep.subr.bf16.mxu0 0
      %776 = vmatpush1.bf16.msra.mxu0 %v662
      %777 = vmatprep.subr.bf16.mxu0 0
      %778 = vmatpush1.bf16.msra.mxu0 %v663
      %779 = vmatprep.subr.bf16.mxu0 0
      %780 = vmatpush1.bf16.msra.mxu0 %v664
      %781 = vmatprep.subr.bf16.mxu0 0
      %782 = vmatpush1.bf16.msra.mxu0 %v665
      %783 = vmatprep.subr.bf16.mxu0 0
      %784 = vmatpush1.bf16.msra.mxu0 %v666
      %785 = vmatprep.subr.bf16.mxu0 0
      %786 = vmatpush1.bf16.msra.mxu0 %v667
      %787 = vmatprep.subr.bf16.mxu0 0
      %788 = vmatpush1.bf16.msra.mxu0 %v668
      %789 = vmatprep.subr.bf16.mxu0 0
      %790 = vmatpush1.bf16.msra.mxu0 %v669
      %791 = vmatprep.subr.bf16.mxu0 0
      %792 = vmatpush1.bf16.msra.mxu0 %v670
      %793 = vmatprep.subr.bf16.mxu0 0
      %794 = vmatpush1.bf16.msra.mxu0 %v671
      %795 = vmatprep.subr.bf16.mxu0 0
      %796 = vmatpush1.bf16.msra.mxu0 %v672
      %797 = vmatprep.subr.bf16.mxu0 0
      %798 = vmatpush1.bf16.msra.mxu0 %v673
      %799 = vmatprep.subr.bf16.mxu0 0
      %800 = vmatpush1.bf16.msra.mxu0 %v674
      %801 = vmatprep.subr.bf16.mxu0 0
      %802 = vmatpush1.bf16.msra.mxu0 %v675
      %803 = vmatprep.subr.bf16.mxu0 0
      %804 = vmatpush1.bf16.msra.mxu0 %v676
      %805 = vmatprep.mubr.bf16.mxu0 %v424
      %806 = vmatmul.mubr.bf16.gmra.mrb[0].mxu0 %v423
      %v807 = vpop.f32.mrb[0].mxu0
      %v808 = vadd.f32 0.0, %v807
      %v809 = vpop.f32.mrb[0].mxu0
      %v810 = vpop.f32.mrb[0].mxu0
      %v811 = vpop.f32.mrb[0].mxu0
      %812 = vdwg.mxu0
      %813 = vmatprep.subr.bf16.mxu0 0
      %814 = vmatpush1.bf16.msra.mxu0 %v677
      %815 = vmatprep.subr.bf16.mxu0 0
      %816 = vmatpush1.bf16.msra.mxu0 %v678
      %817 = vmatprep.subr.bf16.mxu0 0
      %818 = vmatpush1.bf16.msra.mxu0 %v679
      %819 = vmatprep.subr.bf16.mxu0 0
      %820 = vmatpush1.bf16.msra.mxu0 %v680
      %821 = vmatprep.subr.bf16.mxu0 0
      %822 = vmatpush1.bf16.msra.mxu0 %v681
      %823 = vmatprep.subr.bf16.mxu0 0
      %824 = vmatpush1.bf16.msra.mxu0 %v682
      %825 = vmatprep.subr.bf16.mxu0 0
      %826 = vmatpush1.bf16.msra.mxu0 %v683
      %827 = vmatprep.subr.bf16.mxu0 0
      %828 = vmatpush1.bf16.msra.mxu0 %v684
      %829 = vmatprep.subr.bf16.mxu0 0
      %830 = vmatpush1.bf16.msra.mxu0 %v685
      %831 = vmatprep.subr.bf16.mxu0 0
      %832 = vmatpush1.bf16.msra.mxu0 %v686
      %833 = vmatprep.subr.bf16.mxu0 0
      %834 = vmatpush1.bf16.msra.mxu0 %v687
      %835 = vmatprep.subr.bf16.mxu0 0
      %836 = vmatpush1.bf16.msra.mxu0 %v688
      %837 = vmatprep.subr.bf16.mxu0 0
      %838 = vmatpush1.bf16.msra.mxu0 %v689
      %839 = vmatprep.subr.bf16.mxu0 0
      %840 = vmatpush1.bf16.msra.mxu0 %v690
      %841 = vmatprep.subr.bf16.mxu0 0
      %842 = vmatpush1.bf16.msra.mxu0 %v691
      %843 = vmatprep.subr.bf16.mxu0 0
      %844 = vmatpush1.bf16.msra.mxu0 %v692
      %845 = vmatprep.mubr.bf16.mxu0 %v426
      %846 = vmatmul.mubr.bf16.gmra.mrb[0].mxu0 %v425
      %v847 = vpop.f32.mrb[0].mxu0
      %v848 = vadd.f32 %v808, %v847
      %v849 = vpop.f32.mrb[0].mxu0
      %v850 = vpop.f32.mrb[0].mxu0
      %v851 = vpop.f32.mrb[0].mxu0
      %852 = vdwg.mxu0
      %853 = vmatprep.subr.bf16.mxu0 0
      %854 = vmatpush1.bf16.msra.mxu0 %v693
      %855 = vmatprep.subr.bf16.mxu0 0
      %856 = vmatpush1.bf16.msra.mxu0 %v694
      %857 = vmatprep.subr.bf16.mxu0 0
      %858 = vmatpush1.bf16.msra.mxu0 %v695
      %859 = vmatprep.subr.bf16.mxu0 0
      %860 = vmatpush1.bf16.msra.mxu0 %v696
      %861 = vmatprep.subr.bf16.mxu0 0
      %862 = vmatpush1.bf16.msra.mxu0 %v697
      %863 = vmatprep.subr.bf16.mxu0 0
      %864 = vmatpush1.bf16.msra.mxu0 %v698
      %865 = vmatprep.subr.bf16.mxu0 0
      %866 = vmatpush1.bf16.msra.mxu0 %v699
      %867 = vmatprep.subr.bf16.mxu0 0
      %868 = vmatpush1.bf16.msra.mxu0 %v700
      %869 = vmatprep.subr.bf16.mxu0 0
      %870 = vmatpush1.bf16.msra.mxu0 %v701
      %871 = vmatprep.subr.bf16.mxu0 0
      %872 = vmatpush1.bf16.msra.mxu0 %v702
      %873 = vmatprep.subr.bf16.mxu0 0
      %874 = vmatpush1.bf16.msra.mxu0 %v703
      %875 = vmatprep.subr.bf16.mxu0 0
      %876 = vmatpush1.bf16.msra.mxu0 %v704
      %877 = vmatprep.subr.bf16.mxu0 0
      %878 = vmatpush1.bf16.msra.mxu0 %v705
      %879 = vmatprep.subr.bf16.mxu0 0
      %880 = vmatpush1.bf16.msra.mxu0 %v706
      %881 = vmatprep.subr.bf16.mxu0 0
      %882 = vmatpush1.bf16.msra.mxu0 %v707
      %883 = vmatprep.subr.bf16.mxu0 0
      %884 = vmatpush1.bf16.msra.mxu0 %v708
      %885 = vmatprep.mubr.bf16.mxu0 %v428
      %886 = vmatmul.mubr.bf16.gmra.mrb[0].mxu0 %v427
      %v887 = vpop.f32.mrb[0].mxu0
      %v888 = vadd.f32 %v848, %v887
      %v889 = vpop.f32.mrb[0].mxu0
      %v890 = vpop.f32.mrb[0].mxu0
      %v891 = vpop.f32.mrb[0].mxu0
      %892 = vdwg.mxu0
      %893 = vmatprep.subr.bf16.mxu0 0
      %894 = vmatpush1.bf16.msra.mxu0 %v709
      %895 = vmatprep.subr.bf16.mxu0 0
      %896 = vmatpush1.bf16.msra.mxu0 %v710
      %897 = vmatprep.subr.bf16.mxu0 0
      %898 = vmatpush1.bf16.msra.mxu0 %v711
      %899 = vmatprep.subr.bf16.mxu0 0
      %900 = vmatpush1.bf16.msra.mxu0 %v712
      %901 = vmatprep.subr.bf16.mxu0 0
      %902 = vmatpush1.bf16.msra.mxu0 %v713
      %903 = vmatprep.subr.bf16.mxu0 0
      %904 = vmatpush1.bf16.msra.mxu0 %v714
      %905 = vmatprep.subr.bf16.mxu0 0
      %906 = vmatpush1.bf16.msra.mxu0 %v715
      %907 = vmatprep.subr.bf16.mxu0 0
      %908 = vmatpush1.bf16.msra.mxu0 %v716
      %909 = vmatprep.subr.bf16.mxu0 0
      %910 = vmatpush1.bf16.msra.mxu0 0
      %911 = vmatprep.subr.bf16.mxu0 0
      %912 = vmatpush1.bf16.msra.mxu0 0
      %913 = vmatprep.subr.bf16.mxu0 0
      %914 = vmatpush1.bf16.msra.mxu0 0
      %915 = vmatprep.subr.bf16.mxu0 0
      %916 = vmatpush1.bf16.msra.mxu0 0
      %917 = vmatprep.subr.bf16.mxu0 0
      %918 = vmatpush1.bf16.msra.mxu0 0
      %919 = vmatprep.subr.bf16.mxu0 0
      %920 = vmatpush1.bf16.msra.mxu0 0
      %921 = vmatprep.subr.bf16.mxu0 0
      %922 = vmatpush1.bf16.msra.mxu0 0
      %923 = vmatprep.subr.bf16.mxu0 0
      %924 = vmatpush1.bf16.msra.mxu0 0
      %925 = vmatprep.mubr.bf16.mxu0 0
      %926 = vmatmul.mubr.bf16.gmra.mrb[0].mxu0 %v429
      %v927 = vpop.f32.mrb[0].mxu0
      %v928 = vadd.f32 %v888, %v927
      %v929 = vpop.f32.mrb[0].mxu0
      %v930 = vpop.f32.mrb[0].mxu0
      %v931 = vpop.f32.mrb[0].mxu0
      %932 = vdwg.mxu0
      %v933 = vadd.f32 %v295, %v928
      %vm934 = vcmask 523264
      %935 = vst.msk [vmem:[#allocation2] sm:$0xff] %vm934, %v933
      %p936 = scmp.eq.s32.totalorder %s18, 1
      // Predicated region
      $region53: #{deep_snn_forward.1} parent=47 // pred_check
        %p937 = pneg %p936
      $region54: #{deep_snn_forward.1} parent=47 // pred_check_branch
        %939 = sbr.rel (%p937) target = $region56
      $region55: #{deep_snn_forward.1} parent=47 // pred_region
        %v940 = vld [vmem:[#allocation2] sm:$0xff]
        %v941 = vld [vmem:[%s2] sm:$0x1]
        %v943 = vlaneseq
        %v944 = vshrl.u32 %v943, 7
        %v945 = vsub.s32 0, %v944
        %v946 = vrot.slane %v941, %v945
        %v948 = vadd.f32 %v940, %v946
        %v949 = vld [vmem:[%s3] sm:$0xff]
        %v950 = vld [vmem:[%s3 + $0x8] sm:$0xff]
        %v951 = vld [vmem:[%s3 + $0x10] sm:$0xff]
        %v952 = vld [vmem:[%s3 + $0x18] sm:$0xff]
        %v953 = vld [vmem:[%s3 + $0x20] sm:$0xff]
        %v954 = vld [vmem:[%s3 + $0x28] sm:$0xff]
        %v955 = vld [vmem:[%s3 + $0x30] sm:$0xff]
        %v956 = vld [vmem:[%s3 + $0x38] sm:$0xff]
        %v957 = vld [vmem:[%s4] sm:$0x1]
        %v959 = vlaneseq
        %v960 = vshrl.u32 %v959, 7
        %v961 = vsub.s32 0, %v960
        %v962 = vrot.slane %v957, %v961
        %v965 = vsel %vm934, %v948, 0
        %967 = vmatprep.subr.mxu0 0.0
        %968 = vmatpush1.msra.mxu0 %v949
        %969 = vmatprep.subr.mxu0 0.0
        %970 = vmatpush1.msra.mxu0 %v950
        %971 = vmatprep.subr.mxu0 0.0
        %972 = vmatpush1.msra.mxu0 %v951
        %973 = vmatprep.subr.mxu0 0.0
        %974 = vmatpush1.msra.mxu0 %v952
        %975 = vmatprep.subr.mxu0 0.0
        %976 = vmatpush1.msra.mxu0 %v953
        %977 = vmatprep.subr.mxu0 0.0
        %978 = vmatpush1.msra.mxu0 %v954
        %979 = vmatprep.subr.mxu0 0.0
        %980 = vmatpush1.msra.mxu0 %v955
        %981 = vmatprep.subr.mxu0 0.0
        %982 = vmatpush1.msra.mxu0 %v956
        %983 = vmatprep.subr.mxu0 0.0
        %984 = vmatpush1.msra.mxu0 0.0
        %985 = vmatprep.subr.mxu0 0.0
        %986 = vmatpush1.msra.mxu0 0.0
        %987 = vmatprep.subr.mxu0 0.0
        %988 = vmatpush1.msra.mxu0 0.0
        %989 = vmatprep.subr.mxu0 0.0
        %990 = vmatpush1.msra.mxu0 0.0
        %991 = vmatprep.subr.mxu0 0.0
        %992 = vmatpush1.msra.mxu0 0.0
        %993 = vmatprep.subr.mxu0 0.0
        %994 = vmatpush1.msra.mxu0 0.0
        %995 = vmatprep.subr.mxu0 0.0
        %996 = vmatpush1.msra.mxu0 0.0
        %997 = vmatprep.subr.mxu0 0.0
        %998 = vmatpush1.msra.mxu0 0.0
        %999 = vmatprep.subr.mxu0 0.0
        %1000 = vmatpush1.msra.mxu0 0.0
        %1001 = vmatprep.subr.mxu0 0.0
        %1002 = vmatpush1.msra.mxu0 0.0
        %1003 = vmatprep.subr.mxu0 0.0
        %1004 = vmatpush1.msra.mxu0 0.0
        %1005 = vmatprep.subr.mxu0 0.0
        %1006 = vmatpush1.msra.mxu0 0.0
        %1007 = vmatprep.subr.mxu0 0.0
        %1008 = vmatpush1.msra.mxu0 0.0
        %1009 = vmatprep.subr.mxu0 0.0
        %1010 = vmatpush1.msra.mxu0 0.0
        %1011 = vmatprep.subr.mxu0 0.0
        %1012 = vmatpush1.msra.mxu0 0.0
        %1013 = vmatprep.subr.mxu0 0.0
        %1014 = vmatpush1.msra.mxu0 0.0
        %1015 = vmatprep.subr.mxu0 0.0
        %1016 = vmatpush1.msra.mxu0 0.0
        %1017 = vmatprep.subr.mxu0 0.0
        %1018 = vmatpush1.msra.mxu0 0.0
        %1019 = vmatprep.subr.mxu0 0.0
        %1020 = vmatpush1.msra.mxu0 0.0
        %1021 = vmatprep.subr.mxu0 0.0
        %1022 = vmatpush1.msra.mxu0 0.0
        %1023 = vmatprep.subr.mxu0 0.0
        %1024 = vmatpush1.msra.mxu0 0.0
        %1025 = vmatprep.subr.mxu0 0.0
        %1026 = vmatpush1.msra.mxu0 0.0
        %1027 = vmatprep.subr.mxu0 0.0
        %1028 = vmatpush1.msra.mxu0 0.0
        %1029 = vmatprep.subr.mxu0 0.0
        %1030 = vmatpush1.msra.mxu0 0.0
        %1031 = vmatprep.mubr.f32.mxu0 0.0
        %1032 = vmatmul.mubr.f32.gmra.mrb[0].mxu0 %v965
        %v1033 = vpop.f32.mrb[0].mxu0
        %v1034 = vadd.f32 %v962, %v1033
        %v1035 = vpop.f32.mrb[0].mxu0
        %1036 = vdwg.mxu0
        %v1037 = vsub.f32 %v948, 1.0
        %vm1038 = vcmp.gt.f32.partialorder %v1037, 0.0
        %v1039 = vsel %vm1038, 1, 0
        %v1040 = vcvt.s32.f32 %v1039
        %v1041 = vmul.f32 %v948, 0.9
        %v1042 = vadd.f32 %v1041, %v948
        %v1043 = vsub.f32 %v1042, %v1040
        %v1045 = vsel %vm934, %v1043, 0
        %1047 = vmatprep.subr.mxu0 0.0
        %1048 = vmatpush1.msra.mxu0 %v949
        %1049 = vmatprep.subr.mxu0 0.0
        %1050 = vmatpush1.msra.mxu0 %v950
        %1051 = vmatprep.subr.mxu0 0.0
        %1052 = vmatpush1.msra.mxu0 %v951
        %1053 = vmatprep.subr.mxu0 0.0
        %1054 = vmatpush1.msra.mxu0 %v952
        %1055 = vmatprep.subr.mxu0 0.0
        %1056 = vmatpush1.msra.mxu0 %v953
        %1057 = vmatprep.subr.mxu0 0.0
        %1058 = vmatpush1.msra.mxu0 %v954
        %1059 = vmatprep.subr.mxu0 0.0
        %1060 = vmatpush1.msra.mxu0 %v955
        %1061 = vmatprep.subr.mxu0 0.0
        %1062 = vmatpush1.msra.mxu0 %v956
        %1063 = vmatprep.subr.mxu0 0.0
        %1064 = vmatpush1.msra.mxu0 0.0
        %1065 = vmatprep.subr.mxu0 0.0
        %1066 = vmatpush1.msra.mxu0 0.0
        %1067 = vmatprep.subr.mxu0 0.0
        %1068 = vmatpush1.msra.mxu0 0.0
        %1069 = vmatprep.subr.mxu0 0.0
        %1070 = vmatpush1.msra.mxu0 0.0
        %1071 = vmatprep.subr.mxu0 0.0
        %1072 = vmatpush1.msra.mxu0 0.0
        %1073 = vmatprep.subr.mxu0 0.0
        %1074 = vmatpush1.msra.mxu0 0.0
        %1075 = vmatprep.subr.mxu0 0.0
        %1076 = vmatpush1.msra.mxu0 0.0
        %1077 = vmatprep.subr.mxu0 0.0
        %1078 = vmatpush1.msra.mxu0 0.0
        %1079 = vmatprep.subr.mxu0 0.0
        %1080 = vmatpush1.msra.mxu0 0.0
        %1081 = vmatprep.subr.mxu0 0.0
        %1082 = vmatpush1.msra.mxu0 0.0
        %1083 = vmatprep.subr.mxu0 0.0
        %1084 = vmatpush1.msra.mxu0 0.0
        %1085 = vmatprep.subr.mxu0 0.0
        %1086 = vmatpush1.msra.mxu0 0.0
        %1087 = vmatprep.subr.mxu0 0.0
        %1088 = vmatpush1.msra.mxu0 0.0
        %1089 = vmatprep.subr.mxu0 0.0
        %1090 = vmatpush1.msra.mxu0 0.0
        %1091 = vmatprep.subr.mxu0 0.0
        %1092 = vmatpush1.msra.mxu0 0.0
        %1093 = vmatprep.subr.mxu0 0.0
        %1094 = vmatpush1.msra.mxu0 0.0
        %1095 = vmatprep.subr.mxu0 0.0
        %1096 = vmatpush1.msra.mxu0 0.0
        %1097 = vmatprep.subr.mxu0 0.0
        %1098 = vmatpush1.msra.mxu0 0.0
        %1099 = vmatprep.subr.mxu0 0.0
        %1100 = vmatpush1.msra.mxu0 0.0
        %1101 = vmatprep.subr.mxu0 0.0
        %1102 = vmatpush1.msra.mxu0 0.0
        %1103 = vmatprep.subr.mxu0 0.0
        %1104 = vmatpush1.msra.mxu0 0.0
        %1105 = vmatprep.subr.mxu0 0.0
        %1106 = vmatpush1.msra.mxu0 0.0
        %1107 = vmatprep.subr.mxu0 0.0
        %1108 = vmatpush1.msra.mxu0 0.0
        %1109 = vmatprep.subr.mxu0 0.0
        %1110 = vmatpush1.msra.mxu0 0.0
        %1111 = vmatprep.mubr.f32.mxu0 0.0
        %1112 = vmatmul.mubr.f32.gmra.mrb[0].mxu0 %v1045
        %v1113 = vpop.f32.mrb[0].mxu0
        %v1114 = vadd.f32 %v962, %v1113
        %v1115 = vpop.f32.mrb[0].mxu0
        %1116 = vdwg.mxu0
        %v1117 = vsub.f32 %v1034, 1.0
        %vm1118 = vcmp.gt.f32.partialorder %v1117, 0.0
        %v1119 = vsel %vm1118, 1, 0
        %v1120 = vcvt.s32.f32 %v1119
        %v1121 = vmul.f32 %v1034, 0.9
        %v1122 = vadd.f32 %v1121, %v1114
        %v1123 = vsub.f32 %v1122, %v1120
        %v1124 = vsub.f32 %v1043, 1.0
        %vm1125 = vcmp.gt.f32.partialorder %v1124, 0.0
        %v1126 = vsel %vm1125, 1, 0
        %v1127 = vcvt.s32.f32 %v1126
        %v1128 = vmul.f32 %v1043, 0.9
        %v1129 = vadd.f32 %v1128, %v948
        %v1130 = vsub.f32 %v1129, %v1127
        %v1132 = vsel %vm934, %v1130, 0
        %1134 = vmatprep.subr.mxu0 0.0
        %1135 = vmatpush1.msra.mxu0 %v949
        %1136 = vmatprep.subr.mxu0 0.0
        %1137 = vmatpush1.msra.mxu0 %v950
        %1138 = vmatprep.subr.mxu0 0.0
        %1139 = vmatpush1.msra.mxu0 %v951
        %1140 = vmatprep.subr.mxu0 0.0
        %1141 = vmatpush1.msra.mxu0 %v952
        %1142 = vmatprep.subr.mxu0 0.0
        %1143 = vmatpush1.msra.mxu0 %v953
        %1144 = vmatprep.subr.mxu0 0.0
        %1145 = vmatpush1.msra.mxu0 %v954
        %1146 = vmatprep.subr.mxu0 0.0
        %1147 = vmatpush1.msra.mxu0 %v955
        %1148 = vmatprep.subr.mxu0 0.0
        %1149 = vmatpush1.msra.mxu0 %v956
        %1150 = vmatprep.subr.mxu0 0.0
        %1151 = vmatpush1.msra.mxu0 0.0
        %1152 = vmatprep.subr.mxu0 0.0
        %1153 = vmatpush1.msra.mxu0 0.0
        %1154 = vmatprep.subr.mxu0 0.0
        %1155 = vmatpush1.msra.mxu0 0.0
        %1156 = vmatprep.subr.mxu0 0.0
        %1157 = vmatpush1.msra.mxu0 0.0
        %1158 = vmatprep.subr.mxu0 0.0
        %1159 = vmatpush1.msra.mxu0 0.0
        %1160 = vmatprep.subr.mxu0 0.0
        %1161 = vmatpush1.msra.mxu0 0.0
        %1162 = vmatprep.subr.mxu0 0.0
        %1163 = vmatpush1.msra.mxu0 0.0
        %1164 = vmatprep.subr.mxu0 0.0
        %1165 = vmatpush1.msra.mxu0 0.0
        %1166 = vmatprep.subr.mxu0 0.0
        %1167 = vmatpush1.msra.mxu0 0.0
        %1168 = vmatprep.subr.mxu0 0.0
        %1169 = vmatpush1.msra.mxu0 0.0
        %1170 = vmatprep.subr.mxu0 0.0
        %1171 = vmatpush1.msra.mxu0 0.0
        %1172 = vmatprep.subr.mxu0 0.0
        %1173 = vmatpush1.msra.mxu0 0.0
        %1174 = vmatprep.subr.mxu0 0.0
        %1175 = vmatpush1.msra.mxu0 0.0
        %1176 = vmatprep.subr.mxu0 0.0
        %1177 = vmatpush1.msra.mxu0 0.0
        %1178 = vmatprep.subr.mxu0 0.0
        %1179 = vmatpush1.msra.mxu0 0.0
        %1180 = vmatprep.subr.mxu0 0.0
        %1181 = vmatpush1.msra.mxu0 0.0
        %1182 = vmatprep.subr.mxu0 0.0
        %1183 = vmatpush1.msra.mxu0 0.0
        %1184 = vmatprep.subr.mxu0 0.0
        %1185 = vmatpush1.msra.mxu0 0.0
        %1186 = vmatprep.subr.mxu0 0.0
        %1187 = vmatpush1.msra.mxu0 0.0
        %1188 = vmatprep.subr.mxu0 0.0
        %1189 = vmatpush1.msra.mxu0 0.0
        %1190 = vmatprep.subr.mxu0 0.0
        %1191 = vmatpush1.msra.mxu0 0.0
        %1192 = vmatprep.subr.mxu0 0.0
        %1193 = vmatpush1.msra.mxu0 0.0
        %1194 = vmatprep.subr.mxu0 0.0
        %1195 = vmatpush1.msra.mxu0 0.0
        %1196 = vmatprep.subr.mxu0 0.0
        %1197 = vmatpush1.msra.mxu0 0.0
        %1198 = vmatprep.mubr.f32.mxu0 0.0
        %1199 = vmatmul.mubr.f32.gmra.mrb[0].mxu0 %v1132
        %v1200 = vpop.f32.mrb[0].mxu0
        %v1201 = vadd.f32 %v962, %v1200
        %v1202 = vpop.f32.mrb[0].mxu0
        %1203 = vdwg.mxu0
        %v1204 = vsub.f32 %v1123, 1.0
        %vm1205 = vcmp.gt.f32.partialorder %v1204, 0.0
        %v1206 = vsel %vm1205, 1, 0
        %v1207 = vcvt.s32.f32 %v1206
        %v1208 = vmul.f32 %v1123, 0.9
        %v1209 = vadd.f32 %v1208, %v1201
        %v1210 = vsub.f32 %v1209, %v1207
        %v1211 = vsub.f32 %v1130, 1.0
        %vm1212 = vcmp.gt.f32.partialorder %v1211, 0.0
        %v1213 = vsel %vm1212, 1, 0
        %v1214 = vcvt.s32.f32 %v1213
        %v1215 = vmul.f32 %v1130, 0.9
        %v1216 = vadd.f32 %v1215, %v948
        %v1217 = vsub.f32 %v1216, %v1214
        %v1219 = vsel %vm934, %v1217, 0
        %1221 = vmatprep.subr.mxu0 0.0
        %1222 = vmatpush1.msra.mxu0 %v949
        %1223 = vmatprep.subr.mxu0 0.0
        %1224 = vmatpush1.msra.mxu0 %v950
        %1225 = vmatprep.subr.mxu0 0.0
        %1226 = vmatpush1.msra.mxu0 %v951
        %1227 = vmatprep.subr.mxu0 0.0
        %1228 = vmatpush1.msra.mxu0 %v952
        %1229 = vmatprep.subr.mxu0 0.0
        %1230 = vmatpush1.msra.mxu0 %v953
        %1231 = vmatprep.subr.mxu0 0.0
        %1232 = vmatpush1.msra.mxu0 %v954
        %1233 = vmatprep.subr.mxu0 0.0
        %1234 = vmatpush1.msra.mxu0 %v955
        %1235 = vmatprep.subr.mxu0 0.0
        %1236 = vmatpush1.msra.mxu0 %v956
        %1237 = vmatprep.subr.mxu0 0.0
        %1238 = vmatpush1.msra.mxu0 0.0
        %1239 = vmatprep.subr.mxu0 0.0
        %1240 = vmatpush1.msra.mxu0 0.0
        %1241 = vmatprep.subr.mxu0 0.0
        %1242 = vmatpush1.msra.mxu0 0.0
        %1243 = vmatprep.subr.mxu0 0.0
        %1244 = vmatpush1.msra.mxu0 0.0
        %1245 = vmatprep.subr.mxu0 0.0
        %1246 = vmatpush1.msra.mxu0 0.0
        %1247 = vmatprep.subr.mxu0 0.0
        %1248 = vmatpush1.msra.mxu0 0.0
        %1249 = vmatprep.subr.mxu0 0.0
        %1250 = vmatpush1.msra.mxu0 0.0
        %1251 = vmatprep.subr.mxu0 0.0
        %1252 = vmatpush1.msra.mxu0 0.0
        %1253 = vmatprep.subr.mxu0 0.0
        %1254 = vmatpush1.msra.mxu0 0.0
        %1255 = vmatprep.subr.mxu0 0.0
        %1256 = vmatpush1.msra.mxu0 0.0
        %1257 = vmatprep.subr.mxu0 0.0
        %1258 = vmatpush1.msra.mxu0 0.0
        %1259 = vmatprep.subr.mxu0 0.0
        %1260 = vmatpush1.msra.mxu0 0.0
        %1261 = vmatprep.subr.mxu0 0.0
        %1262 = vmatpush1.msra.mxu0 0.0
        %1263 = vmatprep.subr.mxu0 0.0
        %1264 = vmatpush1.msra.mxu0 0.0
        %1265 = vmatprep.subr.mxu0 0.0
        %1266 = vmatpush1.msra.mxu0 0.0
        %1267 = vmatprep.subr.mxu0 0.0
        %1268 = vmatpush1.msra.mxu0 0.0
        %1269 = vmatprep.subr.mxu0 0.0
        %1270 = vmatpush1.msra.mxu0 0.0
        %1271 = vmatprep.subr.mxu0 0.0
        %1272 = vmatpush1.msra.mxu0 0.0
        %1273 = vmatprep.subr.mxu0 0.0
        %1274 = vmatpush1.msra.mxu0 0.0
        %1275 = vmatprep.subr.mxu0 0.0
        %1276 = vmatpush1.msra.mxu0 0.0
        %1277 = vmatprep.subr.mxu0 0.0
        %1278 = vmatpush1.msra.mxu0 0.0
        %1279 = vmatprep.subr.mxu0 0.0
        %1280 = vmatpush1.msra.mxu0 0.0
        %1281 = vmatprep.subr.mxu0 0.0
        %1282 = vmatpush1.msra.mxu0 0.0
        %1283 = vmatprep.subr.mxu0 0.0
        %1284 = vmatpush1.msra.mxu0 0.0
        %1285 = vmatprep.mubr.f32.mxu0 0.0
        %1286 = vmatmul.mubr.f32.gmra.mrb[0].mxu0 %v1219
        %v1287 = vpop.f32.mrb[0].mxu0
        %v1288 = vadd.f32 %v962, %v1287
        %v1289 = vpop.f32.mrb[0].mxu0
        %1290 = vdwg.mxu0
        %v1291 = vsub.f32 %v1210, 1.0
        %vm1292 = vcmp.gt.f32.partialorder %v1291, 0.0
        %v1293 = vsel %vm1292, 1, 0
        %v1294 = vcvt.s32.f32 %v1293
        %v1295 = vmul.f32 %v1210, 0.9
        %v1296 = vadd.f32 %v1295, %v1288
        %v1297 = vsub.f32 %v1296, %v1294
        %v1298 = vsub.f32 %v1217, 1.0
        %vm1299 = vcmp.gt.f32.partialorder %v1298, 0.0
        %v1300 = vsel %vm1299, 1, 0
        %v1301 = vcvt.s32.f32 %v1300
        %v1302 = vmul.f32 %v1217, 0.9
        %v1303 = vadd.f32 %v1302, %v948
        %v1304 = vsub.f32 %v1303, %v1301
        %v1306 = vsel %vm934, %v1304, 0
        %1308 = vmatprep.subr.mxu0 0.0
        %1309 = vmatpush1.msra.mxu0 %v949
        %1310 = vmatprep.subr.mxu0 0.0
        %1311 = vmatpush1.msra.mxu0 %v950
        %1312 = vmatprep.subr.mxu0 0.0
        %1313 = vmatpush1.msra.mxu0 %v951
        %1314 = vmatprep.subr.mxu0 0.0
        %1315 = vmatpush1.msra.mxu0 %v952
        %1316 = vmatprep.subr.mxu0 0.0
        %1317 = vmatpush1.msra.mxu0 %v953
        %1318 = vmatprep.subr.mxu0 0.0
        %1319 = vmatpush1.msra.mxu0 %v954
        %1320 = vmatprep.subr.mxu0 0.0
        %1321 = vmatpush1.msra.mxu0 %v955
        %1322 = vmatprep.subr.mxu0 0.0
        %1323 = vmatpush1.msra.mxu0 %v956
        %1324 = vmatprep.subr.mxu0 0.0
        %1325 = vmatpush1.msra.mxu0 0.0
        %1326 = vmatprep.subr.mxu0 0.0
        %1327 = vmatpush1.msra.mxu0 0.0
        %1328 = vmatprep.subr.mxu0 0.0
        %1329 = vmatpush1.msra.mxu0 0.0
        %1330 = vmatprep.subr.mxu0 0.0
        %1331 = vmatpush1.msra.mxu0 0.0
        %1332 = vmatprep.subr.mxu0 0.0
        %1333 = vmatpush1.msra.mxu0 0.0
        %1334 = vmatprep.subr.mxu0 0.0
        %1335 = vmatpush1.msra.mxu0 0.0
        %1336 = vmatprep.subr.mxu0 0.0
        %1337 = vmatpush1.msra.mxu0 0.0
        %1338 = vmatprep.subr.mxu0 0.0
        %1339 = vmatpush1.msra.mxu0 0.0
        %1340 = vmatprep.subr.mxu0 0.0
        %1341 = vmatpush1.msra.mxu0 0.0
        %1342 = vmatprep.subr.mxu0 0.0
        %1343 = vmatpush1.msra.mxu0 0.0
        %1344 = vmatprep.subr.mxu0 0.0
        %1345 = vmatpush1.msra.mxu0 0.0
        %1346 = vmatprep.subr.mxu0 0.0
        %1347 = vmatpush1.msra.mxu0 0.0
        %1348 = vmatprep.subr.mxu0 0.0
        %1349 = vmatpush1.msra.mxu0 0.0
        %1350 = vmatprep.subr.mxu0 0.0
        %1351 = vmatpush1.msra.mxu0 0.0
        %1352 = vmatprep.subr.mxu0 0.0
        %1353 = vmatpush1.msra.mxu0 0.0
        %1354 = vmatprep.subr.mxu0 0.0
        %1355 = vmatpush1.msra.mxu0 0.0
        %1356 = vmatprep.subr.mxu0 0.0
        %1357 = vmatpush1.msra.mxu0 0.0
        %1358 = vmatprep.subr.mxu0 0.0
        %1359 = vmatpush1.msra.mxu0 0.0
        %1360 = vmatprep.subr.mxu0 0.0
        %1361 = vmatpush1.msra.mxu0 0.0
        %1362 = vmatprep.subr.mxu0 0.0
        %1363 = vmatpush1.msra.mxu0 0.0
        %1364 = vmatprep.subr.mxu0 0.0
        %1365 = vmatpush1.msra.mxu0 0.0
        %1366 = vmatprep.subr.mxu0 0.0
        %1367 = vmatpush1.msra.mxu0 0.0
        %1368 = vmatprep.subr.mxu0 0.0
        %1369 = vmatpush1.msra.mxu0 0.0
        %1370 = vmatprep.subr.mxu0 0.0
        %1371 = vmatpush1.msra.mxu0 0.0
        %1372 = vmatprep.mubr.f32.mxu0 0.0
        %1373 = vmatmul.mubr.f32.gmra.mrb[0].mxu0 %v1306
        %v1374 = vpop.f32.mrb[0].mxu0
        %v1375 = vadd.f32 %v962, %v1374
        %v1376 = vpop.f32.mrb[0].mxu0
        %1377 = vdwg.mxu0
        %v1378 = vsub.f32 %v1297, 1.0
        %vm1379 = vcmp.gt.f32.partialorder %v1378, 0.0
        %v1380 = vsel %vm1379, 1, 0
        %v1381 = vcvt.s32.f32 %v1380
        %v1382 = vmul.f32 %v1297, 0.9
        %v1383 = vadd.f32 %v1382, %v1375
        %v1384 = vsub.f32 %v1383, %v1381
        %v1385 = vsub.f32 %v1304, 1.0
        %vm1386 = vcmp.gt.f32.partialorder %v1385, 0.0
        %v1387 = vsel %vm1386, 1, 0
        %v1388 = vcvt.s32.f32 %v1387
        %v1389 = vmul.f32 %v1304, 0.9
        %v1390 = vadd.f32 %v1389, %v948
        %v1391 = vsub.f32 %v1390, %v1388
        %v1393 = vsel %vm934, %v1391, 0
        %1395 = vmatprep.subr.mxu0 0.0
        %1396 = vmatpush1.msra.mxu0 %v949
        %1397 = vmatprep.subr.mxu0 0.0
        %1398 = vmatpush1.msra.mxu0 %v950
        %1399 = vmatprep.subr.mxu0 0.0
        %1400 = vmatpush1.msra.mxu0 %v951
        %1401 = vmatprep.subr.mxu0 0.0
        %1402 = vmatpush1.msra.mxu0 %v952
        %1403 = vmatprep.subr.mxu0 0.0
        %1404 = vmatpush1.msra.mxu0 %v953
        %1405 = vmatprep.subr.mxu0 0.0
        %1406 = vmatpush1.msra.mxu0 %v954
        %1407 = vmatprep.subr.mxu0 0.0
        %1408 = vmatpush1.msra.mxu0 %v955
        %1409 = vmatprep.subr.mxu0 0.0
        %1410 = vmatpush1.msra.mxu0 %v956
        %1411 = vmatprep.subr.mxu0 0.0
        %1412 = vmatpush1.msra.mxu0 0.0
        %1413 = vmatprep.subr.mxu0 0.0
        %1414 = vmatpush1.msra.mxu0 0.0
        %1415 = vmatprep.subr.mxu0 0.0
        %1416 = vmatpush1.msra.mxu0 0.0
        %1417 = vmatprep.subr.mxu0 0.0
        %1418 = vmatpush1.msra.mxu0 0.0
        %1419 = vmatprep.subr.mxu0 0.0
        %1420 = vmatpush1.msra.mxu0 0.0
        %1421 = vmatprep.subr.mxu0 0.0
        %1422 = vmatpush1.msra.mxu0 0.0
        %1423 = vmatprep.subr.mxu0 0.0
        %1424 = vmatpush1.msra.mxu0 0.0
        %1425 = vmatprep.subr.mxu0 0.0
        %1426 = vmatpush1.msra.mxu0 0.0
        %1427 = vmatprep.subr.mxu0 0.0
        %1428 = vmatpush1.msra.mxu0 0.0
        %1429 = vmatprep.subr.mxu0 0.0
        %1430 = vmatpush1.msra.mxu0 0.0
        %1431 = vmatprep.subr.mxu0 0.0
        %1432 = vmatpush1.msra.mxu0 0.0
        %1433 = vmatprep.subr.mxu0 0.0
        %1434 = vmatpush1.msra.mxu0 0.0
        %1435 = vmatprep.subr.mxu0 0.0
        %1436 = vmatpush1.msra.mxu0 0.0
        %1437 = vmatprep.subr.mxu0 0.0
        %1438 = vmatpush1.msra.mxu0 0.0
        %1439 = vmatprep.subr.mxu0 0.0
        %1440 = vmatpush1.msra.mxu0 0.0
        %1441 = vmatprep.subr.mxu0 0.0
        %1442 = vmatpush1.msra.mxu0 0.0
        %1443 = vmatprep.subr.mxu0 0.0
        %1444 = vmatpush1.msra.mxu0 0.0
        %1445 = vmatprep.subr.mxu0 0.0
        %1446 = vmatpush1.msra.mxu0 0.0
        %1447 = vmatprep.subr.mxu0 0.0
        %1448 = vmatpush1.msra.mxu0 0.0
        %1449 = vmatprep.subr.mxu0 0.0
        %1450 = vmatpush1.msra.mxu0 0.0
        %1451 = vmatprep.subr.mxu0 0.0
        %1452 = vmatpush1.msra.mxu0 0.0
        %1453 = vmatprep.subr.mxu0 0.0
        %1454 = vmatpush1.msra.mxu0 0.0
        %1455 = vmatprep.subr.mxu0 0.0
        %1456 = vmatpush1.msra.mxu0 0.0
        %1457 = vmatprep.subr.mxu0 0.0
        %1458 = vmatpush1.msra.mxu0 0.0
        %1459 = vmatprep.mubr.f32.mxu0 0.0
        %1460 = vmatmul.mubr.f32.gmra.mrb[0].mxu0 %v1393
        %v1461 = vpop.f32.mrb[0].mxu0
        %v1462 = vadd.f32 %v962, %v1461
        %v1463 = vpop.f32.mrb[0].mxu0
        %1464 = vdwg.mxu0
        %v1465 = vsub.f32 %v1384, 1.0
        %vm1466 = vcmp.gt.f32.partialorder %v1465, 0.0
        %v1467 = vsel %vm1466, 1, 0
        %v1468 = vcvt.s32.f32 %v1467
        %v1469 = vmul.f32 %v1384, 0.9
        %v1470 = vadd.f32 %v1469, %v1462
        %v1471 = vsub.f32 %v1470, %v1468
        %v1472 = vsub.f32 %v1391, 1.0
        %vm1473 = vcmp.gt.f32.partialorder %v1472, 0.0
        %v1474 = vsel %vm1473, 1, 0
        %v1475 = vcvt.s32.f32 %v1474
        %v1476 = vmul.f32 %v1391, 0.9
        %v1477 = vadd.f32 %v1476, %v948
        %v1478 = vsub.f32 %v1477, %v1475
        %v1480 = vsel %vm934, %v1478, 0
        %1482 = vmatprep.subr.mxu0 0.0
        %1483 = vmatpush1.msra.mxu0 %v949
        %1484 = vmatprep.subr.mxu0 0.0
        %1485 = vmatpush1.msra.mxu0 %v950
        %1486 = vmatprep.subr.mxu0 0.0
        %1487 = vmatpush1.msra.mxu0 %v951
        %1488 = vmatprep.subr.mxu0 0.0
        %1489 = vmatpush1.msra.mxu0 %v952
        %1490 = vmatprep.subr.mxu0 0.0
        %1491 = vmatpush1.msra.mxu0 %v953
        %1492 = vmatprep.subr.mxu0 0.0
        %1493 = vmatpush1.msra.mxu0 %v954
        %1494 = vmatprep.subr.mxu0 0.0
        %1495 = vmatpush1.msra.mxu0 %v955
        %1496 = vmatprep.subr.mxu0 0.0
        %1497 = vmatpush1.msra.mxu0 %v956
        %1498 = vmatprep.subr.mxu0 0.0
        %1499 = vmatpush1.msra.mxu0 0.0
        %1500 = vmatprep.subr.mxu0 0.0
        %1501 = vmatpush1.msra.mxu0 0.0
        %1502 = vmatprep.subr.mxu0 0.0
        %1503 = vmatpush1.msra.mxu0 0.0
        %1504 = vmatprep.subr.mxu0 0.0
        %1505 = vmatpush1.msra.mxu0 0.0
        %1506 = vmatprep.subr.mxu0 0.0
        %1507 = vmatpush1.msra.mxu0 0.0
        %1508 = vmatprep.subr.mxu0 0.0
        %1509 = vmatpush1.msra.mxu0 0.0
        %1510 = vmatprep.subr.mxu0 0.0
        %1511 = vmatpush1.msra.mxu0 0.0
        %1512 = vmatprep.subr.mxu0 0.0
        %1513 = vmatpush1.msra.mxu0 0.0
        %1514 = vmatprep.subr.mxu0 0.0
        %1515 = vmatpush1.msra.mxu0 0.0
        %1516 = vmatprep.subr.mxu0 0.0
        %1517 = vmatpush1.msra.mxu0 0.0
        %1518 = vmatprep.subr.mxu0 0.0
        %1519 = vmatpush1.msra.mxu0 0.0
        %1520 = vmatprep.subr.mxu0 0.0
        %1521 = vmatpush1.msra.mxu0 0.0
        %1522 = vmatprep.subr.mxu0 0.0
        %1523 = vmatpush1.msra.mxu0 0.0
        %1524 = vmatprep.subr.mxu0 0.0
        %1525 = vmatpush1.msra.mxu0 0.0
        %1526 = vmatprep.subr.mxu0 0.0
        %1527 = vmatpush1.msra.mxu0 0.0
        %1528 = vmatprep.subr.mxu0 0.0
        %1529 = vmatpush1.msra.mxu0 0.0
        %1530 = vmatprep.subr.mxu0 0.0
        %1531 = vmatpush1.msra.mxu0 0.0
        %1532 = vmatprep.subr.mxu0 0.0
        %1533 = vmatpush1.msra.mxu0 0.0
        %1534 = vmatprep.subr.mxu0 0.0
        %1535 = vmatpush1.msra.mxu0 0.0
        %1536 = vmatprep.subr.mxu0 0.0
        %1537 = vmatpush1.msra.mxu0 0.0
        %1538 = vmatprep.subr.mxu0 0.0
        %1539 = vmatpush1.msra.mxu0 0.0
        %1540 = vmatprep.subr.mxu0 0.0
        %1541 = vmatpush1.msra.mxu0 0.0
        %1542 = vmatprep.subr.mxu0 0.0
        %1543 = vmatpush1.msra.mxu0 0.0
        %1544 = vmatprep.subr.mxu0 0.0
        %1545 = vmatpush1.msra.mxu0 0.0
        %1546 = vmatprep.mubr.f32.mxu0 0.0
        %1547 = vmatmul.mubr.f32.gmra.mrb[0].mxu0 %v1480
        %v1548 = vpop.f32.mrb[0].mxu0
        %v1549 = vadd.f32 %v962, %v1548
        %v1550 = vpop.f32.mrb[0].mxu0
        %1551 = vdwg.mxu0
        %v1552 = vsub.f32 %v1471, 1.0
        %vm1553 = vcmp.gt.f32.partialorder %v1552, 0.0
        %v1554 = vsel %vm1553, 1, 0
        %v1555 = vcvt.s32.f32 %v1554
        %v1556 = vmul.f32 %v1471, 0.9
        %v1557 = vadd.f32 %v1556, %v1549
        %v1558 = vsub.f32 %v1557, %v1555
        %v1559 = vsub.f32 %v1478, 1.0
        %vm1560 = vcmp.gt.f32.partialorder %v1559, 0.0
        %v1561 = vsel %vm1560, 1, 0
        %v1562 = vcvt.s32.f32 %v1561
        %v1563 = vmul.f32 %v1478, 0.9
        %v1564 = vadd.f32 %v1563, %v948
        %v1565 = vsub.f32 %v1564, %v1562
        %v1567 = vsel %vm934, %v1565, 0
        %1569 = vmatprep.subr.mxu0 0.0
        %1570 = vmatpush1.msra.mxu0 %v949
        %1571 = vmatprep.subr.mxu0 0.0
        %1572 = vmatpush1.msra.mxu0 %v950
        %1573 = vmatprep.subr.mxu0 0.0
        %1574 = vmatpush1.msra.mxu0 %v951
        %1575 = vmatprep.subr.mxu0 0.0
        %1576 = vmatpush1.msra.mxu0 %v952
        %1577 = vmatprep.subr.mxu0 0.0
        %1578 = vmatpush1.msra.mxu0 %v953
        %1579 = vmatprep.subr.mxu0 0.0
        %1580 = vmatpush1.msra.mxu0 %v954
        %1581 = vmatprep.subr.mxu0 0.0
        %1582 = vmatpush1.msra.mxu0 %v955
        %1583 = vmatprep.subr.mxu0 0.0
        %1584 = vmatpush1.msra.mxu0 %v956
        %1585 = vmatprep.subr.mxu0 0.0
        %1586 = vmatpush1.msra.mxu0 0.0
        %1587 = vmatprep.subr.mxu0 0.0
        %1588 = vmatpush1.msra.mxu0 0.0
        %1589 = vmatprep.subr.mxu0 0.0
        %1590 = vmatpush1.msra.mxu0 0.0
        %1591 = vmatprep.subr.mxu0 0.0
        %1592 = vmatpush1.msra.mxu0 0.0
        %1593 = vmatprep.subr.mxu0 0.0
        %1594 = vmatpush1.msra.mxu0 0.0
        %1595 = vmatprep.subr.mxu0 0.0
        %1596 = vmatpush1.msra.mxu0 0.0
        %1597 = vmatprep.subr.mxu0 0.0
        %1598 = vmatpush1.msra.mxu0 0.0
        %1599 = vmatprep.subr.mxu0 0.0
        %1600 = vmatpush1.msra.mxu0 0.0
        %1601 = vmatprep.subr.mxu0 0.0
        %1602 = vmatpush1.msra.mxu0 0.0
        %1603 = vmatprep.subr.mxu0 0.0
        %1604 = vmatpush1.msra.mxu0 0.0
        %1605 = vmatprep.subr.mxu0 0.0
        %1606 = vmatpush1.msra.mxu0 0.0
        %1607 = vmatprep.subr.mxu0 0.0
        %1608 = vmatpush1.msra.mxu0 0.0
        %1609 = vmatprep.subr.mxu0 0.0
        %1610 = vmatpush1.msra.mxu0 0.0
        %1611 = vmatprep.subr.mxu0 0.0
        %1612 = vmatpush1.msra.mxu0 0.0
        %1613 = vmatprep.subr.mxu0 0.0
        %1614 = vmatpush1.msra.mxu0 0.0
        %1615 = vmatprep.subr.mxu0 0.0
        %1616 = vmatpush1.msra.mxu0 0.0
        %1617 = vmatprep.subr.mxu0 0.0
        %1618 = vmatpush1.msra.mxu0 0.0
        %1619 = vmatprep.subr.mxu0 0.0
        %1620 = vmatpush1.msra.mxu0 0.0
        %1621 = vmatprep.subr.mxu0 0.0
        %1622 = vmatpush1.msra.mxu0 0.0
        %1623 = vmatprep.subr.mxu0 0.0
        %1624 = vmatpush1.msra.mxu0 0.0
        %1625 = vmatprep.subr.mxu0 0.0
        %1626 = vmatpush1.msra.mxu0 0.0
        %1627 = vmatprep.subr.mxu0 0.0
        %1628 = vmatpush1.msra.mxu0 0.0
        %1629 = vmatprep.subr.mxu0 0.0
        %1630 = vmatpush1.msra.mxu0 0.0
        %1631 = vmatprep.subr.mxu0 0.0
        %1632 = vmatpush1.msra.mxu0 0.0
        %1633 = vmatprep.mubr.f32.mxu0 0.0
        %1634 = vmatmul.mubr.f32.gmra.mrb[0].mxu0 %v1567
        %v1635 = vpop.f32.mrb[0].mxu0
        %v1636 = vadd.f32 %v962, %v1635
        %v1637 = vpop.f32.mrb[0].mxu0
        %1638 = vdwg.mxu0
        %v1639 = vsub.f32 %v1558, 1.0
        %vm1640 = vcmp.gt.f32.partialorder %v1639, 0.0
        %v1641 = vsel %vm1640, 1, 0
        %v1642 = vcvt.s32.f32 %v1641
        %v1643 = vmul.f32 %v1558, 0.9
        %v1644 = vadd.f32 %v1643, %v1636
        %v1645 = vsub.f32 %v1644, %v1642
        %v1646 = vsub.f32 %v1565, 1.0
        %vm1647 = vcmp.gt.f32.partialorder %v1646, 0.0
        %v1648 = vsel %vm1647, 1, 0
        %v1649 = vcvt.s32.f32 %v1648
        %v1650 = vmul.f32 %v1565, 0.9
        %v1651 = vadd.f32 %v1650, %v948
        %v1652 = vsub.f32 %v1651, %v1649
        %v1654 = vsel %vm934, %v1652, 0
        %1656 = vmatprep.subr.mxu0 0.0
        %1657 = vmatpush1.msra.mxu0 %v949
        %1658 = vmatprep.subr.mxu0 0.0
        %1659 = vmatpush1.msra.mxu0 %v950
        %1660 = vmatprep.subr.mxu0 0.0
        %1661 = vmatpush1.msra.mxu0 %v951
        %1662 = vmatprep.subr.mxu0 0.0
        %1663 = vmatpush1.msra.mxu0 %v952
        %1664 = vmatprep.subr.mxu0 0.0
        %1665 = vmatpush1.msra.mxu0 %v953
        %1666 = vmatprep.subr.mxu0 0.0
        %1667 = vmatpush1.msra.mxu0 %v954
        %1668 = vmatprep.subr.mxu0 0.0
        %1669 = vmatpush1.msra.mxu0 %v955
        %1670 = vmatprep.subr.mxu0 0.0
        %1671 = vmatpush1.msra.mxu0 %v956
        %1672 = vmatprep.subr.mxu0 0.0
        %1673 = vmatpush1.msra.mxu0 0.0
        %1674 = vmatprep.subr.mxu0 0.0
        %1675 = vmatpush1.msra.mxu0 0.0
        %1676 = vmatprep.subr.mxu0 0.0
        %1677 = vmatpush1.msra.mxu0 0.0
        %1678 = vmatprep.subr.mxu0 0.0
        %1679 = vmatpush1.msra.mxu0 0.0
        %1680 = vmatprep.subr.mxu0 0.0
        %1681 = vmatpush1.msra.mxu0 0.0
        %1682 = vmatprep.subr.mxu0 0.0
        %1683 = vmatpush1.msra.mxu0 0.0
        %1684 = vmatprep.subr.mxu0 0.0
        %1685 = vmatpush1.msra.mxu0 0.0
        %1686 = vmatprep.subr.mxu0 0.0
        %1687 = vmatpush1.msra.mxu0 0.0
        %1688 = vmatprep.subr.mxu0 0.0
        %1689 = vmatpush1.msra.mxu0 0.0
        %1690 = vmatprep.subr.mxu0 0.0
        %1691 = vmatpush1.msra.mxu0 0.0
        %1692 = vmatprep.subr.mxu0 0.0
        %1693 = vmatpush1.msra.mxu0 0.0
        %1694 = vmatprep.subr.mxu0 0.0
        %1695 = vmatpush1.msra.mxu0 0.0
        %1696 = vmatprep.subr.mxu0 0.0
        %1697 = vmatpush1.msra.mxu0 0.0
        %1698 = vmatprep.subr.mxu0 0.0
        %1699 = vmatpush1.msra.mxu0 0.0
        %1700 = vmatprep.subr.mxu0 0.0
        %1701 = vmatpush1.msra.mxu0 0.0
        %1702 = vmatprep.subr.mxu0 0.0
        %1703 = vmatpush1.msra.mxu0 0.0
        %1704 = vmatprep.subr.mxu0 0.0
        %1705 = vmatpush1.msra.mxu0 0.0
        %1706 = vmatprep.subr.mxu0 0.0
        %1707 = vmatpush1.msra.mxu0 0.0
        %1708 = vmatprep.subr.mxu0 0.0
        %1709 = vmatpush1.msra.mxu0 0.0
        %1710 = vmatprep.subr.mxu0 0.0
        %1711 = vmatpush1.msra.mxu0 0.0
        %1712 = vmatprep.subr.mxu0 0.0
        %1713 = vmatpush1.msra.mxu0 0.0
        %1714 = vmatprep.subr.mxu0 0.0
        %1715 = vmatpush1.msra.mxu0 0.0
        %1716 = vmatprep.subr.mxu0 0.0
        %1717 = vmatpush1.msra.mxu0 0.0
        %1718 = vmatprep.subr.mxu0 0.0
        %1719 = vmatpush1.msra.mxu0 0.0
        %1720 = vmatprep.mubr.f32.mxu0 0.0
        %1721 = vmatmul.mubr.f32.gmra.mrb[0].mxu0 %v1654
        %v1722 = vpop.f32.mrb[0].mxu0
        %v1723 = vadd.f32 %v962, %v1722
        %v1724 = vpop.f32.mrb[0].mxu0
        %1725 = vdwg.mxu0
        %v1726 = vsub.f32 %v1645, 1.0
        %vm1727 = vcmp.gt.f32.partialorder %v1726, 0.0
        %v1728 = vsel %vm1727, 1, 0
        %v1729 = vcvt.s32.f32 %v1728
        %v1730 = vmul.f32 %v1645, 0.9
        %v1731 = vadd.f32 %v1730, %v1723
        %v1732 = vsub.f32 %v1731, %v1729
        %v1733 = vsub.f32 %v1652, 1.0
        %vm1734 = vcmp.gt.f32.partialorder %v1733, 0.0
        %v1735 = vsel %vm1734, 1, 0
        %v1736 = vcvt.s32.f32 %v1735
        %v1737 = vmul.f32 %v1652, 0.9
        %v1738 = vadd.f32 %v1737, %v948
        %v1739 = vsub.f32 %v1738, %v1736
        %v1741 = vsel %vm934, %v1739, 0
        %1743 = vmatprep.subr.mxu0 0.0
        %1744 = vmatpush1.msra.mxu0 %v949
        %1745 = vmatprep.subr.mxu0 0.0
        %1746 = vmatpush1.msra.mxu0 %v950
        %1747 = vmatprep.subr.mxu0 0.0
        %1748 = vmatpush1.msra.mxu0 %v951
        %1749 = vmatprep.subr.mxu0 0.0
        %1750 = vmatpush1.msra.mxu0 %v952
        %1751 = vmatprep.subr.mxu0 0.0
        %1752 = vmatpush1.msra.mxu0 %v953
        %1753 = vmatprep.subr.mxu0 0.0
        %1754 = vmatpush1.msra.mxu0 %v954
        %1755 = vmatprep.subr.mxu0 0.0
        %1756 = vmatpush1.msra.mxu0 %v955
        %1757 = vmatprep.subr.mxu0 0.0
        %1758 = vmatpush1.msra.mxu0 %v956
        %1759 = vmatprep.subr.mxu0 0.0
        %1760 = vmatpush1.msra.mxu0 0.0
        %1761 = vmatprep.subr.mxu0 0.0
        %1762 = vmatpush1.msra.mxu0 0.0
        %1763 = vmatprep.subr.mxu0 0.0
        %1764 = vmatpush1.msra.mxu0 0.0
        %1765 = vmatprep.subr.mxu0 0.0
        %1766 = vmatpush1.msra.mxu0 0.0
        %1767 = vmatprep.subr.mxu0 0.0
        %1768 = vmatpush1.msra.mxu0 0.0
        %1769 = vmatprep.subr.mxu0 0.0
        %1770 = vmatpush1.msra.mxu0 0.0
        %1771 = vmatprep.subr.mxu0 0.0
        %1772 = vmatpush1.msra.mxu0 0.0
        %1773 = vmatprep.subr.mxu0 0.0
        %1774 = vmatpush1.msra.mxu0 0.0
        %1775 = vmatprep.subr.mxu0 0.0
        %1776 = vmatpush1.msra.mxu0 0.0
        %1777 = vmatprep.subr.mxu0 0.0
        %1778 = vmatpush1.msra.mxu0 0.0
        %1779 = vmatprep.subr.mxu0 0.0
        %1780 = vmatpush1.msra.mxu0 0.0
        %1781 = vmatprep.subr.mxu0 0.0
        %1782 = vmatpush1.msra.mxu0 0.0
        %1783 = vmatprep.subr.mxu0 0.0
        %1784 = vmatpush1.msra.mxu0 0.0
        %1785 = vmatprep.subr.mxu0 0.0
        %1786 = vmatpush1.msra.mxu0 0.0
        %1787 = vmatprep.subr.mxu0 0.0
        %1788 = vmatpush1.msra.mxu0 0.0
        %1789 = vmatprep.subr.mxu0 0.0
        %1790 = vmatpush1.msra.mxu0 0.0
        %1791 = vmatprep.subr.mxu0 0.0
        %1792 = vmatpush1.msra.mxu0 0.0
        %1793 = vmatprep.subr.mxu0 0.0
        %1794 = vmatpush1.msra.mxu0 0.0
        %1795 = vmatprep.subr.mxu0 0.0
        %1796 = vmatpush1.msra.mxu0 0.0
        %1797 = vmatprep.subr.mxu0 0.0
        %1798 = vmatpush1.msra.mxu0 0.0
        %1799 = vmatprep.subr.mxu0 0.0
        %1800 = vmatpush1.msra.mxu0 0.0
        %1801 = vmatprep.subr.mxu0 0.0
        %1802 = vmatpush1.msra.mxu0 0.0
        %1803 = vmatprep.subr.mxu0 0.0
        %1804 = vmatpush1.msra.mxu0 0.0
        %1805 = vmatprep.subr.mxu0 0.0
        %1806 = vmatpush1.msra.mxu0 0.0
        %1807 = vmatprep.mubr.f32.mxu0 0.0
        %1808 = vmatmul.mubr.f32.gmra.mrb[0].mxu0 %v1741
        %v1809 = vpop.f32.mrb[0].mxu0
        %v1810 = vadd.f32 %v962, %v1809
        %v1811 = vpop.f32.mrb[0].mxu0
        %1812 = vdwg.mxu0
        %v1813 = vsub.f32 %v1732, 1.0
        %vm1814 = vcmp.gt.f32.partialorder %v1813, 0.0
        %v1815 = vsel %vm1814, 1, 0
        %v1816 = vcvt.s32.f32 %v1815
        %v1817 = vmul.f32 %v1732, 0.9
        %v1818 = vadd.f32 %v1817, %v1810
        %v1819 = vsub.f32 %v1818, %v1816
        %v1820 = vsub.f32 %v1739, 1.0
        %vm1821 = vcmp.gt.f32.partialorder %v1820, 0.0
        %v1822 = vsel %vm1821, 1, 0
        %v1823 = vcvt.s32.f32 %v1822
        %v1824 = vmul.f32 %v1739, 0.9
        %v1825 = vadd.f32 %v1824, %v948
        %v1826 = vsub.f32 %v1825, %v1823
        %v1828 = vsel %vm934, %v1826, 0
        %1830 = vmatprep.subr.mxu0 0.0
        %1831 = vmatpush1.msra.mxu0 %v949
        %1832 = vmatprep.subr.mxu0 0.0
        %1833 = vmatpush1.msra.mxu0 %v950
        %1834 = vmatprep.subr.mxu0 0.0
        %1835 = vmatpush1.msra.mxu0 %v951
        %1836 = vmatprep.subr.mxu0 0.0
        %1837 = vmatpush1.msra.mxu0 %v952
        %1838 = vmatprep.subr.mxu0 0.0
        %1839 = vmatpush1.msra.mxu0 %v953
        %1840 = vmatprep.subr.mxu0 0.0
        %1841 = vmatpush1.msra.mxu0 %v954
        %1842 = vmatprep.subr.mxu0 0.0
        %1843 = vmatpush1.msra.mxu0 %v955
        %1844 = vmatprep.subr.mxu0 0.0
        %1845 = vmatpush1.msra.mxu0 %v956
        %1846 = vmatprep.subr.mxu0 0.0
        %1847 = vmatpush1.msra.mxu0 0.0
        %1848 = vmatprep.subr.mxu0 0.0
        %1849 = vmatpush1.msra.mxu0 0.0
        %1850 = vmatprep.subr.mxu0 0.0
        %1851 = vmatpush1.msra.mxu0 0.0
        %1852 = vmatprep.subr.mxu0 0.0
        %1853 = vmatpush1.msra.mxu0 0.0
        %1854 = vmatprep.subr.mxu0 0.0
        %1855 = vmatpush1.msra.mxu0 0.0
        %1856 = vmatprep.subr.mxu0 0.0
        %1857 = vmatpush1.msra.mxu0 0.0
        %1858 = vmatprep.subr.mxu0 0.0
        %1859 = vmatpush1.msra.mxu0 0.0
        %1860 = vmatprep.subr.mxu0 0.0
        %1861 = vmatpush1.msra.mxu0 0.0
        %1862 = vmatprep.subr.mxu0 0.0
        %1863 = vmatpush1.msra.mxu0 0.0
        %1864 = vmatprep.subr.mxu0 0.0
        %1865 = vmatpush1.msra.mxu0 0.0
        %1866 = vmatprep.subr.mxu0 0.0
        %1867 = vmatpush1.msra.mxu0 0.0
        %1868 = vmatprep.subr.mxu0 0.0
        %1869 = vmatpush1.msra.mxu0 0.0
        %1870 = vmatprep.subr.mxu0 0.0
        %1871 = vmatpush1.msra.mxu0 0.0
        %1872 = vmatprep.subr.mxu0 0.0
        %1873 = vmatpush1.msra.mxu0 0.0
        %1874 = vmatprep.subr.mxu0 0.0
        %1875 = vmatpush1.msra.mxu0 0.0
        %1876 = vmatprep.subr.mxu0 0.0
        %1877 = vmatpush1.msra.mxu0 0.0
        %1878 = vmatprep.subr.mxu0 0.0
        %1879 = vmatpush1.msra.mxu0 0.0
        %1880 = vmatprep.subr.mxu0 0.0
        %1881 = vmatpush1.msra.mxu0 0.0
        %1882 = vmatprep.subr.mxu0 0.0
        %1883 = vmatpush1.msra.mxu0 0.0
        %1884 = vmatprep.subr.mxu0 0.0
        %1885 = vmatpush1.msra.mxu0 0.0
        %1886 = vmatprep.subr.mxu0 0.0
        %1887 = vmatpush1.msra.mxu0 0.0
        %1888 = vmatprep.subr.mxu0 0.0
        %1889 = vmatpush1.msra.mxu0 0.0
        %1890 = vmatprep.subr.mxu0 0.0
        %1891 = vmatpush1.msra.mxu0 0.0
        %1892 = vmatprep.subr.mxu0 0.0
        %1893 = vmatpush1.msra.mxu0 0.0
        %1894 = vmatprep.mubr.f32.mxu0 0.0
        %1895 = vmatmul.mubr.f32.gmra.mrb[0].mxu0 %v1828
        %v1896 = vpop.f32.mrb[0].mxu0
        %v1897 = vadd.f32 %v962, %v1896
        %v1898 = vpop.f32.mrb[0].mxu0
        %1899 = vdwg.mxu0
        %v1900 = vsub.f32 %v1819, 1.0
        %vm1901 = vcmp.gt.f32.partialorder %v1900, 0.0
        %v1902 = vsel %vm1901, 1, 0
        %v1903 = vcvt.s32.f32 %v1902
        %v1904 = vmul.f32 %v1819, 0.9
        %v1905 = vadd.f32 %v1904, %v1897
        %v1906 = vsub.f32 %v1905, %v1903
        %v1907 = vsub.f32 %v1826, 1.0
        %vm1908 = vcmp.gt.f32.partialorder %v1907, 0.0
        %v1909 = vsel %vm1908, 1, 0
        %v1910 = vcvt.s32.f32 %v1909
        %v1911 = vmul.f32 %v1826, 0.9
        %v1912 = vadd.f32 %v1911, %v948
        %v1913 = vsub.f32 %v1912, %v1910
        %v1915 = vsel %vm934, %v1913, 0
        %1917 = vmatprep.subr.mxu0 0.0
        %1918 = vmatpush1.msra.mxu0 %v949
        %1919 = vmatprep.subr.mxu0 0.0
        %1920 = vmatpush1.msra.mxu0 %v950
        %1921 = vmatprep.subr.mxu0 0.0
        %1922 = vmatpush1.msra.mxu0 %v951
        %1923 = vmatprep.subr.mxu0 0.0
        %1924 = vmatpush1.msra.mxu0 %v952
        %1925 = vmatprep.subr.mxu0 0.0
        %1926 = vmatpush1.msra.mxu0 %v953
        %1927 = vmatprep.subr.mxu0 0.0
        %1928 = vmatpush1.msra.mxu0 %v954
        %1929 = vmatprep.subr.mxu0 0.0
        %1930 = vmatpush1.msra.mxu0 %v955
        %1931 = vmatprep.subr.mxu0 0.0
        %1932 = vmatpush1.msra.mxu0 %v956
        %1933 = vmatprep.subr.mxu0 0.0
        %1934 = vmatpush1.msra.mxu0 0.0
        %1935 = vmatprep.subr.mxu0 0.0
        %1936 = vmatpush1.msra.mxu0 0.0
        %1937 = vmatprep.subr.mxu0 0.0
        %1938 = vmatpush1.msra.mxu0 0.0
        %1939 = vmatprep.subr.mxu0 0.0
        %1940 = vmatpush1.msra.mxu0 0.0
        %1941 = vmatprep.subr.mxu0 0.0
        %1942 = vmatpush1.msra.mxu0 0.0
        %1943 = vmatprep.subr.mxu0 0.0
        %1944 = vmatpush1.msra.mxu0 0.0
        %1945 = vmatprep.subr.mxu0 0.0
        %1946 = vmatpush1.msra.mxu0 0.0
        %1947 = vmatprep.subr.mxu0 0.0
        %1948 = vmatpush1.msra.mxu0 0.0
        %1949 = vmatprep.subr.mxu0 0.0
        %1950 = vmatpush1.msra.mxu0 0.0
        %1951 = vmatprep.subr.mxu0 0.0
        %1952 = vmatpush1.msra.mxu0 0.0
        %1953 = vmatprep.subr.mxu0 0.0
        %1954 = vmatpush1.msra.mxu0 0.0
        %1955 = vmatprep.subr.mxu0 0.0
        %1956 = vmatpush1.msra.mxu0 0.0
        %1957 = vmatprep.subr.mxu0 0.0
        %1958 = vmatpush1.msra.mxu0 0.0
        %1959 = vmatprep.subr.mxu0 0.0
        %1960 = vmatpush1.msra.mxu0 0.0
        %1961 = vmatprep.subr.mxu0 0.0
        %1962 = vmatpush1.msra.mxu0 0.0
        %1963 = vmatprep.subr.mxu0 0.0
        %1964 = vmatpush1.msra.mxu0 0.0
        %1965 = vmatprep.subr.mxu0 0.0
        %1966 = vmatpush1.msra.mxu0 0.0
        %1967 = vmatprep.subr.mxu0 0.0
        %1968 = vmatpush1.msra.mxu0 0.0
        %1969 = vmatprep.subr.mxu0 0.0
        %1970 = vmatpush1.msra.mxu0 0.0
        %1971 = vmatprep.subr.mxu0 0.0
        %1972 = vmatpush1.msra.mxu0 0.0
        %1973 = vmatprep.subr.mxu0 0.0
        %1974 = vmatpush1.msra.mxu0 0.0
        %1975 = vmatprep.subr.mxu0 0.0
        %1976 = vmatpush1.msra.mxu0 0.0
        %1977 = vmatprep.subr.mxu0 0.0
        %1978 = vmatpush1.msra.mxu0 0.0
        %1979 = vmatprep.subr.mxu0 0.0
        %1980 = vmatpush1.msra.mxu0 0.0
        %1981 = vmatprep.mubr.f32.mxu0 0.0
        %1982 = vmatmul.mubr.f32.gmra.mrb[0].mxu0 %v1915
        %v1983 = vpop.f32.mrb[0].mxu0
        %v1984 = vadd.f32 %v962, %v1983
        %v1985 = vpop.f32.mrb[0].mxu0
        %1986 = vdwg.mxu0
        %v1987 = vsub.f32 %v1906, 1.0
        %vm1988 = vcmp.gt.f32.partialorder %v1987, 0.0
        %v1989 = vsel %vm1988, 1, 0
        %v1990 = vcvt.s32.f32 %v1989
        %v1991 = vmul.f32 %v1906, 0.9
        %v1992 = vadd.f32 %v1991, %v1984
        %v1993 = vsub.f32 %v1992, %v1990
        %v1994 = vsub.f32 %v1913, 1.0
        %vm1995 = vcmp.gt.f32.partialorder %v1994, 0.0
        %v1996 = vsel %vm1995, 1, 0
        %v1997 = vcvt.s32.f32 %v1996
        %v1998 = vmul.f32 %v1913, 0.9
        %v1999 = vadd.f32 %v1998, %v948
        %v2000 = vsub.f32 %v1999, %v1997
        %v2002 = vsel %vm934, %v2000, 0
        %2004 = vmatprep.subr.mxu0 0.0
        %2005 = vmatpush1.msra.mxu0 %v949
        %2006 = vmatprep.subr.mxu0 0.0
        %2007 = vmatpush1.msra.mxu0 %v950
        %2008 = vmatprep.subr.mxu0 0.0
        %2009 = vmatpush1.msra.mxu0 %v951
        %2010 = vmatprep.subr.mxu0 0.0
        %2011 = vmatpush1.msra.mxu0 %v952
        %2012 = vmatprep.subr.mxu0 0.0
        %2013 = vmatpush1.msra.mxu0 %v953
        %2014 = vmatprep.subr.mxu0 0.0
        %2015 = vmatpush1.msra.mxu0 %v954
        %2016 = vmatprep.subr.mxu0 0.0
        %2017 = vmatpush1.msra.mxu0 %v955
        %2018 = vmatprep.subr.mxu0 0.0
        %2019 = vmatpush1.msra.mxu0 %v956
        %2020 = vmatprep.subr.mxu0 0.0
        %2021 = vmatpush1.msra.mxu0 0.0
        %2022 = vmatprep.subr.mxu0 0.0
        %2023 = vmatpush1.msra.mxu0 0.0
        %2024 = vmatprep.subr.mxu0 0.0
        %2025 = vmatpush1.msra.mxu0 0.0
        %2026 = vmatprep.subr.mxu0 0.0
        %2027 = vmatpush1.msra.mxu0 0.0
        %2028 = vmatprep.subr.mxu0 0.0
        %2029 = vmatpush1.msra.mxu0 0.0
        %2030 = vmatprep.subr.mxu0 0.0
        %2031 = vmatpush1.msra.mxu0 0.0
        %2032 = vmatprep.subr.mxu0 0.0
        %2033 = vmatpush1.msra.mxu0 0.0
        %2034 = vmatprep.subr.mxu0 0.0
        %2035 = vmatpush1.msra.mxu0 0.0
        %2036 = vmatprep.subr.mxu0 0.0
        %2037 = vmatpush1.msra.mxu0 0.0
        %2038 = vmatprep.subr.mxu0 0.0
        %2039 = vmatpush1.msra.mxu0 0.0
        %2040 = vmatprep.subr.mxu0 0.0
        %2041 = vmatpush1.msra.mxu0 0.0
        %2042 = vmatprep.subr.mxu0 0.0
        %2043 = vmatpush1.msra.mxu0 0.0
        %2044 = vmatprep.subr.mxu0 0.0
        %2045 = vmatpush1.msra.mxu0 0.0
        %2046 = vmatprep.subr.mxu0 0.0
        %2047 = vmatpush1.msra.mxu0 0.0
        %2048 = vmatprep.subr.mxu0 0.0
        %2049 = vmatpush1.msra.mxu0 0.0
        %2050 = vmatprep.subr.mxu0 0.0
        %2051 = vmatpush1.msra.mxu0 0.0
        %2052 = vmatprep.subr.mxu0 0.0
        %2053 = vmatpush1.msra.mxu0 0.0
        %2054 = vmatprep.subr.mxu0 0.0
        %2055 = vmatpush1.msra.mxu0 0.0
        %2056 = vmatprep.subr.mxu0 0.0
        %2057 = vmatpush1.msra.mxu0 0.0
        %2058 = vmatprep.subr.mxu0 0.0
        %2059 = vmatpush1.msra.mxu0 0.0
        %2060 = vmatprep.subr.mxu0 0.0
        %2061 = vmatpush1.msra.mxu0 0.0
        %2062 = vmatprep.subr.mxu0 0.0
        %2063 = vmatpush1.msra.mxu0 0.0
        %2064 = vmatprep.subr.mxu0 0.0
        %2065 = vmatpush1.msra.mxu0 0.0
        %2066 = vmatprep.subr.mxu0 0.0
        %2067 = vmatpush1.msra.mxu0 0.0
        %2068 = vmatprep.mubr.f32.mxu0 0.0
        %2069 = vmatmul.mubr.f32.gmra.mrb[0].mxu0 %v2002
        %v2070 = vpop.f32.mrb[0].mxu0
        %v2071 = vadd.f32 %v962, %v2070
        %v2072 = vpop.f32.mrb[0].mxu0
        %2073 = vdwg.mxu0
        %v2074 = vsub.f32 %v1993, 1.0
        %vm2075 = vcmp.gt.f32.partialorder %v2074, 0.0
        %v2076 = vsel %vm2075, 1, 0
        %v2077 = vcvt.s32.f32 %v2076
        %v2078 = vmul.f32 %v1993, 0.9
        %v2079 = vadd.f32 %v2078, %v2071
        %v2080 = vsub.f32 %v2079, %v2077
        %v2081 = vsub.f32 %v2000, 1.0
        %vm2082 = vcmp.gt.f32.partialorder %v2081, 0.0
        %v2083 = vsel %vm2082, 1, 0
        %v2084 = vcvt.s32.f32 %v2083
        %v2085 = vmul.f32 %v2000, 0.9
        %v2086 = vadd.f32 %v2085, %v948
        %v2087 = vsub.f32 %v2086, %v2084
        %v2089 = vsel %vm934, %v2087, 0
        %2091 = vmatprep.subr.mxu0 0.0
        %2092 = vmatpush1.msra.mxu0 %v949
        %2093 = vmatprep.subr.mxu0 0.0
        %2094 = vmatpush1.msra.mxu0 %v950
        %2095 = vmatprep.subr.mxu0 0.0
        %2096 = vmatpush1.msra.mxu0 %v951
        %2097 = vmatprep.subr.mxu0 0.0
        %2098 = vmatpush1.msra.mxu0 %v952
        %2099 = vmatprep.subr.mxu0 0.0
        %2100 = vmatpush1.msra.mxu0 %v953
        %2101 = vmatprep.subr.mxu0 0.0
        %2102 = vmatpush1.msra.mxu0 %v954
        %2103 = vmatprep.subr.mxu0 0.0
        %2104 = vmatpush1.msra.mxu0 %v955
        %2105 = vmatprep.subr.mxu0 0.0
        %2106 = vmatpush1.msra.mxu0 %v956
        %2107 = vmatprep.subr.mxu0 0.0
        %2108 = vmatpush1.msra.mxu0 0.0
        %2109 = vmatprep.subr.mxu0 0.0
        %2110 = vmatpush1.msra.mxu0 0.0
        %2111 = vmatprep.subr.mxu0 0.0
        %2112 = vmatpush1.msra.mxu0 0.0
        %2113 = vmatprep.subr.mxu0 0.0
        %2114 = vmatpush1.msra.mxu0 0.0
        %2115 = vmatprep.subr.mxu0 0.0
        %2116 = vmatpush1.msra.mxu0 0.0
        %2117 = vmatprep.subr.mxu0 0.0
        %2118 = vmatpush1.msra.mxu0 0.0
        %2119 = vmatprep.subr.mxu0 0.0
        %2120 = vmatpush1.msra.mxu0 0.0
        %2121 = vmatprep.subr.mxu0 0.0
        %2122 = vmatpush1.msra.mxu0 0.0
        %2123 = vmatprep.subr.mxu0 0.0
        %2124 = vmatpush1.msra.mxu0 0.0
        %2125 = vmatprep.subr.mxu0 0.0
        %2126 = vmatpush1.msra.mxu0 0.0
        %2127 = vmatprep.subr.mxu0 0.0
        %2128 = vmatpush1.msra.mxu0 0.0
        %2129 = vmatprep.subr.mxu0 0.0
        %2130 = vmatpush1.msra.mxu0 0.0
        %2131 = vmatprep.subr.mxu0 0.0
        %2132 = vmatpush1.msra.mxu0 0.0
        %2133 = vmatprep.subr.mxu0 0.0
        %2134 = vmatpush1.msra.mxu0 0.0
        %2135 = vmatprep.subr.mxu0 0.0
        %2136 = vmatpush1.msra.mxu0 0.0
        %2137 = vmatprep.subr.mxu0 0.0
        %2138 = vmatpush1.msra.mxu0 0.0
        %2139 = vmatprep.subr.mxu0 0.0
        %2140 = vmatpush1.msra.mxu0 0.0
        %2141 = vmatprep.subr.mxu0 0.0
        %2142 = vmatpush1.msra.mxu0 0.0
        %2143 = vmatprep.subr.mxu0 0.0
        %2144 = vmatpush1.msra.mxu0 0.0
        %2145 = vmatprep.subr.mxu0 0.0
        %2146 = vmatpush1.msra.mxu0 0.0
        %2147 = vmatprep.subr.mxu0 0.0
        %2148 = vmatpush1.msra.mxu0 0.0
        %2149 = vmatprep.subr.mxu0 0.0
        %2150 = vmatpush1.msra.mxu0 0.0
        %2151 = vmatprep.subr.mxu0 0.0
        %2152 = vmatpush1.msra.mxu0 0.0
        %2153 = vmatprep.subr.mxu0 0.0
        %2154 = vmatpush1.msra.mxu0 0.0
        %2155 = vmatprep.mubr.f32.mxu0 0.0
        %2156 = vmatmul.mubr.f32.gmra.mrb[0].mxu0 %v2089
        %v2157 = vpop.f32.mrb[0].mxu0
        %v2158 = vadd.f32 %v962, %v2157
        %v2159 = vpop.f32.mrb[0].mxu0
        %2160 = vdwg.mxu0
        %v2161 = vsub.f32 %v2080, 1.0
        %vm2162 = vcmp.gt.f32.partialorder %v2161, 0.0
        %v2163 = vsel %vm2162, 1, 0
        %v2164 = vcvt.s32.f32 %v2163
        %v2165 = vmul.f32 %v2080, 0.9
        %v2166 = vadd.f32 %v2165, %v2158
        %v2167 = vsub.f32 %v2166, %v2164
        %v2168 = vsub.f32 %v2087, 1.0
        %vm2169 = vcmp.gt.f32.partialorder %v2168, 0.0
        %v2170 = vsel %vm2169, 1, 0
        %v2171 = vcvt.s32.f32 %v2170
        %v2172 = vmul.f32 %v2087, 0.9
        %v2173 = vadd.f32 %v2172, %v948
        %v2174 = vsub.f32 %v2173, %v2171
        %v2176 = vsel %vm934, %v2174, 0
        %2178 = vmatprep.subr.mxu0 0.0
        %2179 = vmatpush1.msra.mxu0 %v949
        %2180 = vmatprep.subr.mxu0 0.0
        %2181 = vmatpush1.msra.mxu0 %v950
        %2182 = vmatprep.subr.mxu0 0.0
        %2183 = vmatpush1.msra.mxu0 %v951
        %2184 = vmatprep.subr.mxu0 0.0
        %2185 = vmatpush1.msra.mxu0 %v952
        %2186 = vmatprep.subr.mxu0 0.0
        %2187 = vmatpush1.msra.mxu0 %v953
        %2188 = vmatprep.subr.mxu0 0.0
        %2189 = vmatpush1.msra.mxu0 %v954
        %2190 = vmatprep.subr.mxu0 0.0
        %2191 = vmatpush1.msra.mxu0 %v955
        %2192 = vmatprep.subr.mxu0 0.0
        %2193 = vmatpush1.msra.mxu0 %v956
        %2194 = vmatprep.subr.mxu0 0.0
        %2195 = vmatpush1.msra.mxu0 0.0
        %2196 = vmatprep.subr.mxu0 0.0
        %2197 = vmatpush1.msra.mxu0 0.0
        %2198 = vmatprep.subr.mxu0 0.0
        %2199 = vmatpush1.msra.mxu0 0.0
        %2200 = vmatprep.subr.mxu0 0.0
        %2201 = vmatpush1.msra.mxu0 0.0
        %2202 = vmatprep.subr.mxu0 0.0
        %2203 = vmatpush1.msra.mxu0 0.0
        %2204 = vmatprep.subr.mxu0 0.0
        %2205 = vmatpush1.msra.mxu0 0.0
        %2206 = vmatprep.subr.mxu0 0.0
        %2207 = vmatpush1.msra.mxu0 0.0
        %2208 = vmatprep.subr.mxu0 0.0
        %2209 = vmatpush1.msra.mxu0 0.0
        %2210 = vmatprep.subr.mxu0 0.0
        %2211 = vmatpush1.msra.mxu0 0.0
        %2212 = vmatprep.subr.mxu0 0.0
        %2213 = vmatpush1.msra.mxu0 0.0
        %2214 = vmatprep.subr.mxu0 0.0
        %2215 = vmatpush1.msra.mxu0 0.0
        %2216 = vmatprep.subr.mxu0 0.0
        %2217 = vmatpush1.msra.mxu0 0.0
        %2218 = vmatprep.subr.mxu0 0.0
        %2219 = vmatpush1.msra.mxu0 0.0
        %2220 = vmatprep.subr.mxu0 0.0
        %2221 = vmatpush1.msra.mxu0 0.0
        %2222 = vmatprep.subr.mxu0 0.0
        %2223 = vmatpush1.msra.mxu0 0.0
        %2224 = vmatprep.subr.mxu0 0.0
        %2225 = vmatpush1.msra.mxu0 0.0
        %2226 = vmatprep.subr.mxu0 0.0
        %2227 = vmatpush1.msra.mxu0 0.0
        %2228 = vmatprep.subr.mxu0 0.0
        %2229 = vmatpush1.msra.mxu0 0.0
        %2230 = vmatprep.subr.mxu0 0.0
        %2231 = vmatpush1.msra.mxu0 0.0
        %2232 = vmatprep.subr.mxu0 0.0
        %2233 = vmatpush1.msra.mxu0 0.0
        %2234 = vmatprep.subr.mxu0 0.0
        %2235 = vmatpush1.msra.mxu0 0.0
        %2236 = vmatprep.subr.mxu0 0.0
        %2237 = vmatpush1.msra.mxu0 0.0
        %2238 = vmatprep.subr.mxu0 0.0
        %2239 = vmatpush1.msra.mxu0 0.0
        %2240 = vmatprep.subr.mxu0 0.0
        %2241 = vmatpush1.msra.mxu0 0.0
        %2242 = vmatprep.mubr.f32.mxu0 0.0
        %2243 = vmatmul.mubr.f32.gmra.mrb[0].mxu0 %v2176
        %v2244 = vpop.f32.mrb[0].mxu0
        %v2245 = vadd.f32 %v962, %v2244
        %v2246 = vpop.f32.mrb[0].mxu0
        %2247 = vdwg.mxu0
        %v2248 = vsub.f32 %v2167, 1.0
        %vm2249 = vcmp.gt.f32.partialorder %v2248, 0.0
        %v2250 = vsel %vm2249, 1, 0
        %v2251 = vcvt.s32.f32 %v2250
        %v2252 = vmul.f32 %v2167, 0.9
        %v2253 = vadd.f32 %v2252, %v2245
        %v2254 = vsub.f32 %v2253, %v2251
        %v2255 = vsub.f32 %v2174, 1.0
        %vm2256 = vcmp.gt.f32.partialorder %v2255, 0.0
        %v2257 = vsel %vm2256, 1, 0
        %v2258 = vcvt.s32.f32 %v2257
        %v2259 = vmul.f32 %v2174, 0.9
        %v2260 = vadd.f32 %v2259, %v948
        %v2261 = vsub.f32 %v2260, %v2258
        %v2263 = vsel %vm934, %v2261, 0
        %2265 = vmatprep.subr.mxu0 0.0
        %2266 = vmatpush1.msra.mxu0 %v949
        %2267 = vmatprep.subr.mxu0 0.0
        %2268 = vmatpush1.msra.mxu0 %v950
        %2269 = vmatprep.subr.mxu0 0.0
        %2270 = vmatpush1.msra.mxu0 %v951
        %2271 = vmatprep.subr.mxu0 0.0
        %2272 = vmatpush1.msra.mxu0 %v952
        %2273 = vmatprep.subr.mxu0 0.0
        %2274 = vmatpush1.msra.mxu0 %v953
        %2275 = vmatprep.subr.mxu0 0.0
        %2276 = vmatpush1.msra.mxu0 %v954
        %2277 = vmatprep.subr.mxu0 0.0
        %2278 = vmatpush1.msra.mxu0 %v955
        %2279 = vmatprep.subr.mxu0 0.0
        %2280 = vmatpush1.msra.mxu0 %v956
        %2281 = vmatprep.subr.mxu0 0.0
        %2282 = vmatpush1.msra.mxu0 0.0
        %2283 = vmatprep.subr.mxu0 0.0
        %2284 = vmatpush1.msra.mxu0 0.0
        %2285 = vmatprep.subr.mxu0 0.0
        %2286 = vmatpush1.msra.mxu0 0.0
        %2287 = vmatprep.subr.mxu0 0.0
        %2288 = vmatpush1.msra.mxu0 0.0
        %2289 = vmatprep.subr.mxu0 0.0
        %2290 = vmatpush1.msra.mxu0 0.0
        %2291 = vmatprep.subr.mxu0 0.0
        %2292 = vmatpush1.msra.mxu0 0.0
        %2293 = vmatprep.subr.mxu0 0.0
        %2294 = vmatpush1.msra.mxu0 0.0
        %2295 = vmatprep.subr.mxu0 0.0
        %2296 = vmatpush1.msra.mxu0 0.0
        %2297 = vmatprep.subr.mxu0 0.0
        %2298 = vmatpush1.msra.mxu0 0.0
        %2299 = vmatprep.subr.mxu0 0.0
        %2300 = vmatpush1.msra.mxu0 0.0
        %2301 = vmatprep.subr.mxu0 0.0
        %2302 = vmatpush1.msra.mxu0 0.0
        %2303 = vmatprep.subr.mxu0 0.0
        %2304 = vmatpush1.msra.mxu0 0.0
        %2305 = vmatprep.subr.mxu0 0.0
        %2306 = vmatpush1.msra.mxu0 0.0
        %2307 = vmatprep.subr.mxu0 0.0
        %2308 = vmatpush1.msra.mxu0 0.0
        %2309 = vmatprep.subr.mxu0 0.0
        %2310 = vmatpush1.msra.mxu0 0.0
        %2311 = vmatprep.subr.mxu0 0.0
        %2312 = vmatpush1.msra.mxu0 0.0
        %2313 = vmatprep.subr.mxu0 0.0
        %2314 = vmatpush1.msra.mxu0 0.0
        %2315 = vmatprep.subr.mxu0 0.0
        %2316 = vmatpush1.msra.mxu0 0.0
        %2317 = vmatprep.subr.mxu0 0.0
        %2318 = vmatpush1.msra.mxu0 0.0
        %2319 = vmatprep.subr.mxu0 0.0
        %2320 = vmatpush1.msra.mxu0 0.0
        %2321 = vmatprep.subr.mxu0 0.0
        %2322 = vmatpush1.msra.mxu0 0.0
        %2323 = vmatprep.subr.mxu0 0.0
        %2324 = vmatpush1.msra.mxu0 0.0
        %2325 = vmatprep.subr.mxu0 0.0
        %2326 = vmatpush1.msra.mxu0 0.0
        %2327 = vmatprep.subr.mxu0 0.0
        %2328 = vmatpush1.msra.mxu0 0.0
        %2329 = vmatprep.mubr.f32.mxu0 0.0
        %2330 = vmatmul.mubr.f32.gmra.mrb[0].mxu0 %v2263
        %v2331 = vpop.f32.mrb[0].mxu0
        %v2332 = vadd.f32 %v962, %v2331
        %v2333 = vpop.f32.mrb[0].mxu0
        %2334 = vdwg.mxu0
        %v2335 = vsub.f32 %v2254, 1.0
        %vm2336 = vcmp.gt.f32.partialorder %v2335, 0.0
        %v2337 = vsel %vm2336, 1, 0
        %v2338 = vcvt.s32.f32 %v2337
        %v2339 = vmul.f32 %v2254, 0.9
        %v2340 = vadd.f32 %v2339, %v2332
        %v2341 = vsub.f32 %v2340, %v2338
        %v2342 = vsub.f32 %v2261, 1.0
        %vm2343 = vcmp.gt.f32.partialorder %v2342, 0.0
        %v2344 = vsel %vm2343, 1, 0
        %v2345 = vcvt.s32.f32 %v2344
        %v2346 = vmul.f32 %v2261, 0.9
        %v2347 = vadd.f32 %v2346, %v948
        %v2348 = vsub.f32 %v2347, %v2345
        %v2350 = vsel %vm934, %v2348, 0
        %2352 = vmatprep.subr.mxu0 0.0
        %2353 = vmatpush1.msra.mxu0 %v949
        %2354 = vmatprep.subr.mxu0 0.0
        %2355 = vmatpush1.msra.mxu0 %v950
        %2356 = vmatprep.subr.mxu0 0.0
        %2357 = vmatpush1.msra.mxu0 %v951
        %2358 = vmatprep.subr.mxu0 0.0
        %2359 = vmatpush1.msra.mxu0 %v952
        %2360 = vmatprep.subr.mxu0 0.0
        %2361 = vmatpush1.msra.mxu0 %v953
        %2362 = vmatprep.subr.mxu0 0.0
        %2363 = vmatpush1.msra.mxu0 %v954
        %2364 = vmatprep.subr.mxu0 0.0
        %2365 = vmatpush1.msra.mxu0 %v955
        %2366 = vmatprep.subr.mxu0 0.0
        %2367 = vmatpush1.msra.mxu0 %v956
        %2368 = vmatprep.subr.mxu0 0.0
        %2369 = vmatpush1.msra.mxu0 0.0
        %2370 = vmatprep.subr.mxu0 0.0
        %2371 = vmatpush1.msra.mxu0 0.0
        %2372 = vmatprep.subr.mxu0 0.0
        %2373 = vmatpush1.msra.mxu0 0.0
        %2374 = vmatprep.subr.mxu0 0.0
        %2375 = vmatpush1.msra.mxu0 0.0
        %2376 = vmatprep.subr.mxu0 0.0
        %2377 = vmatpush1.msra.mxu0 0.0
        %2378 = vmatprep.subr.mxu0 0.0
        %2379 = vmatpush1.msra.mxu0 0.0
        %2380 = vmatprep.subr.mxu0 0.0
        %2381 = vmatpush1.msra.mxu0 0.0
        %2382 = vmatprep.subr.mxu0 0.0
        %2383 = vmatpush1.msra.mxu0 0.0
        %2384 = vmatprep.subr.mxu0 0.0
        %2385 = vmatpush1.msra.mxu0 0.0
        %2386 = vmatprep.subr.mxu0 0.0
        %2387 = vmatpush1.msra.mxu0 0.0
        %2388 = vmatprep.subr.mxu0 0.0
        %2389 = vmatpush1.msra.mxu0 0.0
        %2390 = vmatprep.subr.mxu0 0.0
        %2391 = vmatpush1.msra.mxu0 0.0
        %2392 = vmatprep.subr.mxu0 0.0
        %2393 = vmatpush1.msra.mxu0 0.0
        %2394 = vmatprep.subr.mxu0 0.0
        %2395 = vmatpush1.msra.mxu0 0.0
        %2396 = vmatprep.subr.mxu0 0.0
        %2397 = vmatpush1.msra.mxu0 0.0
        %2398 = vmatprep.subr.mxu0 0.0
        %2399 = vmatpush1.msra.mxu0 0.0
        %2400 = vmatprep.subr.mxu0 0.0
        %2401 = vmatpush1.msra.mxu0 0.0
        %2402 = vmatprep.subr.mxu0 0.0
        %2403 = vmatpush1.msra.mxu0 0.0
        %2404 = vmatprep.subr.mxu0 0.0
        %2405 = vmatpush1.msra.mxu0 0.0
        %2406 = vmatprep.subr.mxu0 0.0
        %2407 = vmatpush1.msra.mxu0 0.0
        %2408 = vmatprep.subr.mxu0 0.0
        %2409 = vmatpush1.msra.mxu0 0.0
        %2410 = vmatprep.subr.mxu0 0.0
        %2411 = vmatpush1.msra.mxu0 0.0
        %2412 = vmatprep.subr.mxu0 0.0
        %2413 = vmatpush1.msra.mxu0 0.0
        %2414 = vmatprep.subr.mxu0 0.0
        %2415 = vmatpush1.msra.mxu0 0.0
        %2416 = vmatprep.mubr.f32.mxu0 0.0
        %2417 = vmatmul.mubr.f32.gmra.mrb[0].mxu0 %v2350
        %v2418 = vpop.f32.mrb[0].mxu0
        %v2419 = vadd.f32 %v962, %v2418
        %v2420 = vpop.f32.mrb[0].mxu0
        %2421 = vdwg.mxu0
        %v2422 = vsub.f32 %v2341, 1.0
        %vm2423 = vcmp.gt.f32.partialorder %v2422, 0.0
        %v2424 = vsel %vm2423, 1, 0
        %v2425 = vcvt.s32.f32 %v2424
        %v2426 = vmul.f32 %v2341, 0.9
        %v2427 = vadd.f32 %v2426, %v2419
        %v2428 = vsub.f32 %v2427, %v2425
        %v2429 = vsub.f32 %v2348, 1.0
        %vm2430 = vcmp.gt.f32.partialorder %v2429, 0.0
        %v2431 = vsel %vm2430, 1, 0
        %v2432 = vcvt.s32.f32 %v2431
        %v2433 = vmul.f32 %v2348, 0.9
        %v2434 = vadd.f32 %v2433, %v948
        %v2435 = vsub.f32 %v2434, %v2432
        %v2437 = vsel %vm934, %v2435, 0
        %2439 = vmatprep.subr.mxu0 0.0
        %2440 = vmatpush1.msra.mxu0 %v949
        %2441 = vmatprep.subr.mxu0 0.0
        %2442 = vmatpush1.msra.mxu0 %v950
        %2443 = vmatprep.subr.mxu0 0.0
        %2444 = vmatpush1.msra.mxu0 %v951
        %2445 = vmatprep.subr.mxu0 0.0
        %2446 = vmatpush1.msra.mxu0 %v952
        %2447 = vmatprep.subr.mxu0 0.0
        %2448 = vmatpush1.msra.mxu0 %v953
        %2449 = vmatprep.subr.mxu0 0.0
        %2450 = vmatpush1.msra.mxu0 %v954
        %2451 = vmatprep.subr.mxu0 0.0
        %2452 = vmatpush1.msra.mxu0 %v955
        %2453 = vmatprep.subr.mxu0 0.0
        %2454 = vmatpush1.msra.mxu0 %v956
        %2455 = vmatprep.subr.mxu0 0.0
        %2456 = vmatpush1.msra.mxu0 0.0
        %2457 = vmatprep.subr.mxu0 0.0
        %2458 = vmatpush1.msra.mxu0 0.0
        %2459 = vmatprep.subr.mxu0 0.0
        %2460 = vmatpush1.msra.mxu0 0.0
        %2461 = vmatprep.subr.mxu0 0.0
        %2462 = vmatpush1.msra.mxu0 0.0
        %2463 = vmatprep.subr.mxu0 0.0
        %2464 = vmatpush1.msra.mxu0 0.0
        %2465 = vmatprep.subr.mxu0 0.0
        %2466 = vmatpush1.msra.mxu0 0.0
        %2467 = vmatprep.subr.mxu0 0.0
        %2468 = vmatpush1.msra.mxu0 0.0
        %2469 = vmatprep.subr.mxu0 0.0
        %2470 = vmatpush1.msra.mxu0 0.0
        %2471 = vmatprep.subr.mxu0 0.0
        %2472 = vmatpush1.msra.mxu0 0.0
        %2473 = vmatprep.subr.mxu0 0.0
        %2474 = vmatpush1.msra.mxu0 0.0
        %2475 = vmatprep.subr.mxu0 0.0
        %2476 = vmatpush1.msra.mxu0 0.0
        %2477 = vmatprep.subr.mxu0 0.0
        %2478 = vmatpush1.msra.mxu0 0.0
        %2479 = vmatprep.subr.mxu0 0.0
        %2480 = vmatpush1.msra.mxu0 0.0
        %2481 = vmatprep.subr.mxu0 0.0
        %2482 = vmatpush1.msra.mxu0 0.0
        %2483 = vmatprep.subr.mxu0 0.0
        %2484 = vmatpush1.msra.mxu0 0.0
        %2485 = vmatprep.subr.mxu0 0.0
        %2486 = vmatpush1.msra.mxu0 0.0
        %2487 = vmatprep.subr.mxu0 0.0
        %2488 = vmatpush1.msra.mxu0 0.0
        %2489 = vmatprep.subr.mxu0 0.0
        %2490 = vmatpush1.msra.mxu0 0.0
        %2491 = vmatprep.subr.mxu0 0.0
        %2492 = vmatpush1.msra.mxu0 0.0
        %2493 = vmatprep.subr.mxu0 0.0
        %2494 = vmatpush1.msra.mxu0 0.0
        %2495 = vmatprep.subr.mxu0 0.0
        %2496 = vmatpush1.msra.mxu0 0.0
        %2497 = vmatprep.subr.mxu0 0.0
        %2498 = vmatpush1.msra.mxu0 0.0
        %2499 = vmatprep.subr.mxu0 0.0
        %2500 = vmatpush1.msra.mxu0 0.0
        %2501 = vmatprep.subr.mxu0 0.0
        %2502 = vmatpush1.msra.mxu0 0.0
        %2503 = vmatprep.mubr.f32.mxu0 0.0
        %2504 = vmatmul.mubr.f32.gmra.mrb[0].mxu0 %v2437
        %v2505 = vpop.f32.mrb[0].mxu0
        %v2506 = vadd.f32 %v962, %v2505
        %v2507 = vpop.f32.mrb[0].mxu0
        %2508 = vdwg.mxu0
        %v2509 = vsub.f32 %v2428, 1.0
        %vm2510 = vcmp.gt.f32.partialorder %v2509, 0.0
        %v2511 = vsel %vm2510, 1, 0
        %v2512 = vcvt.s32.f32 %v2511
        %v2513 = vmul.f32 %v2428, 0.9
        %v2514 = vadd.f32 %v2513, %v2506
        %v2515 = vsub.f32 %v2514, %v2512
        %v2516 = vsub.f32 %v2435, 1.0
        %vm2517 = vcmp.gt.f32.partialorder %v2516, 0.0
        %v2518 = vsel %vm2517, 1, 0
        %v2519 = vcvt.s32.f32 %v2518
        %v2520 = vmul.f32 %v2435, 0.9
        %v2521 = vadd.f32 %v2520, %v948
        %v2522 = vsub.f32 %v2521, %v2519
        %v2524 = vsel %vm934, %v2522, 0
        %2526 = vmatprep.subr.mxu0 0.0
        %2527 = vmatpush1.msra.mxu0 %v949
        %2528 = vmatprep.subr.mxu0 0.0
        %2529 = vmatpush1.msra.mxu0 %v950
        %2530 = vmatprep.subr.mxu0 0.0
        %2531 = vmatpush1.msra.mxu0 %v951
        %2532 = vmatprep.subr.mxu0 0.0
        %2533 = vmatpush1.msra.mxu0 %v952
        %2534 = vmatprep.subr.mxu0 0.0
        %2535 = vmatpush1.msra.mxu0 %v953
        %2536 = vmatprep.subr.mxu0 0.0
        %2537 = vmatpush1.msra.mxu0 %v954
        %2538 = vmatprep.subr.mxu0 0.0
        %2539 = vmatpush1.msra.mxu0 %v955
        %2540 = vmatprep.subr.mxu0 0.0
        %2541 = vmatpush1.msra.mxu0 %v956
        %2542 = vmatprep.subr.mxu0 0.0
        %2543 = vmatpush1.msra.mxu0 0.0
        %2544 = vmatprep.subr.mxu0 0.0
        %2545 = vmatpush1.msra.mxu0 0.0
        %2546 = vmatprep.subr.mxu0 0.0
        %2547 = vmatpush1.msra.mxu0 0.0
        %2548 = vmatprep.subr.mxu0 0.0
        %2549 = vmatpush1.msra.mxu0 0.0
        %2550 = vmatprep.subr.mxu0 0.0
        %2551 = vmatpush1.msra.mxu0 0.0
        %2552 = vmatprep.subr.mxu0 0.0
        %2553 = vmatpush1.msra.mxu0 0.0
        %2554 = vmatprep.subr.mxu0 0.0
        %2555 = vmatpush1.msra.mxu0 0.0
        %2556 = vmatprep.subr.mxu0 0.0
        %2557 = vmatpush1.msra.mxu0 0.0
        %2558 = vmatprep.subr.mxu0 0.0
        %2559 = vmatpush1.msra.mxu0 0.0
        %2560 = vmatprep.subr.mxu0 0.0
        %2561 = vmatpush1.msra.mxu0 0.0
        %2562 = vmatprep.subr.mxu0 0.0
        %2563 = vmatpush1.msra.mxu0 0.0
        %2564 = vmatprep.subr.mxu0 0.0
        %2565 = vmatpush1.msra.mxu0 0.0
        %2566 = vmatprep.subr.mxu0 0.0
        %2567 = vmatpush1.msra.mxu0 0.0
        %2568 = vmatprep.subr.mxu0 0.0
        %2569 = vmatpush1.msra.mxu0 0.0
        %2570 = vmatprep.subr.mxu0 0.0
        %2571 = vmatpush1.msra.mxu0 0.0
        %2572 = vmatprep.subr.mxu0 0.0
        %2573 = vmatpush1.msra.mxu0 0.0
        %2574 = vmatprep.subr.mxu0 0.0
        %2575 = vmatpush1.msra.mxu0 0.0
        %2576 = vmatprep.subr.mxu0 0.0
        %2577 = vmatpush1.msra.mxu0 0.0
        %2578 = vmatprep.subr.mxu0 0.0
        %2579 = vmatpush1.msra.mxu0 0.0
        %2580 = vmatprep.subr.mxu0 0.0
        %2581 = vmatpush1.msra.mxu0 0.0
        %2582 = vmatprep.subr.mxu0 0.0
        %2583 = vmatpush1.msra.mxu0 0.0
        %2584 = vmatprep.subr.mxu0 0.0
        %2585 = vmatpush1.msra.mxu0 0.0
        %2586 = vmatprep.subr.mxu0 0.0
        %2587 = vmatpush1.msra.mxu0 0.0
        %2588 = vmatprep.subr.mxu0 0.0
        %2589 = vmatpush1.msra.mxu0 0.0
        %2590 = vmatprep.mubr.f32.mxu0 0.0
        %2591 = vmatmul.mubr.f32.gmra.mrb[0].mxu0 %v2524
        %v2592 = vpop.f32.mrb[0].mxu0
        %v2593 = vadd.f32 %v962, %v2592
        %v2594 = vpop.f32.mrb[0].mxu0
        %2595 = vdwg.mxu0
        %v2596 = vsub.f32 %v2515, 1.0
        %vm2597 = vcmp.gt.f32.partialorder %v2596, 0.0
        %v2598 = vsel %vm2597, 1, 0
        %v2599 = vcvt.s32.f32 %v2598
        %v2600 = vmul.f32 %v2515, 0.9
        %v2601 = vadd.f32 %v2600, %v2593
        %v2602 = vsub.f32 %v2601, %v2599
        %v2603 = vsub.f32 %v2522, 1.0
        %vm2604 = vcmp.gt.f32.partialorder %v2603, 0.0
        %v2605 = vsel %vm2604, 1, 0
        %v2606 = vcvt.s32.f32 %v2605
        %v2607 = vmul.f32 %v2522, 0.9
        %v2608 = vadd.f32 %v2607, %v948
        %v2609 = vsub.f32 %v2608, %v2606
        %v2611 = vsel %vm934, %v2609, 0
        %2613 = vmatprep.subr.mxu0 0.0
        %2614 = vmatpush1.msra.mxu0 %v949
        %2615 = vmatprep.subr.mxu0 0.0
        %2616 = vmatpush1.msra.mxu0 %v950
        %2617 = vmatprep.subr.mxu0 0.0
        %2618 = vmatpush1.msra.mxu0 %v951
        %2619 = vmatprep.subr.mxu0 0.0
        %2620 = vmatpush1.msra.mxu0 %v952
        %2621 = vmatprep.subr.mxu0 0.0
        %2622 = vmatpush1.msra.mxu0 %v953
        %2623 = vmatprep.subr.mxu0 0.0
        %2624 = vmatpush1.msra.mxu0 %v954
        %2625 = vmatprep.subr.mxu0 0.0
        %2626 = vmatpush1.msra.mxu0 %v955
        %2627 = vmatprep.subr.mxu0 0.0
        %2628 = vmatpush1.msra.mxu0 %v956
        %2629 = vmatprep.subr.mxu0 0.0
        %2630 = vmatpush1.msra.mxu0 0.0
        %2631 = vmatprep.subr.mxu0 0.0
        %2632 = vmatpush1.msra.mxu0 0.0
        %2633 = vmatprep.subr.mxu0 0.0
        %2634 = vmatpush1.msra.mxu0 0.0
        %2635 = vmatprep.subr.mxu0 0.0
        %2636 = vmatpush1.msra.mxu0 0.0
        %2637 = vmatprep.subr.mxu0 0.0
        %2638 = vmatpush1.msra.mxu0 0.0
        %2639 = vmatprep.subr.mxu0 0.0
        %2640 = vmatpush1.msra.mxu0 0.0
        %2641 = vmatprep.subr.mxu0 0.0
        %2642 = vmatpush1.msra.mxu0 0.0
        %2643 = vmatprep.subr.mxu0 0.0
        %2644 = vmatpush1.msra.mxu0 0.0
        %2645 = vmatprep.subr.mxu0 0.0
        %2646 = vmatpush1.msra.mxu0 0.0
        %2647 = vmatprep.subr.mxu0 0.0
        %2648 = vmatpush1.msra.mxu0 0.0
        %2649 = vmatprep.subr.mxu0 0.0
        %2650 = vmatpush1.msra.mxu0 0.0
        %2651 = vmatprep.subr.mxu0 0.0
        %2652 = vmatpush1.msra.mxu0 0.0
        %2653 = vmatprep.subr.mxu0 0.0
        %2654 = vmatpush1.msra.mxu0 0.0
        %2655 = vmatprep.subr.mxu0 0.0
        %2656 = vmatpush1.msra.mxu0 0.0
        %2657 = vmatprep.subr.mxu0 0.0
        %2658 = vmatpush1.msra.mxu0 0.0
        %2659 = vmatprep.subr.mxu0 0.0
        %2660 = vmatpush1.msra.mxu0 0.0
        %2661 = vmatprep.subr.mxu0 0.0
        %2662 = vmatpush1.msra.mxu0 0.0
        %2663 = vmatprep.subr.mxu0 0.0
        %2664 = vmatpush1.msra.mxu0 0.0
        %2665 = vmatprep.subr.mxu0 0.0
        %2666 = vmatpush1.msra.mxu0 0.0
        %2667 = vmatprep.subr.mxu0 0.0
        %2668 = vmatpush1.msra.mxu0 0.0
        %2669 = vmatprep.subr.mxu0 0.0
        %2670 = vmatpush1.msra.mxu0 0.0
        %2671 = vmatprep.subr.mxu0 0.0
        %2672 = vmatpush1.msra.mxu0 0.0
        %2673 = vmatprep.subr.mxu0 0.0
        %2674 = vmatpush1.msra.mxu0 0.0
        %2675 = vmatprep.subr.mxu0 0.0
        %2676 = vmatpush1.msra.mxu0 0.0
        %2677 = vmatprep.mubr.f32.mxu0 0.0
        %2678 = vmatmul.mubr.f32.gmra.mrb[0].mxu0 %v2611
        %v2679 = vpop.f32.mrb[0].mxu0
        %v2680 = vadd.f32 %v962, %v2679
        %v2681 = vpop.f32.mrb[0].mxu0
        %2682 = vdwg.mxu0
        %v2683 = vsub.f32 %v2602, 1.0
        %vm2684 = vcmp.gt.f32.partialorder %v2683, 0.0
        %v2685 = vsel %vm2684, 1, 0
        %v2686 = vcvt.s32.f32 %v2685
        %v2687 = vmul.f32 %v2602, 0.9
        %v2688 = vadd.f32 %v2687, %v2680
        %v2689 = vsub.f32 %v2688, %v2686
        %v2690 = vld [vmem:[%s5] sm:$0xff]
        %v2691 = vld [vmem:[%s5 + $0x8] sm:$0xff]
        %v2692 = vld [vmem:[%s5 + $0x10] sm:$0xff]
        %v2693 = vld [vmem:[%s5 + $0x18] sm:$0xff]
        %v2694 = vld [vmem:[%s6] sm:$0x1]
        %v2696 = vlaneseq
        %v2697 = vshrl.u32 %v2696, 7
        %v2698 = vsub.s32 0, %v2697
        %v2699 = vrot.slane %v2694, %v2698
        %vm2701 = vcmask 261120
        %v2703 = vsel %vm2701, %v2689, 0
        %2705 = vmatprep.subr.mxu0 0.0
        %2706 = vmatpush1.msra.mxu0 %v2690
        %2707 = vmatprep.subr.mxu0 0.0
        %2708 = vmatpush1.msra.mxu0 %v2691
        %2709 = vmatprep.subr.mxu0 0.0
        %2710 = vmatpush1.msra.mxu0 %v2692
        %2711 = vmatprep.subr.mxu0 0.0
        %2712 = vmatpush1.msra.mxu0 %v2693
        %2713 = vmatprep.subr.mxu0 0.0
        %2714 = vmatpush1.msra.mxu0 0.0
        %2715 = vmatprep.subr.mxu0 0.0
        %2716 = vmatpush1.msra.mxu0 0.0
        %2717 = vmatprep.subr.mxu0 0.0
        %2718 = vmatpush1.msra.mxu0 0.0
        %2719 = vmatprep.subr.mxu0 0.0
        %2720 = vmatpush1.msra.mxu0 0.0
        %2721 = vmatprep.subr.mxu0 0.0
        %2722 = vmatpush1.msra.mxu0 0.0
        %2723 = vmatprep.subr.mxu0 0.0
        %2724 = vmatpush1.msra.mxu0 0.0
        %2725 = vmatprep.subr.mxu0 0.0
        %2726 = vmatpush1.msra.mxu0 0.0
        %2727 = vmatprep.subr.mxu0 0.0
        %2728 = vmatpush1.msra.mxu0 0.0
        %2729 = vmatprep.subr.mxu0 0.0
        %2730 = vmatpush1.msra.mxu0 0.0
        %2731 = vmatprep.subr.mxu0 0.0
        %2732 = vmatpush1.msra.mxu0 0.0
        %2733 = vmatprep.subr.mxu0 0.0
        %2734 = vmatpush1.msra.mxu0 0.0
        %2735 = vmatprep.subr.mxu0 0.0
        %2736 = vmatpush1.msra.mxu0 0.0
        %2737 = vmatprep.subr.mxu0 0.0
        %2738 = vmatpush1.msra.mxu0 0.0
        %2739 = vmatprep.subr.mxu0 0.0
        %2740 = vmatpush1.msra.mxu0 0.0
        %2741 = vmatprep.subr.mxu0 0.0
        %2742 = vmatpush1.msra.mxu0 0.0
        %2743 = vmatprep.subr.mxu0 0.0
        %2744 = vmatpush1.msra.mxu0 0.0
        %2745 = vmatprep.subr.mxu0 0.0
        %2746 = vmatpush1.msra.mxu0 0.0
        %2747 = vmatprep.subr.mxu0 0.0
        %2748 = vmatpush1.msra.mxu0 0.0
        %2749 = vmatprep.subr.mxu0 0.0
        %2750 = vmatpush1.msra.mxu0 0.0
        %2751 = vmatprep.subr.mxu0 0.0
        %2752 = vmatpush1.msra.mxu0 0.0
        %2753 = vmatprep.subr.mxu0 0.0
        %2754 = vmatpush1.msra.mxu0 0.0
        %2755 = vmatprep.subr.mxu0 0.0
        %2756 = vmatpush1.msra.mxu0 0.0
        %2757 = vmatprep.subr.mxu0 0.0
        %2758 = vmatpush1.msra.mxu0 0.0
        %2759 = vmatprep.subr.mxu0 0.0
        %2760 = vmatpush1.msra.mxu0 0.0
        %2761 = vmatprep.subr.mxu0 0.0
        %2762 = vmatpush1.msra.mxu0 0.0
        %2763 = vmatprep.subr.mxu0 0.0
        %2764 = vmatpush1.msra.mxu0 0.0
        %2765 = vmatprep.subr.mxu0 0.0
        %2766 = vmatpush1.msra.mxu0 0.0
        %2767 = vmatprep.subr.mxu0 0.0
        %2768 = vmatpush1.msra.mxu0 0.0
        %2769 = vmatprep.mubr.f32.mxu0 0.0
        %2770 = vmatmul.mubr.f32.gmra.mrb[0].mxu0 %v2703
        %v2771 = vpop.f32.mrb[0].mxu0
        %v2772 = vadd.f32 %v2699, %v2771
        %v2773 = vpop.f32.mrb[0].mxu0
        %2774 = vdwg.mxu0
        %vm2775 = vcmask 15360
        %2776 = vst.msk [vmem:[%s7] sm:$0xff] %vm2775, %v2772
      $region56: #{deep_snn_forward.1} parent=47 // pred_fallthru
        _
      // Predicated region
      $region57: #{deep_snn_forward.1} parent=47 // pred_check
        %p2777 = pneg %p188
      $region58: #{deep_snn_forward.1} parent=47 // pred_check_branch
        %2779 = sbr.rel (%p2777) target = $region60
      $region59: #{deep_snn_forward.1} parent=47 // pred_region
        _
      $region60: #{deep_snn_forward.1} parent=47 // pred_fallthru
        _
      // Predicated region
      $region61: #{deep_snn_forward.1} parent=47 // pred_check
        %p2780 = pneg %p188
      $region62: #{deep_snn_forward.1} parent=47 // pred_check_branch
        %2782 = sbr.rel (%p2780) target = $region64
      $region63: #{deep_snn_forward.1} parent=47 // pred_region
        _
      $region64: #{deep_snn_forward.1} parent=47 // pred_fallthru
        _
    $region48: #{deep_snn_forward.1} parent=5 // pred_fallthru
      _
    %p2783 = scmp.le.s32.totalorder 2, %s13
    // Predicated region
    $region65: #{deep_snn_forward.1} parent=5 // pred_check
      %p2784 = pneg %p2783
    $region66: #{deep_snn_forward.1} parent=5 // pred_check_branch
      %2786 = sbr.rel (%p2784) target = $region68
    $region67: #{deep_snn_forward.1} parent=5 // pred_region
      %s2787 = ssub.s32 %s13, 2
    $region68: #{deep_snn_forward.1} parent=5 // pred_fallthru
      _
  $region6: #{deep_snn_forward.1} parent=0 // loop_footer
    %s17 = sadd.s32 1, %s13
  $region7: #{deep_snn_forward.1} parent=0 // loop_footer_branch
    %12 = sbr.rel target = $region3
  $region8: #{deep_snn_forward.1} parent=0 // loop_exit
    _

</llo_original>
